<compile_context>
chip_gen: v6e
topology: v6e:2x2x1
jax: 0.10.0
libtpu: 0.0.40
codegen_flags: <defaults>
</compile_context>

<pallas_src>
import jax
import jax.numpy as jnp
from jax import lax
from jax.experimental import pallas as pl
from jax.experimental.pallas import tpu as pltpu


# ------------------------------------------------------------------ helpers

def _const_spec(shape):
    """Full-array block that is identical for every grid step (weights etc.)."""
    nd = len(shape)
    return pl.BlockSpec(tuple(shape), lambda n, _nd=nd: (0,) * _nd)


def fold_bn(conv_bias, gamma, beta, mean, var, eps=1e-5):
    """Fold conv-bias + eval-mode BatchNorm into per-channel (scale, bias)."""
    scale = gamma / jnp.sqrt(var + eps)
    bias = beta + scale * (conv_bias - mean)
    return scale.reshape(1, -1), bias.reshape(1, -1)


# ------------------------------------------------------------------ fused kernel

def _down_kernel(x_ref,                                   # (1, 2, 2, H, W, Cin)
                 dc1_w, dc1_s, dc1_b,                     # (3,3,Cin,Cmid), (1,Cmid)x2
                 dc2_w, dc2_s, dc2_b,                     # (3,3,Cmid,Cout), (1,Cout)x2
                 sob3_w, sob3_b,                          # (3,1,1,Cin), (1,1,Cin)
                 sob5_w, sob5_b,                          # (5,1,1,Cin), (1,1,Cin)
                 cbr3_w, cbr3_s, cbr3_b,                  # (3,Cin,Cin), (1,Cin)x2
                 cbr5_w, cbr5_s, cbr5_b,                  # (5,Cin,Cin), (1,Cin)x2
                 sce_w, sce_s, sce_b,                     # (Cin,Cout), (1,Cout)x2
                 end_w, end_s, end_b,                     # (Cout,Cout), (Cout,1)x2
                 o_ref,                                   # (1, Cout, H*W)  NCHW-flat
                 padx, padh, padxy, padxy2):              # VMEM scratch pad buffers
    f32 = jnp.float32
    _, _, _, H, W, Cin = x_ref.shape
    Cmid = dc1_w.shape[3]
    Cout = dc2_w.shape[3]
    HW = H * W

    # ---- zero the padded scratch halos (interiors are overwritten below) ----
    padx[...] = jnp.zeros(padx.shape, f32)      # (H+4, W+2, Cin): row pad 2, col pad 1
    padh[...] = jnp.zeros(padh.shape, f32)      # (H+2, W+2, Cmid)
    padxy[...] = jnp.zeros(padxy.shape, f32)    # (H+2, W,   Cin)
    padxy2[...] = jnp.zeros(padxy2.shape, f32)  # (H+4, W,   Cin)

    # ---- MaxPool2d(2): input arrives pre-split as (1,2,2,H,W,Cin), so the
    # pool is three vreg maxima over leading-dim slices (no strided Ref reads).
    xpool = jnp.maximum(jnp.maximum(x_ref[0, 0, 0], x_ref[0, 0, 1]),
                        jnp.maximum(x_ref[0, 1, 0], x_ref[0, 1, 1]))   # (H,W,Cin)
    padx[2:2 + H, 1:1 + W, :] = xpool

    # ---- double_conv branch: Conv3x3 -> BN -> ReLU, twice -------------------
    # Each tap is a small (HW,Cin)x(Cin,Cout) matmul accumulated in f32.
    h1 = jnp.zeros((HW, Cmid), f32)
    for kh in range(3):
        for kw in range(3):
            patch = padx[1 + kh:1 + kh + H, kw:kw + W, :].reshape(HW, Cin)
            h1 = h1 + jnp.dot(patch, dc1_w[kh, kw], preferred_element_type=f32)
    h1 = jnp.maximum(h1 * dc1_s[...] + dc1_b[...], 0.0)                # (HW,Cmid)
    padh[1:1 + H, 1:1 + W, :] = h1.reshape(H, W, Cmid)

    h2 = jnp.zeros((HW, Cout), f32)
    for kh in range(3):
        for kw in range(3):
            patch = padh[kh:kh + H, kw:kw + W, :].reshape(HW, Cmid)
            h2 = h2 + jnp.dot(patch, dc2_w[kh, kw], preferred_element_type=f32)
    h2 = jnp.maximum(h2 * dc2_s[...] + dc2_b[...], 0.0)                # (HW,Cout)

    # ---- SHORT_CUT branch: pooled x re-read from VMEM scratch, never HBM ----
    # fixed Sobel depthwise (3,1)/(5,1) convs + bias + |.|  (pure VPU MACs)
    xy = jnp.zeros((H, W, Cin), f32)
    for kh in range(3):
        xy = xy + padx[1 + kh:1 + kh + H, 1:1 + W, :] * sob3_w[kh]
    xy = jnp.abs(xy + sob3_b[...])                                     # (H,W,Cin)
    padxy[1:1 + H, :, :] = xy

    xy2 = jnp.zeros((H, W, Cin), f32)
    for kh in range(5):
        xy2 = xy2 + padx[kh:kh + H, 1:1 + W, :] * sob5_w[kh]
    xy2 = jnp.abs(xy2 + sob5_b[...])                                   # (H,W,Cin)
    padxy2[2:2 + H, :, :] = xy2

    # conv_bn_relu3 / conv_bn_relu5: full (KH,1) convs as per-tap matmuls
    y3 = jnp.zeros((HW, Cin), f32)
    for kh in range(3):
        y3 = y3 + jnp.dot(padxy[kh:kh + H, :, :].reshape(HW, Cin), cbr3_w[kh],
                          preferred_element_type=f32)
    y3 = jnp.maximum(y3 * cbr3_s[...] + cbr3_b[...], 0.0)              # (HW,Cin)

    y5 = jnp.zeros((HW, Cin), f32)
    for kh in range(5):
        y5 = y5 + jnp.dot(padxy2[kh:kh + H, :, :].reshape(HW, Cin), cbr5_w[kh],
                          preferred_element_type=f32)
    y5 = jnp.maximum(y5 * cbr5_s[...] + cbr5_b[...], 0.0)              # (HW,Cin)

    # SHORT_CUT.end: add + 1x1 conv + affine + ReLU
    sc = jnp.dot(y3 + y5, sce_w[...], preferred_element_type=f32)      # (HW,Cout)
    sc = jnp.maximum(sc * sce_s[...] + sce_b[...], 0.0)

    # ---- downDoubleConv.end: add + 1x1 conv, emitted transposed -------------
    # out^T[c, p] = relu(s[c] * sum_k W_end[c, k] * z[p, k] + b[c])
    # rhs-contracted dot keeps channels on sublanes / pixels on lanes, so the
    # store is lane-dense (H*W lanes) and the HBM layout is already NCHW-flat.
    z = h2 + sc                                                         # (HW,Cout)
    y = lax.dot_general(end_w[...], z, (((1,), (1,)), ((), ())),
                        preferred_element_type=f32)                     # (Cout,HW)
    o_ref[0] = jnp.maximum(y * end_s[...] + end_b[...], 0.0)


# ------------------------------------------------------------------ forward

def down_forward(x_nchw, p):
    N, Cin, Hin, Win = x_nchw.shape
    H, W = Hin // 2, Win // 2
    HW = H * W
    Cmid = p['dc1_w'].shape[-1]
    Cout = p['dc2_w'].shape[-1]

    # Layout glue (pure XLA): NCHW -> (N, 2, 2, H, W, Cin).  The 2x2 pool taps
    # become leading dims so the kernel never needs strided Ref reads; the
    # kernel itself emits NCHW-flat output, so no output transpose afterwards.
    x = x_nchw.astype(jnp.float32).reshape(N, Cin, H, 2, W, 2)
    x = jnp.transpose(x, (0, 3, 5, 2, 4, 1))                  # (N,2,2,H,W,Cin)

    # Fold conv-bias + eval BatchNorm into per-channel affine (scale, bias).
    dc1_s, dc1_b = fold_bn(p['dc1_b'], **p['dc1_bn'])
    dc2_s, dc2_b = fold_bn(p['dc2_b'], **p['dc2_bn'])
    cbr3_s, cbr3_b = fold_bn(p['cbr3_b'], **p['cbr3_bn'])
    cbr5_s, cbr5_b = fold_bn(p['cbr5_b'], **p['cbr5_bn'])
    sce_s, sce_b = fold_bn(p['scend_b'], **p['scend_bn'])
    end_s, end_b = fold_bn(p['end_b'], **p['end_bn'])

    args = (
        x,
        p['dc1_w'], dc1_s, dc1_b,
        p['dc2_w'], dc2_s, dc2_b,
        p['sob3_w'], p['sob3_b'].reshape(1, 1, Cin),
        p['sob5_w'], p['sob5_b'].reshape(1, 1, Cin),
        p['cbr3_w'], cbr3_s, cbr3_b,
        p['cbr5_w'], cbr5_s, cbr5_b,
        p['scend_w'], sce_s, sce_b,
        p['end_w'], end_s.reshape(Cout, 1), end_b.reshape(Cout, 1),
    )

    in_specs = [pl.BlockSpec((1, 2, 2, H, W, Cin), lambda n: (n, 0, 0, 0, 0, 0))]
    in_specs += [_const_spec(a.shape) for a in args[1:]]

    out = pl.pallas_call(
        _down_kernel,
        out_shape=jax.ShapeDtypeStruct((N, Cout, HW), jnp.float32),
        grid=(N,),                                            # one image per step
        in_specs=in_specs,
        out_specs=pl.BlockSpec((1, Cout, HW), lambda n: (n, 0, 0)),
        scratch_shapes=[
            pltpu.VMEM((H + 4, W + 2, Cin), jnp.float32),     # padded pooled x
            pltpu.VMEM((H + 2, W + 2, Cmid), jnp.float32),    # padded h1
            pltpu.VMEM((H + 2, W, Cin), jnp.float32),         # padded |sobel3|
            pltpu.VMEM((H + 4, W, Cin), jnp.float32),         # padded |sobel5|
        ],
        compiler_params=pltpu.CompilerParams(
            dimension_semantics=("parallel",)),               # shard batch over TCs
    )(*args)

    # (N, Cout, H*W) -> (N, Cout, H, W): minor-dim split, no data movement.
    return out.reshape(N, Cout, H, W)


# ------------------------------------------------------------------ parameters

def init_params(key, cin, cout):
    mid = cout
    keys = iter(jax.random.split(key, 48))

    def nrm(shape, s=0.1):
        return s * jax.random.normal(next(keys), shape, jnp.float32)

    def bn(c):
        return dict(gamma=1.0 + nrm((c,)), beta=nrm((c,)),
                    mean=nrm((c,)), var=0.5 + jnp.abs(nrm((c,))))

    p = {}
    # downDoubleConv.double_conv: (Conv3x3 -> BN -> ReLU) x 2, weights (kh,kw,cin,cout)
    p['dc1_w'], p['dc1_b'], p['dc1_bn'] = nrm((3, 3, cin, mid)), nrm((mid,)), bn(mid)
    p['dc2_w'], p['dc2_b'], p['dc2_bn'] = nrm((3, 3, mid, cout)), nrm((cout,)), bn(cout)

    # SHORT_CUT: fixed Sobel depthwise weights (per PyTorch __init__), learned biases
    p['sob3_w'] = jnp.tile(
        jnp.array([1., 0., -1.], jnp.float32).reshape(3, 1, 1, 1), (1, 1, 1, cin))
    p['sob3_b'] = nrm((cin,))
    p['sob5_w'] = jnp.tile(
        jnp.array([1., 2., 0., -2., -1.], jnp.float32).reshape(5, 1, 1, 1), (1, 1, 1, cin))
    p['sob5_b'] = nrm((cin,))

    # SHORT_CUT conv_bn_relu3 / conv_bn_relu5 / end — weights (kh, cin, cout)
    p['cbr3_w'], p['cbr3_b'], p['cbr3_bn'] = nrm((3, cin, cin)), nrm((cin,)), bn(cin)
    p['cbr5_w'], p['cbr5_b'], p['cbr5_bn'] = nrm((5, cin, cin)), nrm((cin,)), bn(cin)
    p['scend_w'], p['scend_b'], p['scend_bn'] = nrm((cin, cout)), nrm((cout,)), bn(cout)

    # downDoubleConv.end (1x1 conv -> BN -> ReLU), weight (cout_out, cout_in)
    p['end_w'], p['end_b'], p['end_bn'] = nrm((cout, cout)), nrm((cout,)), bn(cout)
    return p


# ------------------------------------------------------------------ main

if __name__ == "__main__":
    key = jax.random.PRNGKey(0)
    kx, kp = jax.random.split(key)

    in_ch, out_ch = 4, 8
    x = jax.random.normal(kx, (2, in_ch, 16, 16), jnp.float32)   # NCHW, like PyTorch
    params = init_params(kp, in_ch, out_ch)

    y = jax.jit(down_forward)(x, params)
    y = jax.block_until_ready(y)

    assert y.shape == (2, out_ch, 8, 8), y.shape
    assert bool(jnp.all(jnp.isfinite(y)))
    print("KERNEL_OK")
</pallas_src>

<mosaic_0001>
module attributes {stable_mosaic.version = 11 : i64} {
  func.func @_down_kernel(%arg0: i32, %arg1: memref<1x2x2x8x8x4xf32, #tpu.memory_space<vmem>>, %arg2: memref<3x3x4x8xf32, #tpu.memory_space<vmem>>, %arg3: memref<1x8xf32, #tpu.memory_space<vmem>>, %arg4: memref<1x8xf32, #tpu.memory_space<vmem>>, %arg5: memref<3x3x8x8xf32, #tpu.memory_space<vmem>>, %arg6: memref<1x8xf32, #tpu.memory_space<vmem>>, %arg7: memref<1x8xf32, #tpu.memory_space<vmem>>, %arg8: memref<3x1x1x4xf32, #tpu.memory_space<vmem>>, %arg9: memref<1x1x4xf32, #tpu.memory_space<vmem>>, %arg10: memref<5x1x1x4xf32, #tpu.memory_space<vmem>>, %arg11: memref<1x1x4xf32, #tpu.memory_space<vmem>>, %arg12: memref<3x4x4xf32, #tpu.memory_space<vmem>>, %arg13: memref<1x4xf32, #tpu.memory_space<vmem>>, %arg14: memref<1x4xf32, #tpu.memory_space<vmem>>, %arg15: memref<5x4x4xf32, #tpu.memory_space<vmem>>, %arg16: memref<1x4xf32, #tpu.memory_space<vmem>>, %arg17: memref<1x4xf32, #tpu.memory_space<vmem>>, %arg18: memref<4x8xf32, #tpu.memory_space<vmem>>, %arg19: memref<1x8xf32, #tpu.memory_space<vmem>>, %arg20: memref<1x8xf32, #tpu.memory_space<vmem>>, %arg21: memref<8x8xf32, #tpu.memory_space<vmem>>, %arg22: memref<8x1xf32, #tpu.memory_space<vmem>>, %arg23: memref<8x1xf32, #tpu.memory_space<vmem>>, %arg24: memref<1x8x64xf32, #tpu.memory_space<vmem>>, %arg25: memref<12x10x4xf32, #tpu.memory_space<vmem>>, %arg26: memref<10x10x8xf32, #tpu.memory_space<vmem>>, %arg27: memref<10x8x4xf32, #tpu.memory_space<vmem>>, %arg28: memref<12x8x4xf32, #tpu.memory_space<vmem>>) attributes {dimension_semantics = [#tpu.dimension_semantics<parallel>], iteration_bounds = array<i64: 2>, scalar_prefetch = 0 : i64, scratch_operands = 4 : i64, tpu.core_type = #tpu.core_type<tc>, window_params = [{transform_indices = @transform_0, window_bounds = array<i64: 1, 2, 2, 8, 8, 4>}, {pipeline_mode = #tpu.pipeline_mode<synchronous>, transform_indices = @transform_1, window_bounds = array<i64: 3, 3, 4, 8>}, {pipeline_mode = #tpu.pipeline_mode<synchronous>, transform_indices = @transform_2, window_bounds = array<i64: 1, 8>}, {pipeline_mode = #tpu.pipeline_mode<synchronous>, transform_indices = @transform_3, window_bounds = array<i64: 1, 8>}, {pipeline_mode = #tpu.pipeline_mode<synchronous>, transform_indices = @transform_4, window_bounds = array<i64: 3, 3, 8, 8>}, {pipeline_mode = #tpu.pipeline_mode<synchronous>, transform_indices = @transform_5, window_bounds = array<i64: 1, 8>}, {pipeline_mode = #tpu.pipeline_mode<synchronous>, transform_indices = @transform_6, window_bounds = array<i64: 1, 8>}, {pipeline_mode = #tpu.pipeline_mode<synchronous>, transform_indices = @transform_7, window_bounds = array<i64: 3, 1, 1, 4>}, {pipeline_mode = #tpu.pipeline_mode<synchronous>, transform_indices = @transform_8, window_bounds = array<i64: 1, 1, 4>}, {pipeline_mode = #tpu.pipeline_mode<synchronous>, transform_indices = @transform_9, window_bounds = array<i64: 5, 1, 1, 4>}, {pipeline_mode = #tpu.pipeline_mode<synchronous>, transform_indices = @transform_10, window_bounds = array<i64: 1, 1, 4>}, {pipeline_mode = #tpu.pipeline_mode<synchronous>, transform_indices = @transform_11, window_bounds = array<i64: 3, 4, 4>}, {pipeline_mode = #tpu.pipeline_mode<synchronous>, transform_indices = @transform_12, window_bounds = array<i64: 1, 4>}, {pipeline_mode = #tpu.pipeline_mode<synchronous>, transform_indices = @transform_13, window_bounds = array<i64: 1, 4>}, {pipeline_mode = #tpu.pipeline_mode<synchronous>, transform_indices = @transform_14, window_bounds = array<i64: 5, 4, 4>}, {pipeline_mode = #tpu.pipeline_mode<synchronous>, transform_indices = @transform_15, window_bounds = array<i64: 1, 4>}, {pipeline_mode = #tpu.pipeline_mode<synchronous>, transform_indices = @transform_16, window_bounds = array<i64: 1, 4>}, {pipeline_mode = #tpu.pipeline_mode<synchronous>, transform_indices = @transform_17, window_bounds = array<i64: 4, 8>}, {pipeline_mode = #tpu.pipeline_mode<synchronous>, transform_indices = @transform_18, window_bounds = array<i64: 1, 8>}, {pipeline_mode = #tpu.pipeline_mode<synchronous>, transform_indices = @transform_19, window_bounds = array<i64: 1, 8>}, {pipeline_mode = #tpu.pipeline_mode<synchronous>, transform_indices = @transform_20, window_bounds = array<i64: 8, 8>}, {pipeline_mode = #tpu.pipeline_mode<synchronous>, transform_indices = @transform_21, window_bounds = array<i64: 8, 1>}, {pipeline_mode = #tpu.pipeline_mode<synchronous>, transform_indices = @transform_22, window_bounds = array<i64: 8, 1>}, {transform_indices = @transform_23, window_bounds = array<i64: 1, 8, 64>}]} {
    %cst = arith.constant 0.000000e+00 : f32
    %0 = vector.broadcast %cst : f32 to vector<12x10x4xf32>
    %c0 = arith.constant 0 : index
    %c0_0 = arith.constant 0 : index
    %c0_1 = arith.constant 0 : index
    %1 = vector.load %arg25[%c0, %c0_0, %c0_1] : memref<12x10x4xf32, #tpu.memory_space<vmem>>, vector<12x10x4xf32>
    tpu.vector_store %arg25[%c0, %c0_0, %c0_1], %0 {strides = array<i32>} : memref<12x10x4xf32, #tpu.memory_space<vmem>>, vector<12x10x4xf32>,
    %cst_2 = arith.constant 0.000000e+00 : f32
    %2 = vector.broadcast %cst_2 : f32 to vector<10x10x8xf32>
    %c0_3 = arith.constant 0 : index
    %c0_4 = arith.constant 0 : index
    %c0_5 = arith.constant 0 : index
    %3 = vector.load %arg26[%c0_3, %c0_4, %c0_5] : memref<10x10x8xf32, #tpu.memory_space<vmem>>, vector<10x10x8xf32>
    tpu.vector_store %arg26[%c0_3, %c0_4, %c0_5], %2 {strides = array<i32>} : memref<10x10x8xf32, #tpu.memory_space<vmem>>, vector<10x10x8xf32>,
    %cst_6 = arith.constant 0.000000e+00 : f32
    %4 = vector.broadcast %cst_6 : f32 to vector<10x8x4xf32>
    %c0_7 = arith.constant 0 : index
    %c0_8 = arith.constant 0 : index
    %c0_9 = arith.constant 0 : index
    %5 = vector.load %arg27[%c0_7, %c0_8, %c0_9] : memref<10x8x4xf32, #tpu.memory_space<vmem>>, vector<10x8x4xf32>
    tpu.vector_store %arg27[%c0_7, %c0_8, %c0_9], %4 {strides = array<i32>} : memref<10x8x4xf32, #tpu.memory_space<vmem>>, vector<10x8x4xf32>,
    %cst_10 = arith.constant 0.000000e+00 : f32
    %6 = vector.broadcast %cst_10 : f32 to vector<12x8x4xf32>
    %c0_11 = arith.constant 0 : index
    %c0_12 = arith.constant 0 : index
    %c0_13 = arith.constant 0 : index
    %7 = vector.load %arg28[%c0_11, %c0_12, %c0_13] : memref<12x8x4xf32, #tpu.memory_space<vmem>>, vector<12x8x4xf32>
    tpu.vector_store %arg28[%c0_11, %c0_12, %c0_13], %6 {strides = array<i32>} : memref<12x8x4xf32, #tpu.memory_space<vmem>>, vector<12x8x4xf32>,
    %c0_14 = arith.constant 0 : index
    %c0_15 = arith.constant 0 : index
    %c0_16 = arith.constant 0 : index
    %c0_17 = arith.constant 0 : index
    %c0_18 = arith.constant 0 : index
    %c0_19 = arith.constant 0 : index
    %8 = vector.load %arg1[%c0_14, %c0_15, %c0_16, %c0_17, %c0_18, %c0_19] : memref<1x2x2x8x8x4xf32, #tpu.memory_space<vmem>>, vector<1x1x1x8x8x4xf32>
    %9 = vector.shape_cast %8 : vector<1x1x1x8x8x4xf32> to vector<8x8x4xf32>
    %c0_20 = arith.constant 0 : index
    %c0_21 = arith.constant 0 : index
    %c1 = arith.constant 1 : index
    %c0_22 = arith.constant 0 : index
    %c0_23 = arith.constant 0 : index
    %c0_24 = arith.constant 0 : index
    %10 = vector.load %arg1[%c0_20, %c0_21, %c1, %c0_22, %c0_23, %c0_24] : memref<1x2x2x8x8x4xf32, #tpu.memory_space<vmem>>, vector<1x1x1x8x8x4xf32>
    %11 = vector.shape_cast %10 : vector<1x1x1x8x8x4xf32> to vector<8x8x4xf32>
    %12 = arith.maximumf %9, %11 : vector<8x8x4xf32>
    %c0_25 = arith.constant 0 : index
    %c1_26 = arith.constant 1 : index
    %c0_27 = arith.constant 0 : index
    %c0_28 = arith.constant 0 : index
    %c0_29 = arith.constant 0 : index
    %c0_30 = arith.constant 0 : index
    %13 = vector.load %arg1[%c0_25, %c1_26, %c0_27, %c0_28, %c0_29, %c0_30] : memref<1x2x2x8x8x4xf32, #tpu.memory_space<vmem>>, vector<1x1x1x8x8x4xf32>
    %14 = vector.shape_cast %13 : vector<1x1x1x8x8x4xf32> to vector<8x8x4xf32>
    %c0_31 = arith.constant 0 : index
    %c1_32 = arith.constant 1 : index
    %c1_33 = arith.constant 1 : index
    %c0_34 = arith.constant 0 : index
    %c0_35 = arith.constant 0 : index
    %c0_36 = arith.constant 0 : index
    %15 = vector.load %arg1[%c0_31, %c1_32, %c1_33, %c0_34, %c0_35, %c0_36] : memref<1x2x2x8x8x4xf32, #tpu.memory_space<vmem>>, vector<1x1x1x8x8x4xf32>
    %16 = vector.shape_cast %15 : vector<1x1x1x8x8x4xf32> to vector<8x8x4xf32>
    %17 = arith.maximumf %14, %16 : vector<8x8x4xf32>
    %18 = arith.maximumf %12, %17 : vector<8x8x4xf32>
    %c2 = arith.constant 2 : index
    %c1_37 = arith.constant 1 : index
    %c0_38 = arith.constant 0 : index
    %19 = vector.load %arg25[%c2, %c1_37, %c0_38] : memref<12x10x4xf32, #tpu.memory_space<vmem>>, vector<8x8x4xf32>
    tpu.vector_store %arg25[%c2, %c1_37, %c0_38], %18 {strides = array<i32>} : memref<12x10x4xf32, #tpu.memory_space<vmem>>, vector<8x8x4xf32>,
    %cst_39 = arith.constant 0.000000e+00 : f32
    %20 = vector.broadcast %cst_39 : f32 to vector<64x8xf32>
    %c1_40 = arith.constant 1 : index
    %c0_41 = arith.constant 0 : index
    %c0_42 = arith.constant 0 : index
    %21 = vector.load %arg25[%c1_40, %c0_41, %c0_42] : memref<12x10x4xf32, #tpu.memory_space<vmem>>, vector<8x8x4xf32>
    %22 = vector.shape_cast %21 : vector<8x8x4xf32> to vector<64x4xf32>
    %c0_43 = arith.constant 0 : index
    %c0_44 = arith.constant 0 : index
    %c0_45 = arith.constant 0 : index
    %c0_46 = arith.constant 0 : index
    %23 = vector.load %arg2[%c0_43, %c0_44, %c0_45, %c0_46] : memref<3x3x4x8xf32, #tpu.memory_space<vmem>>, vector<1x1x4x8xf32>
    %24 = vector.shape_cast %23 : vector<1x1x4x8xf32> to vector<4x8xf32>
    %cst_47 = arith.constant dense<0.000000e+00> : vector<64x8xf32>
    %25 = tpu.matmul %22, %24, %cst_47 {dimension_numbers = #tpu.dot_dimension_numbers<[1], [0], [0], [1], [0, 0, 1, 1], [], []>} : vector<64x4xf32>, vector<4x8xf32>, vector<64x8xf32> -> vector<64x8xf32>
    %26 = arith.addf %20, %25 : vector<64x8xf32>
    %c1_48 = arith.constant 1 : index
    %c1_49 = arith.constant 1 : index
    %c0_50 = arith.constant 0 : index
    %27 = vector.load %arg25[%c1_48, %c1_49, %c0_50] : memref<12x10x4xf32, #tpu.memory_space<vmem>>, vector<8x8x4xf32>
    %28 = vector.shape_cast %27 : vector<8x8x4xf32> to vector<64x4xf32>
    %c0_51 = arith.constant 0 : index
    %c1_52 = arith.constant 1 : index
    %c0_53 = arith.constant 0 : index
    %c0_54 = arith.constant 0 : index
    %29 = vector.load %arg2[%c0_51, %c1_52, %c0_53, %c0_54] : memref<3x3x4x8xf32, #tpu.memory_space<vmem>>, vector<1x1x4x8xf32>
    %30 = vector.shape_cast %29 : vector<1x1x4x8xf32> to vector<4x8xf32>
    %cst_55 = arith.constant dense<0.000000e+00> : vector<64x8xf32>
    %31 = tpu.matmul %28, %30, %cst_55 {dimension_numbers = #tpu.dot_dimension_numbers<[1], [0], [0], [1], [0, 0, 1, 1], [], []>} : vector<64x4xf32>, vector<4x8xf32>, vector<64x8xf32> -> vector<64x8xf32>
    %32 = arith.addf %26, %31 : vector<64x8xf32>
    %c1_56 = arith.constant 1 : index
    %c2_57 = arith.constant 2 : index
    %c0_58 = arith.constant 0 : index
    %33 = vector.load %arg25[%c1_56, %c2_57, %c0_58] : memref<12x10x4xf32, #tpu.memory_space<vmem>>, vector<8x8x4xf32>
    %34 = vector.shape_cast %33 : vector<8x8x4xf32> to vector<64x4xf32>
    %c0_59 = arith.constant 0 : index
    %c2_60 = arith.constant 2 : index
    %c0_61 = arith.constant 0 : index
    %c0_62 = arith.constant 0 : index
    %35 = vector.load %arg2[%c0_59, %c2_60, %c0_61, %c0_62] : memref<3x3x4x8xf32, #tpu.memory_space<vmem>>, vector<1x1x4x8xf32>
    %36 = vector.shape_cast %35 : vector<1x1x4x8xf32> to vector<4x8xf32>
    %cst_63 = arith.constant dense<0.000000e+00> : vector<64x8xf32>
    %37 = tpu.matmul %34, %36, %cst_63 {dimension_numbers = #tpu.dot_dimension_numbers<[1], [0], [0], [1], [0, 0, 1, 1], [], []>} : vector<64x4xf32>, vector<4x8xf32>, vector<64x8xf32> -> vector<64x8xf32>
    %38 = arith.addf %32, %37 : vector<64x8xf32>
    %c2_64 = arith.constant 2 : index
    %c0_65 = arith.constant 0 : index
    %c0_66 = arith.constant 0 : index
    %39 = vector.load %arg25[%c2_64, %c0_65, %c0_66] : memref<12x10x4xf32, #tpu.memory_space<vmem>>, vector<8x8x4xf32>
    %40 = vector.shape_cast %39 : vector<8x8x4xf32> to vector<64x4xf32>
    %c1_67 = arith.constant 1 : index
    %c0_68 = arith.constant 0 : index
    %c0_69 = arith.constant 0 : index
    %c0_70 = arith.constant 0 : index
    %41 = vector.load %arg2[%c1_67, %c0_68, %c0_69, %c0_70] : memref<3x3x4x8xf32, #tpu.memory_space<vmem>>, vector<1x1x4x8xf32>
    %42 = vector.shape_cast %41 : vector<1x1x4x8xf32> to vector<4x8xf32>
    %cst_71 = arith.constant dense<0.000000e+00> : vector<64x8xf32>
    %43 = tpu.matmul %40, %42, %cst_71 {dimension_numbers = #tpu.dot_dimension_numbers<[1], [0], [0], [1], [0, 0, 1, 1], [], []>} : vector<64x4xf32>, vector<4x8xf32>, vector<64x8xf32> -> vector<64x8xf32>
    %44 = arith.addf %38, %43 : vector<64x8xf32>
    %c2_72 = arith.constant 2 : index
    %c1_73 = arith.constant 1 : index
    %c0_74 = arith.constant 0 : index
    %45 = vector.load %arg25[%c2_72, %c1_73, %c0_74] : memref<12x10x4xf32, #tpu.memory_space<vmem>>, vector<8x8x4xf32>
    %46 = vector.shape_cast %45 : vector<8x8x4xf32> to vector<64x4xf32>
    %c1_75 = arith.constant 1 : index
    %c1_76 = arith.constant 1 : index
    %c0_77 = arith.constant 0 : index
    %c0_78 = arith.constant 0 : index
    %47 = vector.load %arg2[%c1_75, %c1_76, %c0_77, %c0_78] : memref<3x3x4x8xf32, #tpu.memory_space<vmem>>, vector<1x1x4x8xf32>
    %48 = vector.shape_cast %47 : vector<1x1x4x8xf32> to vector<4x8xf32>
    %cst_79 = arith.constant dense<0.000000e+00> : vector<64x8xf32>
    %49 = tpu.matmul %46, %48, %cst_79 {dimension_numbers = #tpu.dot_dimension_numbers<[1], [0], [0], [1], [0, 0, 1, 1], [], []>} : vector<64x4xf32>, vector<4x8xf32>, vector<64x8xf32> -> vector<64x8xf32>
    %50 = arith.addf %44, %49 : vector<64x8xf32>
    %c2_80 = arith.constant 2 : index
    %c2_81 = arith.constant 2 : index
    %c0_82 = arith.constant 0 : index
    %51 = vector.load %arg25[%c2_80, %c2_81, %c0_82] : memref<12x10x4xf32, #tpu.memory_space<vmem>>, vector<8x8x4xf32>
    %52 = vector.shape_cast %51 : vector<8x8x4xf32> to vector<64x4xf32>
    %c1_83 = arith.constant 1 : index
    %c2_84 = arith.constant 2 : index
    %c0_85 = arith.constant 0 : index
    %c0_86 = arith.constant 0 : index
    %53 = vector.load %arg2[%c1_83, %c2_84, %c0_85, %c0_86] : memref<3x3x4x8xf32, #tpu.memory_space<vmem>>, vector<1x1x4x8xf32>
    %54 = vector.shape_cast %53 : vector<1x1x4x8xf32> to vector<4x8xf32>
    %cst_87 = arith.constant dense<0.000000e+00> : vector<64x8xf32>
    %55 = tpu.matmul %52, %54, %cst_87 {dimension_numbers = #tpu.dot_dimension_numbers<[1], [0], [0], [1], [0, 0, 1, 1], [], []>} : vector<64x4xf32>, vector<4x8xf32>, vector<64x8xf32> -> vector<64x8xf32>
    %56 = arith.addf %50, %55 : vector<64x8xf32>
    %c3 = arith.constant 3 : index
    %c0_88 = arith.constant 0 : index
    %c0_89 = arith.constant 0 : index
    %57 = vector.load %arg25[%c3, %c0_88, %c0_89] : memref<12x10x4xf32, #tpu.memory_space<vmem>>, vector<8x8x4xf32>
    %58 = vector.shape_cast %57 : vector<8x8x4xf32> to vector<64x4xf32>
    %c2_90 = arith.constant 2 : index
    %c0_91 = arith.constant 0 : index
    %c0_92 = arith.constant 0 : index
    %c0_93 = arith.constant 0 : index
    %59 = vector.load %arg2[%c2_90, %c0_91, %c0_92, %c0_93] : memref<3x3x4x8xf32, #tpu.memory_space<vmem>>, vector<1x1x4x8xf32>
    %60 = vector.shape_cast %59 : vector<1x1x4x8xf32> to vector<4x8xf32>
    %cst_94 = arith.constant dense<0.000000e+00> : vector<64x8xf32>
    %61 = tpu.matmul %58, %60, %cst_94 {dimension_numbers = #tpu.dot_dimension_numbers<[1], [0], [0], [1], [0, 0, 1, 1], [], []>} : vector<64x4xf32>, vector<4x8xf32>, vector<64x8xf32> -> vector<64x8xf32>
    %62 = arith.addf %56, %61 : vector<64x8xf32>
    %c3_95 = arith.constant 3 : index
    %c1_96 = arith.constant 1 : index
    %c0_97 = arith.constant 0 : index
    %63 = vector.load %arg25[%c3_95, %c1_96, %c0_97] : memref<12x10x4xf32, #tpu.memory_space<vmem>>, vector<8x8x4xf32>
    %64 = vector.shape_cast %63 : vector<8x8x4xf32> to vector<64x4xf32>
    %c2_98 = arith.constant 2 : index
    %c1_99 = arith.constant 1 : index
    %c0_100 = arith.constant 0 : index
    %c0_101 = arith.constant 0 : index
    %65 = vector.load %arg2[%c2_98, %c1_99, %c0_100, %c0_101] : memref<3x3x4x8xf32, #tpu.memory_space<vmem>>, vector<1x1x4x8xf32>
    %66 = vector.shape_cast %65 : vector<1x1x4x8xf32> to vector<4x8xf32>
    %cst_102 = arith.constant dense<0.000000e+00> : vector<64x8xf32>
    %67 = tpu.matmul %64, %66, %cst_102 {dimension_numbers = #tpu.dot_dimension_numbers<[1], [0], [0], [1], [0, 0, 1, 1], [], []>} : vector<64x4xf32>, vector<4x8xf32>, vector<64x8xf32> -> vector<64x8xf32>
    %68 = arith.addf %62, %67 : vector<64x8xf32>
    %c3_103 = arith.constant 3 : index
    %c2_104 = arith.constant 2 : index
    %c0_105 = arith.constant 0 : index
    %69 = vector.load %arg25[%c3_103, %c2_104, %c0_105] : memref<12x10x4xf32, #tpu.memory_space<vmem>>, vector<8x8x4xf32>
    %70 = vector.shape_cast %69 : vector<8x8x4xf32> to vector<64x4xf32>
    %c2_106 = arith.constant 2 : index
    %c2_107 = arith.constant 2 : index
    %c0_108 = arith.constant 0 : index
    %c0_109 = arith.constant 0 : index
    %71 = vector.load %arg2[%c2_106, %c2_107, %c0_108, %c0_109] : memref<3x3x4x8xf32, #tpu.memory_space<vmem>>, vector<1x1x4x8xf32>
    %72 = vector.shape_cast %71 : vector<1x1x4x8xf32> to vector<4x8xf32>
    %cst_110 = arith.constant dense<0.000000e+00> : vector<64x8xf32>
    %73 = tpu.matmul %70, %72, %cst_110 {dimension_numbers = #tpu.dot_dimension_numbers<[1], [0], [0], [1], [0, 0, 1, 1], [], []>} : vector<64x4xf32>, vector<4x8xf32>, vector<64x8xf32> -> vector<64x8xf32>
    %74 = arith.addf %68, %73 : vector<64x8xf32>
    %c0_111 = arith.constant 0 : index
    %c0_112 = arith.constant 0 : index
    %75 = vector.load %arg3[%c0_111, %c0_112] : memref<1x8xf32, #tpu.memory_space<vmem>>, vector<1x8xf32>
    %76 = vector.broadcast %75 : vector<1x8xf32> to vector<64x8xf32>
    %77 = arith.mulf %74, %76 : vector<64x8xf32>
    %c0_113 = arith.constant 0 : index
    %c0_114 = arith.constant 0 : index
    %78 = vector.load %arg4[%c0_113, %c0_114] : memref<1x8xf32, #tpu.memory_space<vmem>>, vector<1x8xf32>
    %79 = vector.broadcast %78 : vector<1x8xf32> to vector<64x8xf32>
    %80 = arith.addf %77, %79 : vector<64x8xf32>
    %cst_115 = arith.constant 0.000000e+00 : f32
    %81 = vector.broadcast %cst_115 : f32 to vector<64x8xf32>
    %82 = arith.maximumf %80, %81 : vector<64x8xf32>
    %83 = vector.shape_cast %82 : vector<64x8xf32> to vector<8x8x8xf32>
    %c1_116 = arith.constant 1 : index
    %c1_117 = arith.constant 1 : index
    %c0_118 = arith.constant 0 : index
    %84 = vector.load %arg26[%c1_116, %c1_117, %c0_118] : memref<10x10x8xf32, #tpu.memory_space<vmem>>, vector<8x8x8xf32>
    tpu.vector_store %arg26[%c1_116, %c1_117, %c0_118], %83 {strides = array<i32>} : memref<10x10x8xf32, #tpu.memory_space<vmem>>, vector<8x8x8xf32>,
    %cst_119 = arith.constant 0.000000e+00 : f32
    %85 = vector.broadcast %cst_119 : f32 to vector<64x8xf32>
    %c0_120 = arith.constant 0 : index
    %c0_121 = arith.constant 0 : index
    %c0_122 = arith.constant 0 : index
    %86 = vector.load %arg26[%c0_120, %c0_121, %c0_122] : memref<10x10x8xf32, #tpu.memory_space<vmem>>, vector<8x8x8xf32>
    %87 = vector.shape_cast %86 : vector<8x8x8xf32> to vector<64x8xf32>
    %c0_123 = arith.constant 0 : index
    %c0_124 = arith.constant 0 : index
    %c0_125 = arith.constant 0 : index
    %c0_126 = arith.constant 0 : index
    %88 = vector.load %arg5[%c0_123, %c0_124, %c0_125, %c0_126] : memref<3x3x8x8xf32, #tpu.memory_space<vmem>>, vector<1x1x8x8xf32>
    %89 = vector.shape_cast %88 : vector<1x1x8x8xf32> to vector<8x8xf32>
    %cst_127 = arith.constant dense<0.000000e+00> : vector<64x8xf32>
    %90 = tpu.matmul %87, %89, %cst_127 {dimension_numbers = #tpu.dot_dimension_numbers<[1], [0], [0], [1], [0, 0, 1, 1], [], []>} : vector<64x8xf32>, vector<8x8xf32>, vector<64x8xf32> -> vector<64x8xf32>
    %91 = arith.addf %85, %90 : vector<64x8xf32>
    %c0_128 = arith.constant 0 : index
    %c1_129 = arith.constant 1 : index
    %c0_130 = arith.constant 0 : index
    %92 = vector.load %arg26[%c0_128, %c1_129, %c0_130] : memref<10x10x8xf32, #tpu.memory_space<vmem>>, vector<8x8x8xf32>
    %93 = vector.shape_cast %92 : vector<8x8x8xf32> to vector<64x8xf32>
    %c0_131 = arith.constant 0 : index
    %c1_132 = arith.constant 1 : index
    %c0_133 = arith.constant 0 : index
    %c0_134 = arith.constant 0 : index
    %94 = vector.load %arg5[%c0_131, %c1_132, %c0_133, %c0_134] : memref<3x3x8x8xf32, #tpu.memory_space<vmem>>, vector<1x1x8x8xf32>
    %95 = vector.shape_cast %94 : vector<1x1x8x8xf32> to vector<8x8xf32>
    %cst_135 = arith.constant dense<0.000000e+00> : vector<64x8xf32>
    %96 = tpu.matmul %93, %95, %cst_135 {dimension_numbers = #tpu.dot_dimension_numbers<[1], [0], [0], [1], [0, 0, 1, 1], [], []>} : vector<64x8xf32>, vector<8x8xf32>, vector<64x8xf32> -> vector<64x8xf32>
    %97 = arith.addf %91, %96 : vector<64x8xf32>
    %c0_136 = arith.constant 0 : index
    %c2_137 = arith.constant 2 : index
    %c0_138 = arith.constant 0 : index
    %98 = vector.load %arg26[%c0_136, %c2_137, %c0_138] : memref<10x10x8xf32, #tpu.memory_space<vmem>>, vector<8x8x8xf32>
    %99 = vector.shape_cast %98 : vector<8x8x8xf32> to vector<64x8xf32>
    %c0_139 = arith.constant 0 : index
    %c2_140 = arith.constant 2 : index
    %c0_141 = arith.constant 0 : index
    %c0_142 = arith.constant 0 : index
    %100 = vector.load %arg5[%c0_139, %c2_140, %c0_141, %c0_142] : memref<3x3x8x8xf32, #tpu.memory_space<vmem>>, vector<1x1x8x8xf32>
    %101 = vector.shape_cast %100 : vector<1x1x8x8xf32> to vector<8x8xf32>
    %cst_143 = arith.constant dense<0.000000e+00> : vector<64x8xf32>
    %102 = tpu.matmul %99, %101, %cst_143 {dimension_numbers = #tpu.dot_dimension_numbers<[1], [0], [0], [1], [0, 0, 1, 1], [], []>} : vector<64x8xf32>, vector<8x8xf32>, vector<64x8xf32> -> vector<64x8xf32>
    %103 = arith.addf %97, %102 : vector<64x8xf32>
    %c1_144 = arith.constant 1 : index
    %c0_145 = arith.constant 0 : index
    %c0_146 = arith.constant 0 : index
    %104 = vector.load %arg26[%c1_144, %c0_145, %c0_146] : memref<10x10x8xf32, #tpu.memory_space<vmem>>, vector<8x8x8xf32>
    %105 = vector.shape_cast %104 : vector<8x8x8xf32> to vector<64x8xf32>
    %c1_147 = arith.constant 1 : index
    %c0_148 = arith.constant 0 : index
    %c0_149 = arith.constant 0 : index
    %c0_150 = arith.constant 0 : index
    %106 = vector.load %arg5[%c1_147, %c0_148, %c0_149, %c0_150] : memref<3x3x8x8xf32, #tpu.memory_space<vmem>>, vector<1x1x8x8xf32>
    %107 = vector.shape_cast %106 : vector<1x1x8x8xf32> to vector<8x8xf32>
    %cst_151 = arith.constant dense<0.000000e+00> : vector<64x8xf32>
    %108 = tpu.matmul %105, %107, %cst_151 {dimension_numbers = #tpu.dot_dimension_numbers<[1], [0], [0], [1], [0, 0, 1, 1], [], []>} : vector<64x8xf32>, vector<8x8xf32>, vector<64x8xf32> -> vector<64x8xf32>
    %109 = arith.addf %103, %108 : vector<64x8xf32>
    %c1_152 = arith.constant 1 : index
    %c1_153 = arith.constant 1 : index
    %c0_154 = arith.constant 0 : index
    %110 = vector.load %arg26[%c1_152, %c1_153, %c0_154] : memref<10x10x8xf32, #tpu.memory_space<vmem>>, vector<8x8x8xf32>
    %111 = vector.shape_cast %110 : vector<8x8x8xf32> to vector<64x8xf32>
    %c1_155 = arith.constant 1 : index
    %c1_156 = arith.constant 1 : index
    %c0_157 = arith.constant 0 : index
    %c0_158 = arith.constant 0 : index
    %112 = vector.load %arg5[%c1_155, %c1_156, %c0_157, %c0_158] : memref<3x3x8x8xf32, #tpu.memory_space<vmem>>, vector<1x1x8x8xf32>
    %113 = vector.shape_cast %112 : vector<1x1x8x8xf32> to vector<8x8xf32>
    %cst_159 = arith.constant dense<0.000000e+00> : vector<64x8xf32>
    %114 = tpu.matmul %111, %113, %cst_159 {dimension_numbers = #tpu.dot_dimension_numbers<[1], [0], [0], [1], [0, 0, 1, 1], [], []>} : vector<64x8xf32>, vector<8x8xf32>, vector<64x8xf32> -> vector<64x8xf32>
    %115 = arith.addf %109, %114 : vector<64x8xf32>
    %c1_160 = arith.constant 1 : index
    %c2_161 = arith.constant 2 : index
    %c0_162 = arith.constant 0 : index
    %116 = vector.load %arg26[%c1_160, %c2_161, %c0_162] : memref<10x10x8xf32, #tpu.memory_space<vmem>>, vector<8x8x8xf32>
    %117 = vector.shape_cast %116 : vector<8x8x8xf32> to vector<64x8xf32>
    %c1_163 = arith.constant 1 : index
    %c2_164 = arith.constant 2 : index
    %c0_165 = arith.constant 0 : index
    %c0_166 = arith.constant 0 : index
    %118 = vector.load %arg5[%c1_163, %c2_164, %c0_165, %c0_166] : memref<3x3x8x8xf32, #tpu.memory_space<vmem>>, vector<1x1x8x8xf32>
    %119 = vector.shape_cast %118 : vector<1x1x8x8xf32> to vector<8x8xf32>
    %cst_167 = arith.constant dense<0.000000e+00> : vector<64x8xf32>
    %120 = tpu.matmul %117, %119, %cst_167 {dimension_numbers = #tpu.dot_dimension_numbers<[1], [0], [0], [1], [0, 0, 1, 1], [], []>} : vector<64x8xf32>, vector<8x8xf32>, vector<64x8xf32> -> vector<64x8xf32>
    %121 = arith.addf %115, %120 : vector<64x8xf32>
    %c2_168 = arith.constant 2 : index
    %c0_169 = arith.constant 0 : index
    %c0_170 = arith.constant 0 : index
    %122 = vector.load %arg26[%c2_168, %c0_169, %c0_170] : memref<10x10x8xf32, #tpu.memory_space<vmem>>, vector<8x8x8xf32>
    %123 = vector.shape_cast %122 : vector<8x8x8xf32> to vector<64x8xf32>
    %c2_171 = arith.constant 2 : index
    %c0_172 = arith.constant 0 : index
    %c0_173 = arith.constant 0 : index
    %c0_174 = arith.constant 0 : index
    %124 = vector.load %arg5[%c2_171, %c0_172, %c0_173, %c0_174] : memref<3x3x8x8xf32, #tpu.memory_space<vmem>>, vector<1x1x8x8xf32>
    %125 = vector.shape_cast %124 : vector<1x1x8x8xf32> to vector<8x8xf32>
    %cst_175 = arith.constant dense<0.000000e+00> : vector<64x8xf32>
    %126 = tpu.matmul %123, %125, %cst_175 {dimension_numbers = #tpu.dot_dimension_numbers<[1], [0], [0], [1], [0, 0, 1, 1], [], []>} : vector<64x8xf32>, vector<8x8xf32>, vector<64x8xf32> -> vector<64x8xf32>
    %127 = arith.addf %121, %126 : vector<64x8xf32>
    %c2_176 = arith.constant 2 : index
    %c1_177 = arith.constant 1 : index
    %c0_178 = arith.constant 0 : index
    %128 = vector.load %arg26[%c2_176, %c1_177, %c0_178] : memref<10x10x8xf32, #tpu.memory_space<vmem>>, vector<8x8x8xf32>
    %129 = vector.shape_cast %128 : vector<8x8x8xf32> to vector<64x8xf32>
    %c2_179 = arith.constant 2 : index
    %c1_180 = arith.constant 1 : index
    %c0_181 = arith.constant 0 : index
    %c0_182 = arith.constant 0 : index
    %130 = vector.load %arg5[%c2_179, %c1_180, %c0_181, %c0_182] : memref<3x3x8x8xf32, #tpu.memory_space<vmem>>, vector<1x1x8x8xf32>
    %131 = vector.shape_cast %130 : vector<1x1x8x8xf32> to vector<8x8xf32>
    %cst_183 = arith.constant dense<0.000000e+00> : vector<64x8xf32>
    %132 = tpu.matmul %129, %131, %cst_183 {dimension_numbers = #tpu.dot_dimension_numbers<[1], [0], [0], [1], [0, 0, 1, 1], [], []>} : vector<64x8xf32>, vector<8x8xf32>, vector<64x8xf32> -> vector<64x8xf32>
    %133 = arith.addf %127, %132 : vector<64x8xf32>
    %c2_184 = arith.constant 2 : index
    %c2_185 = arith.constant 2 : index
    %c0_186 = arith.constant 0 : index
    %134 = vector.load %arg26[%c2_184, %c2_185, %c0_186] : memref<10x10x8xf32, #tpu.memory_space<vmem>>, vector<8x8x8xf32>
    %135 = vector.shape_cast %134 : vector<8x8x8xf32> to vector<64x8xf32>
    %c2_187 = arith.constant 2 : index
    %c2_188 = arith.constant 2 : index
    %c0_189 = arith.constant 0 : index
    %c0_190 = arith.constant 0 : index
    %136 = vector.load %arg5[%c2_187, %c2_188, %c0_189, %c0_190] : memref<3x3x8x8xf32, #tpu.memory_space<vmem>>, vector<1x1x8x8xf32>
    %137 = vector.shape_cast %136 : vector<1x1x8x8xf32> to vector<8x8xf32>
    %cst_191 = arith.constant dense<0.000000e+00> : vector<64x8xf32>
    %138 = tpu.matmul %135, %137, %cst_191 {dimension_numbers = #tpu.dot_dimension_numbers<[1], [0], [0], [1], [0, 0, 1, 1], [], []>} : vector<64x8xf32>, vector<8x8xf32>, vector<64x8xf32> -> vector<64x8xf32>
    %139 = arith.addf %133, %138 : vector<64x8xf32>
    %c0_192 = arith.constant 0 : index
    %c0_193 = arith.constant 0 : index
    %140 = vector.load %arg6[%c0_192, %c0_193] : memref<1x8xf32, #tpu.memory_space<vmem>>, vector<1x8xf32>
    %141 = vector.broadcast %140 : vector<1x8xf32> to vector<64x8xf32>
    %142 = arith.mulf %139, %141 : vector<64x8xf32>
    %c0_194 = arith.constant 0 : index
    %c0_195 = arith.constant 0 : index
    %143 = vector.load %arg7[%c0_194, %c0_195] : memref<1x8xf32, #tpu.memory_space<vmem>>, vector<1x8xf32>
    %144 = vector.broadcast %143 : vector<1x8xf32> to vector<64x8xf32>
    %145 = arith.addf %142, %144 : vector<64x8xf32>
    %cst_196 = arith.constant 0.000000e+00 : f32
    %146 = vector.broadcast %cst_196 : f32 to vector<64x8xf32>
    %147 = arith.maximumf %145, %146 : vector<64x8xf32>
    %cst_197 = arith.constant 0.000000e+00 : f32
    %148 = vector.broadcast %cst_197 : f32 to vector<8x8x4xf32>
    %c1_198 = arith.constant 1 : index
    %c1_199 = arith.constant 1 : index
    %c0_200 = arith.constant 0 : index
    %149 = vector.load %arg25[%c1_198, %c1_199, %c0_200] : memref<12x10x4xf32, #tpu.memory_space<vmem>>, vector<8x8x4xf32>
    %c0_201 = arith.constant 0 : index
    %c0_202 = arith.constant 0 : index
    %c0_203 = arith.constant 0 : index
    %c0_204 = arith.constant 0 : index
    %150 = vector.load %arg8[%c0_201, %c0_202, %c0_203, %c0_204] : memref<3x1x1x4xf32, #tpu.memory_space<vmem>>, vector<1x1x1x4xf32>
    %151 = vector.shape_cast %150 : vector<1x1x1x4xf32> to vector<1x1x4xf32>
    %152 = vector.broadcast %151 : vector<1x1x4xf32> to vector<8x8x4xf32>
    %153 = arith.mulf %149, %152 : vector<8x8x4xf32>
    %154 = arith.addf %148, %153 : vector<8x8x4xf32>
    %c2_205 = arith.constant 2 : index
    %c1_206 = arith.constant 1 : index
    %c0_207 = arith.constant 0 : index
    %155 = vector.load %arg25[%c2_205, %c1_206, %c0_207] : memref<12x10x4xf32, #tpu.memory_space<vmem>>, vector<8x8x4xf32>
    %c1_208 = arith.constant 1 : index
    %c0_209 = arith.constant 0 : index
    %c0_210 = arith.constant 0 : index
    %c0_211 = arith.constant 0 : index
    %156 = vector.load %arg8[%c1_208, %c0_209, %c0_210, %c0_211] : memref<3x1x1x4xf32, #tpu.memory_space<vmem>>, vector<1x1x1x4xf32>
    %157 = vector.shape_cast %156 : vector<1x1x1x4xf32> to vector<1x1x4xf32>
    %158 = vector.broadcast %157 : vector<1x1x4xf32> to vector<8x8x4xf32>
    %159 = arith.mulf %155, %158 : vector<8x8x4xf32>
    %160 = arith.addf %154, %159 : vector<8x8x4xf32>
    %c3_212 = arith.constant 3 : index
    %c1_213 = arith.constant 1 : index
    %c0_214 = arith.constant 0 : index
    %161 = vector.load %arg25[%c3_212, %c1_213, %c0_214] : memref<12x10x4xf32, #tpu.memory_space<vmem>>, vector<8x8x4xf32>
    %c2_215 = arith.constant 2 : index
    %c0_216 = arith.constant 0 : index
    %c0_217 = arith.constant 0 : index
    %c0_218 = arith.constant 0 : index
    %162 = vector.load %arg8[%c2_215, %c0_216, %c0_217, %c0_218] : memref<3x1x1x4xf32, #tpu.memory_space<vmem>>, vector<1x1x1x4xf32>
    %163 = vector.shape_cast %162 : vector<1x1x1x4xf32> to vector<1x1x4xf32>
    %164 = vector.broadcast %163 : vector<1x1x4xf32> to vector<8x8x4xf32>
    %165 = arith.mulf %161, %164 : vector<8x8x4xf32>
    %166 = arith.addf %160, %165 : vector<8x8x4xf32>
    %c0_219 = arith.constant 0 : index
    %c0_220 = arith.constant 0 : index
    %c0_221 = arith.constant 0 : index
    %167 = vector.load %arg9[%c0_219, %c0_220, %c0_221] : memref<1x1x4xf32, #tpu.memory_space<vmem>>, vector<1x1x4xf32>
    %168 = vector.broadcast %167 : vector<1x1x4xf32> to vector<8x8x4xf32>
    %169 = arith.addf %166, %168 : vector<8x8x4xf32>
    %170 = math.absf %169 : vector<8x8x4xf32>
    %c1_222 = arith.constant 1 : index
    %c0_223 = arith.constant 0 : index
    %c0_224 = arith.constant 0 : index
    %171 = vector.load %arg27[%c1_222, %c0_223, %c0_224] : memref<10x8x4xf32, #tpu.memory_space<vmem>>, vector<8x8x4xf32>
    tpu.vector_store %arg27[%c1_222, %c0_223, %c0_224], %170 {strides = array<i32>} : memref<10x8x4xf32, #tpu.memory_space<vmem>>, vector<8x8x4xf32>,
    %cst_225 = arith.constant 0.000000e+00 : f32
    %172 = vector.broadcast %cst_225 : f32 to vector<8x8x4xf32>
    %c0_226 = arith.constant 0 : index
    %c1_227 = arith.constant 1 : index
    %c0_228 = arith.constant 0 : index
    %173 = vector.load %arg25[%c0_226, %c1_227, %c0_228] : memref<12x10x4xf32, #tpu.memory_space<vmem>>, vector<8x8x4xf32>
    %c0_229 = arith.constant 0 : index
    %c0_230 = arith.constant 0 : index
    %c0_231 = arith.constant 0 : index
    %c0_232 = arith.constant 0 : index
    %174 = vector.load %arg10[%c0_229, %c0_230, %c0_231, %c0_232] : memref<5x1x1x4xf32, #tpu.memory_space<vmem>>, vector<1x1x1x4xf32>
    %175 = vector.shape_cast %174 : vector<1x1x1x4xf32> to vector<1x1x4xf32>
    %176 = vector.broadcast %175 : vector<1x1x4xf32> to vector<8x8x4xf32>
    %177 = arith.mulf %173, %176 : vector<8x8x4xf32>
    %178 = arith.addf %172, %177 : vector<8x8x4xf32>
    %c1_233 = arith.constant 1 : index
    %c1_234 = arith.constant 1 : index
    %c0_235 = arith.constant 0 : index
    %179 = vector.load %arg25[%c1_233, %c1_234, %c0_235] : memref<12x10x4xf32, #tpu.memory_space<vmem>>, vector<8x8x4xf32>
    %c1_236 = arith.constant 1 : index
    %c0_237 = arith.constant 0 : index
    %c0_238 = arith.constant 0 : index
    %c0_239 = arith.constant 0 : index
    %180 = vector.load %arg10[%c1_236, %c0_237, %c0_238, %c0_239] : memref<5x1x1x4xf32, #tpu.memory_space<vmem>>, vector<1x1x1x4xf32>
    %181 = vector.shape_cast %180 : vector<1x1x1x4xf32> to vector<1x1x4xf32>
    %182 = vector.broadcast %181 : vector<1x1x4xf32> to vector<8x8x4xf32>
    %183 = arith.mulf %179, %182 : vector<8x8x4xf32>
    %184 = arith.addf %178, %183 : vector<8x8x4xf32>
    %c2_240 = arith.constant 2 : index
    %c1_241 = arith.constant 1 : index
    %c0_242 = arith.constant 0 : index
    %185 = vector.load %arg25[%c2_240, %c1_241, %c0_242] : memref<12x10x4xf32, #tpu.memory_space<vmem>>, vector<8x8x4xf32>
    %c2_243 = arith.constant 2 : index
    %c0_244 = arith.constant 0 : index
    %c0_245 = arith.constant 0 : index
    %c0_246 = arith.constant 0 : index
    %186 = vector.load %arg10[%c2_243, %c0_244, %c0_245, %c0_246] : memref<5x1x1x4xf32, #tpu.memory_space<vmem>>, vector<1x1x1x4xf32>
    %187 = vector.shape_cast %186 : vector<1x1x1x4xf32> to vector<1x1x4xf32>
    %188 = vector.broadcast %187 : vector<1x1x4xf32> to vector<8x8x4xf32>
    %189 = arith.mulf %185, %188 : vector<8x8x4xf32>
    %190 = arith.addf %184, %189 : vector<8x8x4xf32>
    %c3_247 = arith.constant 3 : index
    %c1_248 = arith.constant 1 : index
    %c0_249 = arith.constant 0 : index
    %191 = vector.load %arg25[%c3_247, %c1_248, %c0_249] : memref<12x10x4xf32, #tpu.memory_space<vmem>>, vector<8x8x4xf32>
    %c3_250 = arith.constant 3 : index
    %c0_251 = arith.constant 0 : index
    %c0_252 = arith.constant 0 : index
    %c0_253 = arith.constant 0 : index
    %192 = vector.load %arg10[%c3_250, %c0_251, %c0_252, %c0_253] : memref<5x1x1x4xf32, #tpu.memory_space<vmem>>, vector<1x1x1x4xf32>
    %193 = vector.shape_cast %192 : vector<1x1x1x4xf32> to vector<1x1x4xf32>
    %194 = vector.broadcast %193 : vector<1x1x4xf32> to vector<8x8x4xf32>
    %195 = arith.mulf %191, %194 : vector<8x8x4xf32>
    %196 = arith.addf %190, %195 : vector<8x8x4xf32>
    %c4 = arith.constant 4 : index
    %c1_254 = arith.constant 1 : index
    %c0_255 = arith.constant 0 : index
    %197 = vector.load %arg25[%c4, %c1_254, %c0_255] : memref<12x10x4xf32, #tpu.memory_space<vmem>>, vector<8x8x4xf32>
    %c4_256 = arith.constant 4 : index
    %c0_257 = arith.constant 0 : index
    %c0_258 = arith.constant 0 : index
    %c0_259 = arith.constant 0 : index
    %198 = vector.load %arg10[%c4_256, %c0_257, %c0_258, %c0_259] : memref<5x1x1x4xf32, #tpu.memory_space<vmem>>, vector<1x1x1x4xf32>
    %199 = vector.shape_cast %198 : vector<1x1x1x4xf32> to vector<1x1x4xf32>
    %200 = vector.broadcast %199 : vector<1x1x4xf32> to vector<8x8x4xf32>
    %201 = arith.mulf %197, %200 : vector<8x8x4xf32>
    %202 = arith.addf %196, %201 : vector<8x8x4xf32>
    %c0_260 = arith.constant 0 : index
    %c0_261 = arith.constant 0 : index
    %c0_262 = arith.constant 0 : index
    %203 = vector.load %arg11[%c0_260, %c0_261, %c0_262] : memref<1x1x4xf32, #tpu.memory_space<vmem>>, vector<1x1x4xf32>
    %204 = vector.broadcast %203 : vector<1x1x4xf32> to vector<8x8x4xf32>
    %205 = arith.addf %202, %204 : vector<8x8x4xf32>
    %206 = math.absf %205 : vector<8x8x4xf32>
    %c2_263 = arith.constant 2 : index
    %c0_264 = arith.constant 0 : index
    %c0_265 = arith.constant 0 : index
    %207 = vector.load %arg28[%c2_263, %c0_264, %c0_265] : memref<12x8x4xf32, #tpu.memory_space<vmem>>, vector<8x8x4xf32>
    tpu.vector_store %arg28[%c2_263, %c0_264, %c0_265], %206 {strides = array<i32>} : memref<12x8x4xf32, #tpu.memory_space<vmem>>, vector<8x8x4xf32>,
    %cst_266 = arith.constant 0.000000e+00 : f32
    %208 = vector.broadcast %cst_266 : f32 to vector<64x4xf32>
    %c0_267 = arith.constant 0 : index
    %c0_268 = arith.constant 0 : index
    %c0_269 = arith.constant 0 : index
    %209 = vector.load %arg27[%c0_267, %c0_268, %c0_269] : memref<10x8x4xf32, #tpu.memory_space<vmem>>, vector<8x8x4xf32>
    %210 = vector.shape_cast %209 : vector<8x8x4xf32> to vector<64x4xf32>
    %c0_270 = arith.constant 0 : index
    %c0_271 = arith.constant 0 : index
    %c0_272 = arith.constant 0 : index
    %211 = vector.load %arg12[%c0_270, %c0_271, %c0_272] : memref<3x4x4xf32, #tpu.memory_space<vmem>>, vector<1x4x4xf32>
    %212 = vector.shape_cast %211 : vector<1x4x4xf32> to vector<4x4xf32>
    %cst_273 = arith.constant dense<0.000000e+00> : vector<64x4xf32>
    %213 = tpu.matmul %210, %212, %cst_273 {dimension_numbers = #tpu.dot_dimension_numbers<[1], [0], [0], [1], [0, 0, 1, 1], [], []>} : vector<64x4xf32>, vector<4x4xf32>, vector<64x4xf32> -> vector<64x4xf32>
    %214 = arith.addf %208, %213 : vector<64x4xf32>
    %c1_274 = arith.constant 1 : index
    %c0_275 = arith.constant 0 : index
    %c0_276 = arith.constant 0 : index
    %215 = vector.load %arg27[%c1_274, %c0_275, %c0_276] : memref<10x8x4xf32, #tpu.memory_space<vmem>>, vector<8x8x4xf32>
    %216 = vector.shape_cast %215 : vector<8x8x4xf32> to vector<64x4xf32>
    %c1_277 = arith.constant 1 : index
    %c0_278 = arith.constant 0 : index
    %c0_279 = arith.constant 0 : index
    %217 = vector.load %arg12[%c1_277, %c0_278, %c0_279] : memref<3x4x4xf32, #tpu.memory_space<vmem>>, vector<1x4x4xf32>
    %218 = vector.shape_cast %217 : vector<1x4x4xf32> to vector<4x4xf32>
    %cst_280 = arith.constant dense<0.000000e+00> : vector<64x4xf32>
    %219 = tpu.matmul %216, %218, %cst_280 {dimension_numbers = #tpu.dot_dimension_numbers<[1], [0], [0], [1], [0, 0, 1, 1], [], []>} : vector<64x4xf32>, vector<4x4xf32>, vector<64x4xf32> -> vector<64x4xf32>
    %220 = arith.addf %214, %219 : vector<64x4xf32>
    %c2_281 = arith.constant 2 : index
    %c0_282 = arith.constant 0 : index
    %c0_283 = arith.constant 0 : index
    %221 = vector.load %arg27[%c2_281, %c0_282, %c0_283] : memref<10x8x4xf32, #tpu.memory_space<vmem>>, vector<8x8x4xf32>
    %222 = vector.shape_cast %221 : vector<8x8x4xf32> to vector<64x4xf32>
    %c2_284 = arith.constant 2 : index
    %c0_285 = arith.constant 0 : index
    %c0_286 = arith.constant 0 : index
    %223 = vector.load %arg12[%c2_284, %c0_285, %c0_286] : memref<3x4x4xf32, #tpu.memory_space<vmem>>, vector<1x4x4xf32>
    %224 = vector.shape_cast %223 : vector<1x4x4xf32> to vector<4x4xf32>
    %cst_287 = arith.constant dense<0.000000e+00> : vector<64x4xf32>
    %225 = tpu.matmul %222, %224, %cst_287 {dimension_numbers = #tpu.dot_dimension_numbers<[1], [0], [0], [1], [0, 0, 1, 1], [], []>} : vector<64x4xf32>, vector<4x4xf32>, vector<64x4xf32> -> vector<64x4xf32>
    %226 = arith.addf %220, %225 : vector<64x4xf32>
    %c0_288 = arith.constant 0 : index
    %c0_289 = arith.constant 0 : index
    %227 = vector.load %arg13[%c0_288, %c0_289] : memref<1x4xf32, #tpu.memory_space<vmem>>, vector<1x4xf32>
    %228 = vector.broadcast %227 : vector<1x4xf32> to vector<64x4xf32>
    %229 = arith.mulf %226, %228 : vector<64x4xf32>
    %c0_290 = arith.constant 0 : index
    %c0_291 = arith.constant 0 : index
    %230 = vector.load %arg14[%c0_290, %c0_291] : memref<1x4xf32, #tpu.memory_space<vmem>>, vector<1x4xf32>
    %231 = vector.broadcast %230 : vector<1x4xf32> to vector<64x4xf32>
    %232 = arith.addf %229, %231 : vector<64x4xf32>
    %cst_292 = arith.constant 0.000000e+00 : f32
    %233 = vector.broadcast %cst_292 : f32 to vector<64x4xf32>
    %234 = arith.maximumf %232, %233 : vector<64x4xf32>
    %cst_293 = arith.constant 0.000000e+00 : f32
    %235 = vector.broadcast %cst_293 : f32 to vector<64x4xf32>
    %c0_294 = arith.constant 0 : index
    %c0_295 = arith.constant 0 : index
    %c0_296 = arith.constant 0 : index
    %236 = vector.load %arg28[%c0_294, %c0_295, %c0_296] : memref<12x8x4xf32, #tpu.memory_space<vmem>>, vector<8x8x4xf32>
    %237 = vector.shape_cast %236 : vector<8x8x4xf32> to vector<64x4xf32>
    %c0_297 = arith.constant 0 : index
    %c0_298 = arith.constant 0 : index
    %c0_299 = arith.constant 0 : index
    %238 = vector.load %arg15[%c0_297, %c0_298, %c0_299] : memref<5x4x4xf32, #tpu.memory_space<vmem>>, vector<1x4x4xf32>
    %239 = vector.shape_cast %238 : vector<1x4x4xf32> to vector<4x4xf32>
    %cst_300 = arith.constant dense<0.000000e+00> : vector<64x4xf32>
    %240 = tpu.matmul %237, %239, %cst_300 {dimension_numbers = #tpu.dot_dimension_numbers<[1], [0], [0], [1], [0, 0, 1, 1], [], []>} : vector<64x4xf32>, vector<4x4xf32>, vector<64x4xf32> -> vector<64x4xf32>
    %241 = arith.addf %235, %240 : vector<64x4xf32>
    %c1_301 = arith.constant 1 : index
    %c0_302 = arith.constant 0 : index
    %c0_303 = arith.constant 0 : index
    %242 = vector.load %arg28[%c1_301, %c0_302, %c0_303] : memref<12x8x4xf32, #tpu.memory_space<vmem>>, vector<8x8x4xf32>
    %243 = vector.shape_cast %242 : vector<8x8x4xf32> to vector<64x4xf32>
    %c1_304 = arith.constant 1 : index
    %c0_305 = arith.constant 0 : index
    %c0_306 = arith.constant 0 : index
    %244 = vector.load %arg15[%c1_304, %c0_305, %c0_306] : memref<5x4x4xf32, #tpu.memory_space<vmem>>, vector<1x4x4xf32>
    %245 = vector.shape_cast %244 : vector<1x4x4xf32> to vector<4x4xf32>
    %cst_307 = arith.constant dense<0.000000e+00> : vector<64x4xf32>
    %246 = tpu.matmul %243, %245, %cst_307 {dimension_numbers = #tpu.dot_dimension_numbers<[1], [0], [0], [1], [0, 0, 1, 1], [], []>} : vector<64x4xf32>, vector<4x4xf32>, vector<64x4xf32> -> vector<64x4xf32>
    %247 = arith.addf %241, %246 : vector<64x4xf32>
    %c2_308 = arith.constant 2 : index
    %c0_309 = arith.constant 0 : index
    %c0_310 = arith.constant 0 : index
    %248 = vector.load %arg28[%c2_308, %c0_309, %c0_310] : memref<12x8x4xf32, #tpu.memory_space<vmem>>, vector<8x8x4xf32>
    %249 = vector.shape_cast %248 : vector<8x8x4xf32> to vector<64x4xf32>
    %c2_311 = arith.constant 2 : index
    %c0_312 = arith.constant 0 : index
    %c0_313 = arith.constant 0 : index
    %250 = vector.load %arg15[%c2_311, %c0_312, %c0_313] : memref<5x4x4xf32, #tpu.memory_space<vmem>>, vector<1x4x4xf32>
    %251 = vector.shape_cast %250 : vector<1x4x4xf32> to vector<4x4xf32>
    %cst_314 = arith.constant dense<0.000000e+00> : vector<64x4xf32>
    %252 = tpu.matmul %249, %251, %cst_314 {dimension_numbers = #tpu.dot_dimension_numbers<[1], [0], [0], [1], [0, 0, 1, 1], [], []>} : vector<64x4xf32>, vector<4x4xf32>, vector<64x4xf32> -> vector<64x4xf32>
    %253 = arith.addf %247, %252 : vector<64x4xf32>
    %c3_315 = arith.constant 3 : index
    %c0_316 = arith.constant 0 : index
    %c0_317 = arith.constant 0 : index
    %254 = vector.load %arg28[%c3_315, %c0_316, %c0_317] : memref<12x8x4xf32, #tpu.memory_space<vmem>>, vector<8x8x4xf32>
    %255 = vector.shape_cast %254 : vector<8x8x4xf32> to vector<64x4xf32>
    %c3_318 = arith.constant 3 : index
    %c0_319 = arith.constant 0 : index
    %c0_320 = arith.constant 0 : index
    %256 = vector.load %arg15[%c3_318, %c0_319, %c0_320] : memref<5x4x4xf32, #tpu.memory_space<vmem>>, vector<1x4x4xf32>
    %257 = vector.shape_cast %256 : vector<1x4x4xf32> to vector<4x4xf32>
    %cst_321 = arith.constant dense<0.000000e+00> : vector<64x4xf32>
    %258 = tpu.matmul %255, %257, %cst_321 {dimension_numbers = #tpu.dot_dimension_numbers<[1], [0], [0], [1], [0, 0, 1, 1], [], []>} : vector<64x4xf32>, vector<4x4xf32>, vector<64x4xf32> -> vector<64x4xf32>
    %259 = arith.addf %253, %258 : vector<64x4xf32>
    %c4_322 = arith.constant 4 : index
    %c0_323 = arith.constant 0 : index
    %c0_324 = arith.constant 0 : index
    %260 = vector.load %arg28[%c4_322, %c0_323, %c0_324] : memref<12x8x4xf32, #tpu.memory_space<vmem>>, vector<8x8x4xf32>
    %261 = vector.shape_cast %260 : vector<8x8x4xf32> to vector<64x4xf32>
    %c4_325 = arith.constant 4 : index
    %c0_326 = arith.constant 0 : index
    %c0_327 = arith.constant 0 : index
    %262 = vector.load %arg15[%c4_325, %c0_326, %c0_327] : memref<5x4x4xf32, #tpu.memory_space<vmem>>, vector<1x4x4xf32>
    %263 = vector.shape_cast %262 : vector<1x4x4xf32> to vector<4x4xf32>
    %cst_328 = arith.constant dense<0.000000e+00> : vector<64x4xf32>
    %264 = tpu.matmul %261, %263, %cst_328 {dimension_numbers = #tpu.dot_dimension_numbers<[1], [0], [0], [1], [0, 0, 1, 1], [], []>} : vector<64x4xf32>, vector<4x4xf32>, vector<64x4xf32> -> vector<64x4xf32>
    %265 = arith.addf %259, %264 : vector<64x4xf32>
    %c0_329 = arith.constant 0 : index
    %c0_330 = arith.constant 0 : index
    %266 = vector.load %arg16[%c0_329, %c0_330] : memref<1x4xf32, #tpu.memory_space<vmem>>, vector<1x4xf32>
    %267 = vector.broadcast %266 : vector<1x4xf32> to vector<64x4xf32>
    %268 = arith.mulf %265, %267 : vector<64x4xf32>
    %c0_331 = arith.constant 0 : index
    %c0_332 = arith.constant 0 : index
    %269 = vector.load %arg17[%c0_331, %c0_332] : memref<1x4xf32, #tpu.memory_space<vmem>>, vector<1x4xf32>
    %270 = vector.broadcast %269 : vector<1x4xf32> to vector<64x4xf32>
    %271 = arith.addf %268, %270 : vector<64x4xf32>
    %cst_333 = arith.constant 0.000000e+00 : f32
    %272 = vector.broadcast %cst_333 : f32 to vector<64x4xf32>
    %273 = arith.maximumf %271, %272 : vector<64x4xf32>
    %274 = arith.addf %234, %273 : vector<64x4xf32>
    %c0_334 = arith.constant 0 : index
    %c0_335 = arith.constant 0 : index
    %275 = vector.load %arg18[%c0_334, %c0_335] : memref<4x8xf32, #tpu.memory_space<vmem>>, vector<4x8xf32>
    %cst_336 = arith.constant dense<0.000000e+00> : vector<64x8xf32>
    %276 = tpu.matmul %274, %275, %cst_336 {dimension_numbers = #tpu.dot_dimension_numbers<[1], [0], [0], [1], [0, 0, 1, 1], [], []>} : vector<64x4xf32>, vector<4x8xf32>, vector<64x8xf32> -> vector<64x8xf32>
    %c0_337 = arith.constant 0 : index
    %c0_338 = arith.constant 0 : index
    %277 = vector.load %arg19[%c0_337, %c0_338] : memref<1x8xf32, #tpu.memory_space<vmem>>, vector<1x8xf32>
    %278 = vector.broadcast %277 : vector<1x8xf32> to vector<64x8xf32>
    %279 = arith.mulf %276, %278 : vector<64x8xf32>
    %c0_339 = arith.constant 0 : index
    %c0_340 = arith.constant 0 : index
    %280 = vector.load %arg20[%c0_339, %c0_340] : memref<1x8xf32, #tpu.memory_space<vmem>>, vector<1x8xf32>
    %281 = vector.broadcast %280 : vector<1x8xf32> to vector<64x8xf32>
    %282 = arith.addf %279, %281 : vector<64x8xf32>
    %cst_341 = arith.constant 0.000000e+00 : f32
    %283 = vector.broadcast %cst_341 : f32 to vector<64x8xf32>
    %284 = arith.maximumf %282, %283 : vector<64x8xf32>
    %285 = arith.addf %147, %284 : vector<64x8xf32>
    %c0_342 = arith.constant 0 : index
    %c0_343 = arith.constant 0 : index
    %286 = vector.load %arg21[%c0_342, %c0_343] : memref<8x8xf32, #tpu.memory_space<vmem>>, vector<8x8xf32>
    %cst_344 = arith.constant dense<0.000000e+00> : vector<8x64xf32>
    %287 = tpu.matmul %286, %285, %cst_344 {dimension_numbers = #tpu.dot_dimension_numbers<[1], [1], [0], [0], [0, 0, 1, 0], [], []>} : vector<8x8xf32>, vector<64x8xf32>, vector<8x64xf32> -> vector<8x64xf32>
    %c0_345 = arith.constant 0 : index
    %c0_346 = arith.constant 0 : index
    %288 = vector.load %arg22[%c0_345, %c0_346] : memref<8x1xf32, #tpu.memory_space<vmem>>, vector<8x1xf32>
    %289 = vector.broadcast %288 : vector<8x1xf32> to vector<8x64xf32>
    %290 = arith.mulf %287, %289 : vector<8x64xf32>
    %c0_347 = arith.constant 0 : index
    %c0_348 = arith.constant 0 : index
    %291 = vector.load %arg23[%c0_347, %c0_348] : memref<8x1xf32, #tpu.memory_space<vmem>>, vector<8x1xf32>
    %292 = vector.broadcast %291 : vector<8x1xf32> to vector<8x64xf32>
    %293 = arith.addf %290, %292 : vector<8x64xf32>
    %cst_349 = arith.constant 0.000000e+00 : f32
    %294 = vector.broadcast %cst_349 : f32 to vector<8x64xf32>
    %295 = arith.maximumf %293, %294 : vector<8x64xf32>
    %c0_350 = arith.constant 0 : index
    %c0_351 = arith.constant 0 : index
    %c0_352 = arith.constant 0 : index
    %296 = vector.load %arg24[%c0_350, %c0_351, %c0_352] : memref<1x8x64xf32, #tpu.memory_space<vmem>>, vector<1x8x64xf32>
    %297 = vector.shape_cast %296 : vector<1x8x64xf32> to vector<8x64xf32>
    %298 = vector.shape_cast %295 : vector<8x64xf32> to vector<1x8x64xf32>
    tpu.vector_store %arg24[%c0_350, %c0_351, %c0_352], %298 {strides = array<i32>} : memref<1x8x64xf32, #tpu.memory_space<vmem>>, vector<1x8x64xf32>,
    return
  }
  func.func @transform_0(%arg0: i32) -> (i32, i32, i32, i32, i32, i32) {
    %c0_i32 = arith.constant 0 : i32
    %c0_i32_0 = arith.constant 0 : i32
    %c0_i32_1 = arith.constant 0 : i32
    %c0_i32_2 = arith.constant 0 : i32
    %c0_i32_3 = arith.constant 0 : i32
    %c0_i32_4 = arith.constant 0 : i32
    return %arg0, %c0_i32, %c0_i32_0, %c0_i32_1, %c0_i32_2, %c0_i32_3 : i32, i32, i32, i32, i32, i32
  }
  func.func @transform_1(%arg0: i32) -> (i32, i32, i32, i32) {
    %c0_i32 = arith.constant 0 : i32
    %c0_i32_0 = arith.constant 0 : i32
    %c0_i32_1 = arith.constant 0 : i32
    %c0_i32_2 = arith.constant 0 : i32
    %c0_i32_3 = arith.constant 0 : i32
    return %c0_i32, %c0_i32_0, %c0_i32_1, %c0_i32_2 : i32, i32, i32, i32
  }
  func.func @transform_2(%arg0: i32) -> (i32, i32) {
    %c0_i32 = arith.constant 0 : i32
    %c0_i32_0 = arith.constant 0 : i32
    %c0_i32_1 = arith.constant 0 : i32
    return %c0_i32, %c0_i32_0 : i32, i32
  }
  func.func @transform_3(%arg0: i32) -> (i32, i32) {
    %c0_i32 = arith.constant 0 : i32
    %c0_i32_0 = arith.constant 0 : i32
    %c0_i32_1 = arith.constant 0 : i32
    return %c0_i32, %c0_i32_0 : i32, i32
  }
  func.func @transform_4(%arg0: i32) -> (i32, i32, i32, i32) {
    %c0_i32 = arith.constant 0 : i32
    %c0_i32_0 = arith.constant 0 : i32
    %c0_i32_1 = arith.constant 0 : i32
    %c0_i32_2 = arith.constant 0 : i32
    %c0_i32_3 = arith.constant 0 : i32
    return %c0_i32, %c0_i32_0, %c0_i32_1, %c0_i32_2 : i32, i32, i32, i32
  }
  func.func @transform_5(%arg0: i32) -> (i32, i32) {
    %c0_i32 = arith.constant 0 : i32
    %c0_i32_0 = arith.constant 0 : i32
    %c0_i32_1 = arith.constant 0 : i32
    return %c0_i32, %c0_i32_0 : i32, i32
  }
  func.func @transform_6(%arg0: i32) -> (i32, i32) {
    %c0_i32 = arith.constant 0 : i32
    %c0_i32_0 = arith.constant 0 : i32
    %c0_i32_1 = arith.constant 0 : i32
    return %c0_i32, %c0_i32_0 : i32, i32
  }
  func.func @transform_7(%arg0: i32) -> (i32, i32, i32, i32) {
    %c0_i32 = arith.constant 0 : i32
    %c0_i32_0 = arith.constant 0 : i32
    %c0_i32_1 = arith.constant 0 : i32
    %c0_i32_2 = arith.constant 0 : i32
    %c0_i32_3 = arith.constant 0 : i32
    return %c0_i32, %c0_i32_0, %c0_i32_1, %c0_i32_2 : i32, i32, i32, i32
  }
  func.func @transform_8(%arg0: i32) -> (i32, i32, i32) {
    %c0_i32 = arith.constant 0 : i32
    %c0_i32_0 = arith.constant 0 : i32
    %c0_i32_1 = arith.constant 0 : i32
    %c0_i32_2 = arith.constant 0 : i32
    return %c0_i32, %c0_i32_0, %c0_i32_1 : i32, i32, i32
  }
  func.func @transform_9(%arg0: i32) -> (i32, i32, i32, i32) {
    %c0_i32 = arith.constant 0 : i32
    %c0_i32_0 = arith.constant 0 : i32
    %c0_i32_1 = arith.constant 0 : i32
    %c0_i32_2 = arith.constant 0 : i32
    %c0_i32_3 = arith.constant 0 : i32
    return %c0_i32, %c0_i32_0, %c0_i32_1, %c0_i32_2 : i32, i32, i32, i32
  }
  func.func @transform_10(%arg0: i32) -> (i32, i32, i32) {
    %c0_i32 = arith.constant 0 : i32
    %c0_i32_0 = arith.constant 0 : i32
    %c0_i32_1 = arith.constant 0 : i32
    %c0_i32_2 = arith.constant 0 : i32
    return %c0_i32, %c0_i32_0, %c0_i32_1 : i32, i32, i32
  }
  func.func @transform_11(%arg0: i32) -> (i32, i32, i32) {
    %c0_i32 = arith.constant 0 : i32
    %c0_i32_0 = arith.constant 0 : i32
    %c0_i32_1 = arith.constant 0 : i32
    %c0_i32_2 = arith.constant 0 : i32
    return %c0_i32, %c0_i32_0, %c0_i32_1 : i32, i32, i32
  }
  func.func @transform_12(%arg0: i32) -> (i32, i32) {
    %c0_i32 = arith.constant 0 : i32
    %c0_i32_0 = arith.constant 0 : i32
    %c0_i32_1 = arith.constant 0 : i32
    return %c0_i32, %c0_i32_0 : i32, i32
  }
  func.func @transform_13(%arg0: i32) -> (i32, i32) {
    %c0_i32 = arith.constant 0 : i32
    %c0_i32_0 = arith.constant 0 : i32
    %c0_i32_1 = arith.constant 0 : i32
    return %c0_i32, %c0_i32_0 : i32, i32
  }
  func.func @transform_14(%arg0: i32) -> (i32, i32, i32) {
    %c0_i32 = arith.constant 0 : i32
    %c0_i32_0 = arith.constant 0 : i32
    %c0_i32_1 = arith.constant 0 : i32
    %c0_i32_2 = arith.constant 0 : i32
    return %c0_i32, %c0_i32_0, %c0_i32_1 : i32, i32, i32
  }
  func.func @transform_15(%arg0: i32) -> (i32, i32) {
    %c0_i32 = arith.constant 0 : i32
    %c0_i32_0 = arith.constant 0 : i32
    %c0_i32_1 = arith.constant 0 : i32
    return %c0_i32, %c0_i32_0 : i32, i32
  }
  func.func @transform_16(%arg0: i32) -> (i32, i32) {
    %c0_i32 = arith.constant 0 : i32
    %c0_i32_0 = arith.constant 0 : i32
    %c0_i32_1 = arith.constant 0 : i32
    return %c0_i32, %c0_i32_0 : i32, i32
  }
  func.func @transform_17(%arg0: i32) -> (i32, i32) {
    %c0_i32 = arith.constant 0 : i32
    %c0_i32_0 = arith.constant 0 : i32
    %c0_i32_1 = arith.constant 0 : i32
    return %c0_i32, %c0_i32_0 : i32, i32
  }
  func.func @transform_18(%arg0: i32) -> (i32, i32) {
    %c0_i32 = arith.constant 0 : i32
    %c0_i32_0 = arith.constant 0 : i32
    %c0_i32_1 = arith.constant 0 : i32
    return %c0_i32, %c0_i32_0 : i32, i32
  }
  func.func @transform_19(%arg0: i32) -> (i32, i32) {
    %c0_i32 = arith.constant 0 : i32
    %c0_i32_0 = arith.constant 0 : i32
    %c0_i32_1 = arith.constant 0 : i32
    return %c0_i32, %c0_i32_0 : i32, i32
  }
  func.func @transform_20(%arg0: i32) -> (i32, i32) {
    %c0_i32 = arith.constant 0 : i32
    %c0_i32_0 = arith.constant 0 : i32
    %c0_i32_1 = arith.constant 0 : i32
    return %c0_i32, %c0_i32_0 : i32, i32
  }
  func.func @transform_21(%arg0: i32) -> (i32, i32) {
    %c0_i32 = arith.constant 0 : i32
    %c0_i32_0 = arith.constant 0 : i32
    %c0_i32_1 = arith.constant 0 : i32
    return %c0_i32, %c0_i32_0 : i32, i32
  }
  func.func @transform_22(%arg0: i32) -> (i32, i32) {
    %c0_i32 = arith.constant 0 : i32
    %c0_i32_0 = arith.constant 0 : i32
    %c0_i32_1 = arith.constant 0 : i32
    return %c0_i32, %c0_i32_0 : i32, i32
  }
  func.func @transform_23(%arg0: i32) -> (i32, i32, i32) {
    %c0_i32 = arith.constant 0 : i32
    %c0_i32_0 = arith.constant 0 : i32
    %c0_i32_1 = arith.constant 0 : i32
    return %arg0, %c0_i32, %c0_i32_0 : i32, i32, i32
  }
}

</mosaic_0001>

<llo_original>
// kernel: down_forward.1
$region0: #{down_forward.1}
  #allocation0 [shape = 'u32[]', space=smem, size = 0x4, offset = 0x4, fixed_abs, tag = 'smem constant byte address 0x4 - core index']
  #allocation1 [shape = 'u32[144,128]{1,0:T(1,128)}', space=vmem, size = 0x12000, scoped, tag = 'internal scratch']
  #allocation2 [shape = 'f32[12,10,4]{2,1,0:T(8,128)}', space=vmem, size = 0x18000, scoped, tag = 'scratch operand']
  #allocation3 [shape = 'f32[10,10,8]{2,1,0:T(8,128)}', space=vmem, size = 0x14000, scoped, tag = 'scratch operand']
  #allocation4 [shape = 'f32[10,8,4]{2,1,0:T(8,128)}', space=vmem, size = 0xa000, scoped, tag = 'scratch operand']
  #allocation5 [shape = 'f32[12,8,4]{2,1,0:T(8,128)}', space=vmem, size = 0xc000, scoped, tag = 'scratch operand']
  %s0 = inlined_call_operand.vmem [shape: f32[2,2,2,8,8,4], index: 0, kind: input, shape index: {}]
  %s1 = inlined_call_operand.vmem [shape: f32[3,3,4,8], index: 1, kind: input, shape index: {}]
  %s2 = inlined_call_operand.vmem [shape: f32[1,8], index: 2, kind: input, shape index: {}]
  %s3 = inlined_call_operand.vmem [shape: f32[1,8], index: 3, kind: input, shape index: {}]
  %s4 = inlined_call_operand.vmem [shape: f32[3,3,8,8], index: 4, kind: input, shape index: {}]
  %s5 = inlined_call_operand.vmem [shape: f32[1,8], index: 5, kind: input, shape index: {}]
  %s6 = inlined_call_operand.vmem [shape: f32[1,8], index: 6, kind: input, shape index: {}]
  %s7 = inlined_call_operand.vmem [shape: f32[3,1,1,4], index: 7, kind: input, shape index: {}]
  %s8 = inlined_call_operand.vmem [shape: f32[1,1,4], index: 8, kind: input, shape index: {}]
  %s9 = inlined_call_operand.vmem [shape: f32[5,1,1,4], index: 9, kind: input, shape index: {}]
  %s10 = inlined_call_operand.vmem [shape: f32[1,1,4], index: 10, kind: input, shape index: {}]
  %s11 = inlined_call_operand.vmem [shape: f32[3,4,4], index: 11, kind: input, shape index: {}]
  %s12 = inlined_call_operand.vmem [shape: f32[1,4], index: 12, kind: input, shape index: {}]
  %s13 = inlined_call_operand.vmem [shape: f32[1,4], index: 13, kind: input, shape index: {}]
  %s14 = inlined_call_operand.vmem [shape: f32[5,4,4], index: 14, kind: input, shape index: {}]
  %s15 = inlined_call_operand.vmem [shape: f32[1,4], index: 15, kind: input, shape index: {}]
  %s16 = inlined_call_operand.vmem [shape: f32[1,4], index: 16, kind: input, shape index: {}]
  %s17 = inlined_call_operand.vmem [shape: f32[4,8], index: 17, kind: input, shape index: {}]
  %s18 = inlined_call_operand.vmem [shape: f32[1,8], index: 18, kind: input, shape index: {}]
  %s19 = inlined_call_operand.vmem [shape: f32[1,8], index: 19, kind: input, shape index: {}]
  %s20 = inlined_call_operand.vmem [shape: f32[8,8], index: 20, kind: input, shape index: {}]
  %s21 = inlined_call_operand.vmem [shape: f32[8,1], index: 21, kind: input, shape index: {}]
  %s22 = inlined_call_operand.vmem [shape: f32[8,1], index: 22, kind: input, shape index: {}]
  %s23 = inlined_call_operand.vmem [shape: f32[2,8,64], index: 23, kind: output, shape index: {}]
  %s24 = sld [smem:[#allocation0]]
  $region125: #{down_forward.1} parent=0
    _
  %s26 = ssub.s32 1, %s24
  %s27 = scalar_select 0, %s26, %s24
  loop: start=0, step=1, limit=4
  $region2: #{down_forward.1} parent=0 // loop_pre_header
    _
  $region3: #{down_forward.1} parent=0 // loop_header
    %s29 = sphi 0, %s33
    %p30 = scmp.ge.s32.totalorder %s29, 4
    %s39 = sphi 0, %s41
    %s42 = sphi 0, %s39
    %s43 = sphi 0, %s42
    %s59 = sphi 0, %s43
    %s63 = sphi 0, %s63
    %s65 = sphi 0, %s63
    %s66 = sphi 0, %s65
    %s80 = sphi 0, %s66
    %s84 = sphi 0, %s84
    %s86 = sphi 0, %s84
    %s87 = sphi 0, %s86
    %s101 = sphi 0, %s87
    %s105 = sphi 0, %s105
    %s107 = sphi 0, %s105
    %s108 = sphi 0, %s107
    %s122 = sphi 0, %s108
    %s126 = sphi 0, %s126
    %s128 = sphi 0, %s126
    %s129 = sphi 0, %s128
    %s143 = sphi 0, %s129
    %s147 = sphi 0, %s147
    %s149 = sphi 0, %s147
    %s150 = sphi 0, %s149
    %s164 = sphi 0, %s150
    %s168 = sphi 0, %s168
    %s170 = sphi 0, %s168
    %s171 = sphi 0, %s170
    %s185 = sphi 0, %s171
    %s189 = sphi 0, %s189
    %s191 = sphi 0, %s189
    %s192 = sphi 0, %s191
    %s206 = sphi 0, %s192
    %s210 = sphi 0, %s210
    %s212 = sphi 0, %s210
    %s213 = sphi 0, %s212
    %s227 = sphi 0, %s213
    %s231 = sphi 0, %s231
    %s233 = sphi 0, %s231
    %s234 = sphi 0, %s233
    %s248 = sphi 0, %s234
    %s252 = sphi 0, %s252
    %s254 = sphi 0, %s252
    %s255 = sphi 0, %s254
    %s269 = sphi 0, %s255
    %s273 = sphi 0, %s273
    %s275 = sphi 0, %s273
    %s276 = sphi 0, %s275
    %s290 = sphi 0, %s276
    %s294 = sphi 0, %s294
    %s296 = sphi 0, %s294
    %s297 = sphi 0, %s296
    %s311 = sphi 0, %s297
    %s315 = sphi 0, %s315
    %s317 = sphi 0, %s315
    %s318 = sphi 0, %s317
    %s332 = sphi 0, %s318
    %s336 = sphi 0, %s336
    %s338 = sphi 0, %s336
    %s339 = sphi 0, %s338
    %s353 = sphi 0, %s339
    %s357 = sphi 0, %s357
    %s359 = sphi 0, %s357
    %s360 = sphi 0, %s359
    %s374 = sphi 0, %s360
    %s378 = sphi 0, %s378
    %s380 = sphi 0, %s378
    %s381 = sphi 0, %s380
    %s395 = sphi 0, %s381
    %s399 = sphi 0, %s399
    %s401 = sphi 0, %s399
    %s402 = sphi 0, %s401
    %s416 = sphi 0, %s402
    %s420 = sphi 0, %s420
    %s422 = sphi 0, %s420
    %s423 = sphi 0, %s422
    %s437 = sphi 0, %s423
    %s441 = sphi 0, %s441
    %s443 = sphi 0, %s441
    %s444 = sphi 0, %s443
    %s458 = sphi 0, %s444
    %s462 = sphi 0, %s462
    %s464 = sphi 0, %s462
    %s465 = sphi 0, %s464
    %s479 = sphi 0, %s465
    %s483 = sphi 0, %s483
    %s485 = sphi 0, %s483
    %s486 = sphi 0, %s485
    %s500 = sphi 0, %s486
    %s504 = sphi 0, %s504
    %s506 = sphi 0, %s504
    %s507 = sphi 0, %s506
    %s521 = sphi 0, %s507
    %s527 = sphi 0, %s529
    %s530 = sphi 0, %s527
    %s531 = sphi 0, %s530
    %s547 = sphi 0, %s531
  $region4: #{down_forward.1} parent=0 // loop_header_branch
    %32 = sbr.rel (%p30) target = $region8
  $region5: #{down_forward.1} parent=0 // loop_body
    %s34 = ssub.s32 %s29, 1
    %s35 = ssub.s32 %s29, 2
    %s36 = sadd.s32 %s29, 1
    %s37 = ssub.s32 %s29, %s36
    %p38 = scmp.eq.s32.totalorder %s37, 0
    %s40 = sadd.s32 %s39, 1
    %s41 = scalar_select %p38, %s39, %s40
    %p44 = pneg %p38
    %p45 = scmp.eq.s32.totalorder %s29, 1
    %p46 = por %p44, %p45
    %p47 = scmp.ne.s32.totalorder %s39, %s42
    %p48 = scmp.eq.s32.totalorder %s29, 0
    %p49 = por %p47, %p48
    %p50 = scmp.ne.s32.totalorder %s39, %s42
    %p51 = scmp.eq.s32.totalorder %s34, 1
    %p52 = por %p50, %p51
    %p53 = scmp.ne.s32.totalorder %s42, %s43
    %p54 = scmp.eq.s32.totalorder %s34, 0
    %p55 = por %p53, %p54
    %p56 = scmp.ne.s32.totalorder %s42, %s43
    %p57 = scmp.eq.s32.totalorder %s35, 1
    %p58 = por %p56, %p57
    %p60 = scmp.ne.s32.totalorder %s43, %s59
    %p61 = scmp.eq.s32.totalorder %s35, 0
    %p62 = por %p60, %p61
    %s64 = sadd.s32 %s63, 1
    %p67 = scmp.eq.s32.totalorder %s29, 1
    %p68 = scmp.ne.s32.totalorder %s63, %s65
    %p69 = scmp.eq.s32.totalorder %s29, 0
    %p70 = por %p68, %p69
    %p71 = scmp.ne.s32.totalorder %s63, %s65
    %p72 = scmp.eq.s32.totalorder %s34, 1
    %p73 = por %p71, %p72
    %p74 = scmp.ne.s32.totalorder %s65, %s66
    %p75 = scmp.eq.s32.totalorder %s34, 0
    %p76 = por %p74, %p75
    %p77 = scmp.ne.s32.totalorder %s65, %s66
    %p78 = scmp.eq.s32.totalorder %s35, 1
    %p79 = por %p77, %p78
    %p81 = scmp.ne.s32.totalorder %s66, %s80
    %p82 = scmp.eq.s32.totalorder %s35, 0
    %p83 = por %p81, %p82
    %s85 = sadd.s32 %s84, 1
    %p88 = scmp.eq.s32.totalorder %s29, 1
    %p89 = scmp.ne.s32.totalorder %s84, %s86
    %p90 = scmp.eq.s32.totalorder %s29, 0
    %p91 = por %p89, %p90
    %p92 = scmp.ne.s32.totalorder %s84, %s86
    %p93 = scmp.eq.s32.totalorder %s34, 1
    %p94 = por %p92, %p93
    %p95 = scmp.ne.s32.totalorder %s86, %s87
    %p96 = scmp.eq.s32.totalorder %s34, 0
    %p97 = por %p95, %p96
    %p98 = scmp.ne.s32.totalorder %s86, %s87
    %p99 = scmp.eq.s32.totalorder %s35, 1
    %p100 = por %p98, %p99
    %p102 = scmp.ne.s32.totalorder %s87, %s101
    %p103 = scmp.eq.s32.totalorder %s35, 0
    %p104 = por %p102, %p103
    %s106 = sadd.s32 %s105, 1
    %p109 = scmp.eq.s32.totalorder %s29, 1
    %p110 = scmp.ne.s32.totalorder %s105, %s107
    %p111 = scmp.eq.s32.totalorder %s29, 0
    %p112 = por %p110, %p111
    %p113 = scmp.ne.s32.totalorder %s105, %s107
    %p114 = scmp.eq.s32.totalorder %s34, 1
    %p115 = por %p113, %p114
    %p116 = scmp.ne.s32.totalorder %s107, %s108
    %p117 = scmp.eq.s32.totalorder %s34, 0
    %p118 = por %p116, %p117
    %p119 = scmp.ne.s32.totalorder %s107, %s108
    %p120 = scmp.eq.s32.totalorder %s35, 1
    %p121 = por %p119, %p120
    %p123 = scmp.ne.s32.totalorder %s108, %s122
    %p124 = scmp.eq.s32.totalorder %s35, 0
    %p125 = por %p123, %p124
    %s127 = sadd.s32 %s126, 1
    %p130 = scmp.eq.s32.totalorder %s29, 1
    %p131 = scmp.ne.s32.totalorder %s126, %s128
    %p132 = scmp.eq.s32.totalorder %s29, 0
    %p133 = por %p131, %p132
    %p134 = scmp.ne.s32.totalorder %s126, %s128
    %p135 = scmp.eq.s32.totalorder %s34, 1
    %p136 = por %p134, %p135
    %p137 = scmp.ne.s32.totalorder %s128, %s129
    %p138 = scmp.eq.s32.totalorder %s34, 0
    %p139 = por %p137, %p138
    %p140 = scmp.ne.s32.totalorder %s128, %s129
    %p141 = scmp.eq.s32.totalorder %s35, 1
    %p142 = por %p140, %p141
    %p144 = scmp.ne.s32.totalorder %s129, %s143
    %p145 = scmp.eq.s32.totalorder %s35, 0
    %p146 = por %p144, %p145
    %s148 = sadd.s32 %s147, 1
    %p151 = scmp.eq.s32.totalorder %s29, 1
    %p152 = scmp.ne.s32.totalorder %s147, %s149
    %p153 = scmp.eq.s32.totalorder %s29, 0
    %p154 = por %p152, %p153
    %p155 = scmp.ne.s32.totalorder %s147, %s149
    %p156 = scmp.eq.s32.totalorder %s34, 1
    %p157 = por %p155, %p156
    %p158 = scmp.ne.s32.totalorder %s149, %s150
    %p159 = scmp.eq.s32.totalorder %s34, 0
    %p160 = por %p158, %p159
    %p161 = scmp.ne.s32.totalorder %s149, %s150
    %p162 = scmp.eq.s32.totalorder %s35, 1
    %p163 = por %p161, %p162
    %p165 = scmp.ne.s32.totalorder %s150, %s164
    %p166 = scmp.eq.s32.totalorder %s35, 0
    %p167 = por %p165, %p166
    %s169 = sadd.s32 %s168, 1
    %p172 = scmp.eq.s32.totalorder %s29, 1
    %p173 = scmp.ne.s32.totalorder %s168, %s170
    %p174 = scmp.eq.s32.totalorder %s29, 0
    %p175 = por %p173, %p174
    %p176 = scmp.ne.s32.totalorder %s168, %s170
    %p177 = scmp.eq.s32.totalorder %s34, 1
    %p178 = por %p176, %p177
    %p179 = scmp.ne.s32.totalorder %s170, %s171
    %p180 = scmp.eq.s32.totalorder %s34, 0
    %p181 = por %p179, %p180
    %p182 = scmp.ne.s32.totalorder %s170, %s171
    %p183 = scmp.eq.s32.totalorder %s35, 1
    %p184 = por %p182, %p183
    %p186 = scmp.ne.s32.totalorder %s171, %s185
    %p187 = scmp.eq.s32.totalorder %s35, 0
    %p188 = por %p186, %p187
    %s190 = sadd.s32 %s189, 1
    %p193 = scmp.eq.s32.totalorder %s29, 1
    %p194 = scmp.ne.s32.totalorder %s189, %s191
    %p195 = scmp.eq.s32.totalorder %s29, 0
    %p196 = por %p194, %p195
    %p197 = scmp.ne.s32.totalorder %s189, %s191
    %p198 = scmp.eq.s32.totalorder %s34, 1
    %p199 = por %p197, %p198
    %p200 = scmp.ne.s32.totalorder %s191, %s192
    %p201 = scmp.eq.s32.totalorder %s34, 0
    %p202 = por %p200, %p201
    %p203 = scmp.ne.s32.totalorder %s191, %s192
    %p204 = scmp.eq.s32.totalorder %s35, 1
    %p205 = por %p203, %p204
    %p207 = scmp.ne.s32.totalorder %s192, %s206
    %p208 = scmp.eq.s32.totalorder %s35, 0
    %p209 = por %p207, %p208
    %s211 = sadd.s32 %s210, 1
    %p214 = scmp.eq.s32.totalorder %s29, 1
    %p215 = scmp.ne.s32.totalorder %s210, %s212
    %p216 = scmp.eq.s32.totalorder %s29, 0
    %p217 = por %p215, %p216
    %p218 = scmp.ne.s32.totalorder %s210, %s212
    %p219 = scmp.eq.s32.totalorder %s34, 1
    %p220 = por %p218, %p219
    %p221 = scmp.ne.s32.totalorder %s212, %s213
    %p222 = scmp.eq.s32.totalorder %s34, 0
    %p223 = por %p221, %p222
    %p224 = scmp.ne.s32.totalorder %s212, %s213
    %p225 = scmp.eq.s32.totalorder %s35, 1
    %p226 = por %p224, %p225
    %p228 = scmp.ne.s32.totalorder %s213, %s227
    %p229 = scmp.eq.s32.totalorder %s35, 0
    %p230 = por %p228, %p229
    %s232 = sadd.s32 %s231, 1
    %p235 = scmp.eq.s32.totalorder %s29, 1
    %p236 = scmp.ne.s32.totalorder %s231, %s233
    %p237 = scmp.eq.s32.totalorder %s29, 0
    %p238 = por %p236, %p237
    %p239 = scmp.ne.s32.totalorder %s231, %s233
    %p240 = scmp.eq.s32.totalorder %s34, 1
    %p241 = por %p239, %p240
    %p242 = scmp.ne.s32.totalorder %s233, %s234
    %p243 = scmp.eq.s32.totalorder %s34, 0
    %p244 = por %p242, %p243
    %p245 = scmp.ne.s32.totalorder %s233, %s234
    %p246 = scmp.eq.s32.totalorder %s35, 1
    %p247 = por %p245, %p246
    %p249 = scmp.ne.s32.totalorder %s234, %s248
    %p250 = scmp.eq.s32.totalorder %s35, 0
    %p251 = por %p249, %p250
    %s253 = sadd.s32 %s252, 1
    %p256 = scmp.eq.s32.totalorder %s29, 1
    %p257 = scmp.ne.s32.totalorder %s252, %s254
    %p258 = scmp.eq.s32.totalorder %s29, 0
    %p259 = por %p257, %p258
    %p260 = scmp.ne.s32.totalorder %s252, %s254
    %p261 = scmp.eq.s32.totalorder %s34, 1
    %p262 = por %p260, %p261
    %p263 = scmp.ne.s32.totalorder %s254, %s255
    %p264 = scmp.eq.s32.totalorder %s34, 0
    %p265 = por %p263, %p264
    %p266 = scmp.ne.s32.totalorder %s254, %s255
    %p267 = scmp.eq.s32.totalorder %s35, 1
    %p268 = por %p266, %p267
    %p270 = scmp.ne.s32.totalorder %s255, %s269
    %p271 = scmp.eq.s32.totalorder %s35, 0
    %p272 = por %p270, %p271
    %s274 = sadd.s32 %s273, 1
    %p277 = scmp.eq.s32.totalorder %s29, 1
    %p278 = scmp.ne.s32.totalorder %s273, %s275
    %p279 = scmp.eq.s32.totalorder %s29, 0
    %p280 = por %p278, %p279
    %p281 = scmp.ne.s32.totalorder %s273, %s275
    %p282 = scmp.eq.s32.totalorder %s34, 1
    %p283 = por %p281, %p282
    %p284 = scmp.ne.s32.totalorder %s275, %s276
    %p285 = scmp.eq.s32.totalorder %s34, 0
    %p286 = por %p284, %p285
    %p287 = scmp.ne.s32.totalorder %s275, %s276
    %p288 = scmp.eq.s32.totalorder %s35, 1
    %p289 = por %p287, %p288
    %p291 = scmp.ne.s32.totalorder %s276, %s290
    %p292 = scmp.eq.s32.totalorder %s35, 0
    %p293 = por %p291, %p292
    %s295 = sadd.s32 %s294, 1
    %p298 = scmp.eq.s32.totalorder %s29, 1
    %p299 = scmp.ne.s32.totalorder %s294, %s296
    %p300 = scmp.eq.s32.totalorder %s29, 0
    %p301 = por %p299, %p300
    %p302 = scmp.ne.s32.totalorder %s294, %s296
    %p303 = scmp.eq.s32.totalorder %s34, 1
    %p304 = por %p302, %p303
    %p305 = scmp.ne.s32.totalorder %s296, %s297
    %p306 = scmp.eq.s32.totalorder %s34, 0
    %p307 = por %p305, %p306
    %p308 = scmp.ne.s32.totalorder %s296, %s297
    %p309 = scmp.eq.s32.totalorder %s35, 1
    %p310 = por %p308, %p309
    %p312 = scmp.ne.s32.totalorder %s297, %s311
    %p313 = scmp.eq.s32.totalorder %s35, 0
    %p314 = por %p312, %p313
    %s316 = sadd.s32 %s315, 1
    %p319 = scmp.eq.s32.totalorder %s29, 1
    %p320 = scmp.ne.s32.totalorder %s315, %s317
    %p321 = scmp.eq.s32.totalorder %s29, 0
    %p322 = por %p320, %p321
    %p323 = scmp.ne.s32.totalorder %s315, %s317
    %p324 = scmp.eq.s32.totalorder %s34, 1
    %p325 = por %p323, %p324
    %p326 = scmp.ne.s32.totalorder %s317, %s318
    %p327 = scmp.eq.s32.totalorder %s34, 0
    %p328 = por %p326, %p327
    %p329 = scmp.ne.s32.totalorder %s317, %s318
    %p330 = scmp.eq.s32.totalorder %s35, 1
    %p331 = por %p329, %p330
    %p333 = scmp.ne.s32.totalorder %s318, %s332
    %p334 = scmp.eq.s32.totalorder %s35, 0
    %p335 = por %p333, %p334
    %s337 = sadd.s32 %s336, 1
    %p340 = scmp.eq.s32.totalorder %s29, 1
    %p341 = scmp.ne.s32.totalorder %s336, %s338
    %p342 = scmp.eq.s32.totalorder %s29, 0
    %p343 = por %p341, %p342
    %p344 = scmp.ne.s32.totalorder %s336, %s338
    %p345 = scmp.eq.s32.totalorder %s34, 1
    %p346 = por %p344, %p345
    %p347 = scmp.ne.s32.totalorder %s338, %s339
    %p348 = scmp.eq.s32.totalorder %s34, 0
    %p349 = por %p347, %p348
    %p350 = scmp.ne.s32.totalorder %s338, %s339
    %p351 = scmp.eq.s32.totalorder %s35, 1
    %p352 = por %p350, %p351
    %p354 = scmp.ne.s32.totalorder %s339, %s353
    %p355 = scmp.eq.s32.totalorder %s35, 0
    %p356 = por %p354, %p355
    %s358 = sadd.s32 %s357, 1
    %p361 = scmp.eq.s32.totalorder %s29, 1
    %p362 = scmp.ne.s32.totalorder %s357, %s359
    %p363 = scmp.eq.s32.totalorder %s29, 0
    %p364 = por %p362, %p363
    %p365 = scmp.ne.s32.totalorder %s357, %s359
    %p366 = scmp.eq.s32.totalorder %s34, 1
    %p367 = por %p365, %p366
    %p368 = scmp.ne.s32.totalorder %s359, %s360
    %p369 = scmp.eq.s32.totalorder %s34, 0
    %p370 = por %p368, %p369
    %p371 = scmp.ne.s32.totalorder %s359, %s360
    %p372 = scmp.eq.s32.totalorder %s35, 1
    %p373 = por %p371, %p372
    %p375 = scmp.ne.s32.totalorder %s360, %s374
    %p376 = scmp.eq.s32.totalorder %s35, 0
    %p377 = por %p375, %p376
    %s379 = sadd.s32 %s378, 1
    %p382 = scmp.eq.s32.totalorder %s29, 1
    %p383 = scmp.ne.s32.totalorder %s378, %s380
    %p384 = scmp.eq.s32.totalorder %s29, 0
    %p385 = por %p383, %p384
    %p386 = scmp.ne.s32.totalorder %s378, %s380
    %p387 = scmp.eq.s32.totalorder %s34, 1
    %p388 = por %p386, %p387
    %p389 = scmp.ne.s32.totalorder %s380, %s381
    %p390 = scmp.eq.s32.totalorder %s34, 0
    %p391 = por %p389, %p390
    %p392 = scmp.ne.s32.totalorder %s380, %s381
    %p393 = scmp.eq.s32.totalorder %s35, 1
    %p394 = por %p392, %p393
    %p396 = scmp.ne.s32.totalorder %s381, %s395
    %p397 = scmp.eq.s32.totalorder %s35, 0
    %p398 = por %p396, %p397
    %s400 = sadd.s32 %s399, 1
    %p403 = scmp.eq.s32.totalorder %s29, 1
    %p404 = scmp.ne.s32.totalorder %s399, %s401
    %p405 = scmp.eq.s32.totalorder %s29, 0
    %p406 = por %p404, %p405
    %p407 = scmp.ne.s32.totalorder %s399, %s401
    %p408 = scmp.eq.s32.totalorder %s34, 1
    %p409 = por %p407, %p408
    %p410 = scmp.ne.s32.totalorder %s401, %s402
    %p411 = scmp.eq.s32.totalorder %s34, 0
    %p412 = por %p410, %p411
    %p413 = scmp.ne.s32.totalorder %s401, %s402
    %p414 = scmp.eq.s32.totalorder %s35, 1
    %p415 = por %p413, %p414
    %p417 = scmp.ne.s32.totalorder %s402, %s416
    %p418 = scmp.eq.s32.totalorder %s35, 0
    %p419 = por %p417, %p418
    %s421 = sadd.s32 %s420, 1
    %p424 = scmp.eq.s32.totalorder %s29, 1
    %p425 = scmp.ne.s32.totalorder %s420, %s422
    %p426 = scmp.eq.s32.totalorder %s29, 0
    %p427 = por %p425, %p426
    %p428 = scmp.ne.s32.totalorder %s420, %s422
    %p429 = scmp.eq.s32.totalorder %s34, 1
    %p430 = por %p428, %p429
    %p431 = scmp.ne.s32.totalorder %s422, %s423
    %p432 = scmp.eq.s32.totalorder %s34, 0
    %p433 = por %p431, %p432
    %p434 = scmp.ne.s32.totalorder %s422, %s423
    %p435 = scmp.eq.s32.totalorder %s35, 1
    %p436 = por %p434, %p435
    %p438 = scmp.ne.s32.totalorder %s423, %s437
    %p439 = scmp.eq.s32.totalorder %s35, 0
    %p440 = por %p438, %p439
    %s442 = sadd.s32 %s441, 1
    %p445 = scmp.eq.s32.totalorder %s29, 1
    %p446 = scmp.ne.s32.totalorder %s441, %s443
    %p447 = scmp.eq.s32.totalorder %s29, 0
    %p448 = por %p446, %p447
    %p449 = scmp.ne.s32.totalorder %s441, %s443
    %p450 = scmp.eq.s32.totalorder %s34, 1
    %p451 = por %p449, %p450
    %p452 = scmp.ne.s32.totalorder %s443, %s444
    %p453 = scmp.eq.s32.totalorder %s34, 0
    %p454 = por %p452, %p453
    %p455 = scmp.ne.s32.totalorder %s443, %s444
    %p456 = scmp.eq.s32.totalorder %s35, 1
    %p457 = por %p455, %p456
    %p459 = scmp.ne.s32.totalorder %s444, %s458
    %p460 = scmp.eq.s32.totalorder %s35, 0
    %p461 = por %p459, %p460
    %s463 = sadd.s32 %s462, 1
    %p466 = scmp.eq.s32.totalorder %s29, 1
    %p467 = scmp.ne.s32.totalorder %s462, %s464
    %p468 = scmp.eq.s32.totalorder %s29, 0
    %p469 = por %p467, %p468
    %p470 = scmp.ne.s32.totalorder %s462, %s464
    %p471 = scmp.eq.s32.totalorder %s34, 1
    %p472 = por %p470, %p471
    %p473 = scmp.ne.s32.totalorder %s464, %s465
    %p474 = scmp.eq.s32.totalorder %s34, 0
    %p475 = por %p473, %p474
    %p476 = scmp.ne.s32.totalorder %s464, %s465
    %p477 = scmp.eq.s32.totalorder %s35, 1
    %p478 = por %p476, %p477
    %p480 = scmp.ne.s32.totalorder %s465, %s479
    %p481 = scmp.eq.s32.totalorder %s35, 0
    %p482 = por %p480, %p481
    %s484 = sadd.s32 %s483, 1
    %p487 = scmp.eq.s32.totalorder %s29, 1
    %p488 = scmp.ne.s32.totalorder %s483, %s485
    %p489 = scmp.eq.s32.totalorder %s29, 0
    %p490 = por %p488, %p489
    %p491 = scmp.ne.s32.totalorder %s483, %s485
    %p492 = scmp.eq.s32.totalorder %s34, 1
    %p493 = por %p491, %p492
    %p494 = scmp.ne.s32.totalorder %s485, %s486
    %p495 = scmp.eq.s32.totalorder %s34, 0
    %p496 = por %p494, %p495
    %p497 = scmp.ne.s32.totalorder %s485, %s486
    %p498 = scmp.eq.s32.totalorder %s35, 1
    %p499 = por %p497, %p498
    %p501 = scmp.ne.s32.totalorder %s486, %s500
    %p502 = scmp.eq.s32.totalorder %s35, 0
    %p503 = por %p501, %p502
    %s505 = sadd.s32 %s504, 1
    %p508 = scmp.eq.s32.totalorder %s29, 1
    %p509 = scmp.ne.s32.totalorder %s504, %s506
    %p510 = scmp.eq.s32.totalorder %s29, 0
    %p511 = por %p509, %p510
    %p512 = scmp.ne.s32.totalorder %s504, %s506
    %p513 = scmp.eq.s32.totalorder %s34, 1
    %p514 = por %p512, %p513
    %p515 = scmp.ne.s32.totalorder %s506, %s507
    %p516 = scmp.eq.s32.totalorder %s34, 0
    %p517 = por %p515, %p516
    %p518 = scmp.ne.s32.totalorder %s506, %s507
    %p519 = scmp.eq.s32.totalorder %s35, 1
    %p520 = por %p518, %p519
    %p522 = scmp.ne.s32.totalorder %s507, %s521
    %p523 = scmp.eq.s32.totalorder %s35, 0
    %p524 = por %p522, %p523
    %s525 = ssub.s32 %s29, %s36
    %p526 = scmp.eq.s32.totalorder %s525, 0
    %s528 = sadd.s32 %s527, 1
    %s529 = scalar_select %p526, %s527, %s528
    %p532 = pneg %p526
    %p533 = scmp.eq.s32.totalorder %s29, 1
    %p534 = por %p532, %p533
    %p535 = scmp.ne.s32.totalorder %s527, %s530
    %p536 = scmp.eq.s32.totalorder %s29, 0
    %p537 = por %p535, %p536
    %p538 = scmp.ne.s32.totalorder %s527, %s530
    %p539 = scmp.eq.s32.totalorder %s34, 1
    %p540 = por %p538, %p539
    %p541 = scmp.ne.s32.totalorder %s530, %s531
    %p542 = scmp.eq.s32.totalorder %s34, 0
    %p543 = por %p541, %p542
    %p544 = scmp.ne.s32.totalorder %s530, %s531
    %p545 = scmp.eq.s32.totalorder %s35, 1
    %p546 = por %p544, %p545
    %p548 = scmp.ne.s32.totalorder %s531, %s547
    %p549 = scmp.eq.s32.totalorder %s35, 0
    %p550 = por %p548, %p549
    %p551 = scmp.le.s32.totalorder 1, %s29
    %p552 = scmp.lt.s32.totalorder %s29, 3
    %p553 = pnand %p551, %p552
    %p554 = pneg %p553
    // Predicated region
    $region9: #{down_forward.1} parent=5 // pred_check
      _
    $region10: #{down_forward.1} parent=5 // pred_check_branch
      %556 = sbr.rel (%p553) target = $region12
    $region11: #{down_forward.1} parent=5 // pred_region
      %s557 = ssub.s32 %s29, 1
      // Predicated region
      $region13: #{down_forward.1} parent=11 // pred_check
        %p558 = pneg %p76
      $region14: #{down_forward.1} parent=11 // pred_check_branch
        %560 = sbr.rel (%p558) target = $region16
      $region15: #{down_forward.1} parent=11 // pred_region
        _
      $region16: #{down_forward.1} parent=11 // pred_fallthru
        _
      // Predicated region
      $region17: #{down_forward.1} parent=11 // pred_check
        %p561 = pneg %p97
      $region18: #{down_forward.1} parent=11 // pred_check_branch
        %563 = sbr.rel (%p561) target = $region20
      $region19: #{down_forward.1} parent=11 // pred_region
        _
      $region20: #{down_forward.1} parent=11 // pred_fallthru
        _
      // Predicated region
      $region21: #{down_forward.1} parent=11 // pred_check
        %p564 = pneg %p118
      $region22: #{down_forward.1} parent=11 // pred_check_branch
        %566 = sbr.rel (%p564) target = $region24
      $region23: #{down_forward.1} parent=11 // pred_region
        _
      $region24: #{down_forward.1} parent=11 // pred_fallthru
        _
      // Predicated region
      $region25: #{down_forward.1} parent=11 // pred_check
        %p567 = pneg %p139
      $region26: #{down_forward.1} parent=11 // pred_check_branch
        %569 = sbr.rel (%p567) target = $region28
      $region27: #{down_forward.1} parent=11 // pred_region
        _
      $region28: #{down_forward.1} parent=11 // pred_fallthru
        _
      // Predicated region
      $region29: #{down_forward.1} parent=11 // pred_check
        %p570 = pneg %p160
      $region30: #{down_forward.1} parent=11 // pred_check_branch
        %572 = sbr.rel (%p570) target = $region32
      $region31: #{down_forward.1} parent=11 // pred_region
        _
      $region32: #{down_forward.1} parent=11 // pred_fallthru
        _
      // Predicated region
      $region33: #{down_forward.1} parent=11 // pred_check
        %p573 = pneg %p181
      $region34: #{down_forward.1} parent=11 // pred_check_branch
        %575 = sbr.rel (%p573) target = $region36
      $region35: #{down_forward.1} parent=11 // pred_region
        _
      $region36: #{down_forward.1} parent=11 // pred_fallthru
        _
      // Predicated region
      $region37: #{down_forward.1} parent=11 // pred_check
        %p576 = pneg %p202
      $region38: #{down_forward.1} parent=11 // pred_check_branch
        %578 = sbr.rel (%p576) target = $region40
      $region39: #{down_forward.1} parent=11 // pred_region
        _
      $region40: #{down_forward.1} parent=11 // pred_fallthru
        _
      // Predicated region
      $region41: #{down_forward.1} parent=11 // pred_check
        %p579 = pneg %p223
      $region42: #{down_forward.1} parent=11 // pred_check_branch
        %581 = sbr.rel (%p579) target = $region44
      $region43: #{down_forward.1} parent=11 // pred_region
        _
      $region44: #{down_forward.1} parent=11 // pred_fallthru
        _
      // Predicated region
      $region45: #{down_forward.1} parent=11 // pred_check
        %p582 = pneg %p244
      $region46: #{down_forward.1} parent=11 // pred_check_branch
        %584 = sbr.rel (%p582) target = $region48
      $region47: #{down_forward.1} parent=11 // pred_region
        _
      $region48: #{down_forward.1} parent=11 // pred_fallthru
        _
      // Predicated region
      $region49: #{down_forward.1} parent=11 // pred_check
        %p585 = pneg %p265
      $region50: #{down_forward.1} parent=11 // pred_check_branch
        %587 = sbr.rel (%p585) target = $region52
      $region51: #{down_forward.1} parent=11 // pred_region
        _
      $region52: #{down_forward.1} parent=11 // pred_fallthru
        _
      // Predicated region
      $region53: #{down_forward.1} parent=11 // pred_check
        %p588 = pneg %p286
      $region54: #{down_forward.1} parent=11 // pred_check_branch
        %590 = sbr.rel (%p588) target = $region56
      $region55: #{down_forward.1} parent=11 // pred_region
        _
      $region56: #{down_forward.1} parent=11 // pred_fallthru
        _
      // Predicated region
      $region57: #{down_forward.1} parent=11 // pred_check
        %p591 = pneg %p307
      $region58: #{down_forward.1} parent=11 // pred_check_branch
        %593 = sbr.rel (%p591) target = $region60
      $region59: #{down_forward.1} parent=11 // pred_region
        _
      $region60: #{down_forward.1} parent=11 // pred_fallthru
        _
      // Predicated region
      $region61: #{down_forward.1} parent=11 // pred_check
        %p594 = pneg %p328
      $region62: #{down_forward.1} parent=11 // pred_check_branch
        %596 = sbr.rel (%p594) target = $region64
      $region63: #{down_forward.1} parent=11 // pred_region
        _
      $region64: #{down_forward.1} parent=11 // pred_fallthru
        _
      // Predicated region
      $region65: #{down_forward.1} parent=11 // pred_check
        %p597 = pneg %p349
      $region66: #{down_forward.1} parent=11 // pred_check_branch
        %599 = sbr.rel (%p597) target = $region68
      $region67: #{down_forward.1} parent=11 // pred_region
        _
      $region68: #{down_forward.1} parent=11 // pred_fallthru
        _
      // Predicated region
      $region69: #{down_forward.1} parent=11 // pred_check
        %p600 = pneg %p370
      $region70: #{down_forward.1} parent=11 // pred_check_branch
        %602 = sbr.rel (%p600) target = $region72
      $region71: #{down_forward.1} parent=11 // pred_region
        _
      $region72: #{down_forward.1} parent=11 // pred_fallthru
        _
      // Predicated region
      $region73: #{down_forward.1} parent=11 // pred_check
        %p603 = pneg %p391
      $region74: #{down_forward.1} parent=11 // pred_check_branch
        %605 = sbr.rel (%p603) target = $region76
      $region75: #{down_forward.1} parent=11 // pred_region
        _
      $region76: #{down_forward.1} parent=11 // pred_fallthru
        _
      // Predicated region
      $region77: #{down_forward.1} parent=11 // pred_check
        %p606 = pneg %p412
      $region78: #{down_forward.1} parent=11 // pred_check_branch
        %608 = sbr.rel (%p606) target = $region80
      $region79: #{down_forward.1} parent=11 // pred_region
        _
      $region80: #{down_forward.1} parent=11 // pred_fallthru
        _
      // Predicated region
      $region81: #{down_forward.1} parent=11 // pred_check
        %p609 = pneg %p433
      $region82: #{down_forward.1} parent=11 // pred_check_branch
        %611 = sbr.rel (%p609) target = $region84
      $region83: #{down_forward.1} parent=11 // pred_region
        _
      $region84: #{down_forward.1} parent=11 // pred_fallthru
        _
      // Predicated region
      $region85: #{down_forward.1} parent=11 // pred_check
        %p612 = pneg %p454
      $region86: #{down_forward.1} parent=11 // pred_check_branch
        %614 = sbr.rel (%p612) target = $region88
      $region87: #{down_forward.1} parent=11 // pred_region
        _
      $region88: #{down_forward.1} parent=11 // pred_fallthru
        _
      // Predicated region
      $region89: #{down_forward.1} parent=11 // pred_check
        %p615 = pneg %p475
      $region90: #{down_forward.1} parent=11 // pred_check_branch
        %617 = sbr.rel (%p615) target = $region92
      $region91: #{down_forward.1} parent=11 // pred_region
        _
      $region92: #{down_forward.1} parent=11 // pred_fallthru
        _
      // Predicated region
      $region93: #{down_forward.1} parent=11 // pred_check
        %p618 = pneg %p496
      $region94: #{down_forward.1} parent=11 // pred_check_branch
        %620 = sbr.rel (%p618) target = $region96
      $region95: #{down_forward.1} parent=11 // pred_region
        _
      $region96: #{down_forward.1} parent=11 // pred_fallthru
        _
      // Predicated region
      $region97: #{down_forward.1} parent=11 // pred_check
        %p621 = pneg %p517
      $region98: #{down_forward.1} parent=11 // pred_check_branch
        %623 = sbr.rel (%p621) target = $region100
      $region99: #{down_forward.1} parent=11 // pred_region
        _
      $region100: #{down_forward.1} parent=11 // pred_fallthru
        _
    $region12: #{down_forward.1} parent=5 // pred_fallthru
      _
    %p624 = scmp.lt.s32.totalorder %s29, 2
    // Predicated region
    $region101: #{down_forward.1} parent=5 // pred_check
      %p625 = pneg %p624
    $region102: #{down_forward.1} parent=5 // pred_check_branch
      %627 = sbr.rel (%p625) target = $region104
    $region103: #{down_forward.1} parent=5 // pred_region
      // Predicated region
      $region105: #{down_forward.1} parent=103 // pred_check
        %p628 = pneg %p49
      $region106: #{down_forward.1} parent=103 // pred_check_branch
        %630 = sbr.rel (%p628) target = $region108
      $region107: #{down_forward.1} parent=103 // pred_region
        %p631 = scmp.lt.s32.totalorder %s29, 1
        %s632 = scalar_select %p631, %s29, 1
        %s633 = smul.addr %s632, 32
        %s634 = smul.addr %s633, 8
        %s635 = scalar_lea.vmem %s0, %s634
      $region108: #{down_forward.1} parent=103 // pred_fallthru
        _
    $region104: #{down_forward.1} parent=5 // pred_fallthru
      _
    %p636 = scmp.le.s32.totalorder 1, %s29
    %p637 = scmp.lt.s32.totalorder %s29, 3
    %p638 = pnand %p636, %p637
    %p639 = pneg %p638
    // Predicated region
    $region109: #{down_forward.1} parent=5 // pred_check
      _
    $region110: #{down_forward.1} parent=5 // pred_check_branch
      %641 = sbr.rel (%p638) target = $region112
    $region111: #{down_forward.1} parent=5 // pred_region
      %s642 = ssub.s32 %s29, 1
      %p643 = scmp.lt.s32.totalorder %s34, 1
      %s644 = scalar_select %p643, %s34, 1
      %s645 = smul.addr %s644, 32
      %s646 = smul.addr %s645, 8
      %s647 = scalar_lea.vmem %s0, %s646
      %p648 = pneg %p55
      %p649 = pneg %p52
      %p650 = pneg %p76
      %p651 = pneg %p73
      %p652 = pneg %p97
      %p653 = pneg %p94
      %p654 = pneg %p118
      %p655 = pneg %p115
      %p656 = pneg %p139
      %p657 = pneg %p136
      %p658 = pneg %p160
      %p659 = pneg %p157
      %p660 = pneg %p181
      %p661 = pneg %p178
      %p662 = pneg %p202
      %p663 = pneg %p199
      %p664 = pneg %p223
      %p665 = pneg %p220
      %p666 = pneg %p244
      %p667 = pneg %p241
      %p668 = pneg %p265
      %p669 = pneg %p262
      %p670 = pneg %p286
      %p671 = pneg %p283
      %p672 = pneg %p307
      %p673 = pneg %p304
      %p674 = pneg %p328
      %p675 = pneg %p325
      %p676 = pneg %p349
      %p677 = pneg %p346
      %p678 = pneg %p370
      %p679 = pneg %p367
      %p680 = pneg %p391
      %p681 = pneg %p388
      %p682 = pneg %p412
      %p683 = pneg %p409
      %p684 = pneg %p433
      %p685 = pneg %p430
      %p686 = pneg %p454
      %p687 = pneg %p451
      %p688 = pneg %p475
      %p689 = pneg %p472
      %p690 = pneg %p496
      %p691 = pneg %p493
      %p692 = pneg %p517
      %p693 = pneg %p514
      %p694 = pneg %p543
      %p695 = pneg %p540
      %p696 = scmp.lt.s32.totalorder %s34, 1
      %s697 = scalar_select %p696, %s34, 1
      %s698 = smul.addr %s697, 8
      %s699 = scalar_lea.vmem %s23, %s698
      %p700 = scmp.lt.s32.totalorder %s34, 1
      %s701 = scalar_select %p700, %s34, 1
      %s702 = smul.addr %s701, 32
      %s703 = smul.addr %s702, 8
      %s704 = scalar_lea.vmem %s0, %s703
      %p705 = scmp.lt.s32.totalorder %s34, 1
      %s706 = scalar_select %p705, %s34, 1
      %s707 = smul.addr %s706, 8
      %s708 = scalar_lea.vmem %s23, %s707
      %vm709 = vcmask 31744
      %710 = vst.msk [vmem:[#allocation2] sm:$0xff] %vm709, 0.0
      %vm711 = vcmask 25600
      %712 = vst.msk [vmem:[#allocation2 + $0x8] sm:$0x3] %vm711, 0.0
      %713 = vst.msk [vmem:[#allocation2 + $0x10] sm:$0xff] %vm709, 0.0
      %714 = vst.msk [vmem:[#allocation2 + $0x18] sm:$0x3] %vm711, 0.0
      %715 = vst.msk [vmem:[#allocation2 + $0x20] sm:$0xff] %vm709, 0.0
      %716 = vst.msk [vmem:[#allocation2 + $0x28] sm:$0x3] %vm711, 0.0
      %717 = vst.msk [vmem:[#allocation2 + $0x30] sm:$0xff] %vm709, 0.0
      %718 = vst.msk [vmem:[#allocation2 + $0x38] sm:$0x3] %vm711, 0.0
      %719 = vst.msk [vmem:[#allocation2 + $0x40] sm:$0xff] %vm709, 0.0
      %720 = vst.msk [vmem:[#allocation2 + $0x48] sm:$0x3] %vm711, 0.0
      %721 = vst.msk [vmem:[#allocation2 + $0x50] sm:$0xff] %vm709, 0.0
      %722 = vst.msk [vmem:[#allocation2 + $0x58] sm:$0x3] %vm711, 0.0
      %723 = vst.msk [vmem:[#allocation2 + $0x60] sm:$0xff] %vm709, 0.0
      %724 = vst.msk [vmem:[#allocation2 + $0x68] sm:$0x3] %vm711, 0.0
      %725 = vst.msk [vmem:[#allocation2 + $0x70] sm:$0xff] %vm709, 0.0
      %726 = vst.msk [vmem:[#allocation2 + $0x78] sm:$0x3] %vm711, 0.0
      %727 = vst.msk [vmem:[#allocation2 + $0x80] sm:$0xff] %vm709, 0.0
      %728 = vst.msk [vmem:[#allocation2 + $0x88] sm:$0x3] %vm711, 0.0
      %729 = vst.msk [vmem:[#allocation2 + $0x90] sm:$0xff] %vm709, 0.0
      %730 = vst.msk [vmem:[#allocation2 + $0x98] sm:$0x3] %vm711, 0.0
      %731 = vst.msk [vmem:[#allocation2 + $0xa0] sm:$0xff] %vm709, 0.0
      %732 = vst.msk [vmem:[#allocation2 + $0xa8] sm:$0x3] %vm711, 0.0
      %733 = vst.msk [vmem:[#allocation2 + $0xb0] sm:$0xff] %vm709, 0.0
      %734 = vst.msk [vmem:[#allocation2 + $0xb8] sm:$0x3] %vm711, 0.0
      %vm735 = vcmask 64512
      %736 = vst.msk [vmem:[#allocation3] sm:$0xff] %vm735, 0.0
      %vm737 = vcmask 58368
      %738 = vst.msk [vmem:[#allocation3 + $0x8] sm:$0x3] %vm737, 0.0
      %739 = vst.msk [vmem:[#allocation3 + $0x10] sm:$0xff] %vm735, 0.0
      %740 = vst.msk [vmem:[#allocation3 + $0x18] sm:$0x3] %vm737, 0.0
      %741 = vst.msk [vmem:[#allocation3 + $0x20] sm:$0xff] %vm735, 0.0
      %742 = vst.msk [vmem:[#allocation3 + $0x28] sm:$0x3] %vm737, 0.0
      %743 = vst.msk [vmem:[#allocation3 + $0x30] sm:$0xff] %vm735, 0.0
      %744 = vst.msk [vmem:[#allocation3 + $0x38] sm:$0x3] %vm737, 0.0
      %745 = vst.msk [vmem:[#allocation3 + $0x40] sm:$0xff] %vm735, 0.0
      %746 = vst.msk [vmem:[#allocation3 + $0x48] sm:$0x3] %vm737, 0.0
      %747 = vst.msk [vmem:[#allocation3 + $0x50] sm:$0xff] %vm735, 0.0
      %748 = vst.msk [vmem:[#allocation3 + $0x58] sm:$0x3] %vm737, 0.0
      %749 = vst.msk [vmem:[#allocation3 + $0x60] sm:$0xff] %vm735, 0.0
      %750 = vst.msk [vmem:[#allocation3 + $0x68] sm:$0x3] %vm737, 0.0
      %751 = vst.msk [vmem:[#allocation3 + $0x70] sm:$0xff] %vm735, 0.0
      %752 = vst.msk [vmem:[#allocation3 + $0x78] sm:$0x3] %vm737, 0.0
      %753 = vst.msk [vmem:[#allocation3 + $0x80] sm:$0xff] %vm735, 0.0
      %754 = vst.msk [vmem:[#allocation3 + $0x88] sm:$0x3] %vm737, 0.0
      %755 = vst.msk [vmem:[#allocation3 + $0x90] sm:$0xff] %vm735, 0.0
      %756 = vst.msk [vmem:[#allocation3 + $0x98] sm:$0x3] %vm737, 0.0
      %757 = vst.msk [vmem:[#allocation4] sm:$0xff] %vm709, 0.0
      %758 = vst.msk [vmem:[#allocation4 + $0x8] sm:$0xff] %vm709, 0.0
      %759 = vst.msk [vmem:[#allocation4 + $0x10] sm:$0xff] %vm709, 0.0
      %760 = vst.msk [vmem:[#allocation4 + $0x18] sm:$0xff] %vm709, 0.0
      %761 = vst.msk [vmem:[#allocation4 + $0x20] sm:$0xff] %vm709, 0.0
      %762 = vst.msk [vmem:[#allocation4 + $0x28] sm:$0xff] %vm709, 0.0
      %763 = vst.msk [vmem:[#allocation4 + $0x30] sm:$0xff] %vm709, 0.0
      %764 = vst.msk [vmem:[#allocation4 + $0x38] sm:$0xff] %vm709, 0.0
      %765 = vst.msk [vmem:[#allocation4 + $0x40] sm:$0xff] %vm709, 0.0
      %766 = vst.msk [vmem:[#allocation4 + $0x48] sm:$0xff] %vm709, 0.0
      %767 = vst.msk [vmem:[#allocation5] sm:$0xff] %vm709, 0.0
      %768 = vst.msk [vmem:[#allocation5 + $0x8] sm:$0xff] %vm709, 0.0
      %769 = vst.msk [vmem:[#allocation5 + $0x10] sm:$0xff] %vm709, 0.0
      %770 = vst.msk [vmem:[#allocation5 + $0x18] sm:$0xff] %vm709, 0.0
      %771 = vst.msk [vmem:[#allocation5 + $0x20] sm:$0xff] %vm709, 0.0
      %772 = vst.msk [vmem:[#allocation5 + $0x28] sm:$0xff] %vm709, 0.0
      %773 = vst.msk [vmem:[#allocation5 + $0x30] sm:$0xff] %vm709, 0.0
      %774 = vst.msk [vmem:[#allocation5 + $0x38] sm:$0xff] %vm709, 0.0
      %775 = vst.msk [vmem:[#allocation5 + $0x40] sm:$0xff] %vm709, 0.0
      %776 = vst.msk [vmem:[#allocation5 + $0x48] sm:$0xff] %vm709, 0.0
      %777 = vst.msk [vmem:[#allocation5 + $0x50] sm:$0xff] %vm709, 0.0
      %778 = vst.msk [vmem:[#allocation5 + $0x58] sm:$0xff] %vm709, 0.0
      %v779 = vld [vmem:[%s704] sm:$0xff]
      %v780 = vld [vmem:[%s704 + $0x8] sm:$0xff]
      %v781 = vld [vmem:[%s704 + $0x10] sm:$0xff]
      %v782 = vld [vmem:[%s704 + $0x18] sm:$0xff]
      %v783 = vld [vmem:[%s704 + $0x20] sm:$0xff]
      %v784 = vld [vmem:[%s704 + $0x28] sm:$0xff]
      %v785 = vld [vmem:[%s704 + $0x30] sm:$0xff]
      %v786 = vld [vmem:[%s704 + $0x38] sm:$0xff]
      %s787 = scalar_lea.vmem %s704, 64
      %v788 = vld [vmem:[%s787] sm:$0xff]
      %v789 = vld [vmem:[%s787 + $0x8] sm:$0xff]
      %v790 = vld [vmem:[%s787 + $0x10] sm:$0xff]
      %v791 = vld [vmem:[%s787 + $0x18] sm:$0xff]
      %v792 = vld [vmem:[%s787 + $0x20] sm:$0xff]
      %v793 = vld [vmem:[%s787 + $0x28] sm:$0xff]
      %v794 = vld [vmem:[%s787 + $0x30] sm:$0xff]
      %v795 = vld [vmem:[%s787 + $0x38] sm:$0xff]
      %v796 = vmax.f32 %v779, %v788
      %v797 = vmax.f32 %v780, %v789
      %v798 = vmax.f32 %v781, %v790
      %v799 = vmax.f32 %v782, %v791
      %v800 = vmax.f32 %v783, %v792
      %v801 = vmax.f32 %v784, %v793
      %v802 = vmax.f32 %v785, %v794
      %v803 = vmax.f32 %v786, %v795
      %s804 = scalar_lea.vmem %s704, 128
      %v805 = vld [vmem:[%s804] sm:$0xff]
      %v806 = vld [vmem:[%s804 + $0x8] sm:$0xff]
      %v807 = vld [vmem:[%s804 + $0x10] sm:$0xff]
      %v808 = vld [vmem:[%s804 + $0x18] sm:$0xff]
      %v809 = vld [vmem:[%s804 + $0x20] sm:$0xff]
      %v810 = vld [vmem:[%s804 + $0x28] sm:$0xff]
      %v811 = vld [vmem:[%s804 + $0x30] sm:$0xff]
      %v812 = vld [vmem:[%s804 + $0x38] sm:$0xff]
      %s813 = scalar_lea.vmem %s704, 192
      %v814 = vld [vmem:[%s813] sm:$0xff]
      %v815 = vld [vmem:[%s813 + $0x8] sm:$0xff]
      %v816 = vld [vmem:[%s813 + $0x10] sm:$0xff]
      %v817 = vld [vmem:[%s813 + $0x18] sm:$0xff]
      %v818 = vld [vmem:[%s813 + $0x20] sm:$0xff]
      %v819 = vld [vmem:[%s813 + $0x28] sm:$0xff]
      %v820 = vld [vmem:[%s813 + $0x30] sm:$0xff]
      %v821 = vld [vmem:[%s813 + $0x38] sm:$0xff]
      %v822 = vmax.f32 %v805, %v814
      %v823 = vmax.f32 %v806, %v815
      %v824 = vmax.f32 %v807, %v816
      %v825 = vmax.f32 %v808, %v817
      %v826 = vmax.f32 %v809, %v818
      %v827 = vmax.f32 %v810, %v819
      %v828 = vmax.f32 %v811, %v820
      %v829 = vmax.f32 %v812, %v821
      %v830 = vmax.f32 %v796, %v822
      %v831 = vmax.f32 %v797, %v823
      %v832 = vmax.f32 %v798, %v824
      %v833 = vmax.f32 %v799, %v825
      %v834 = vmax.f32 %v800, %v826
      %v835 = vmax.f32 %v801, %v827
      %v836 = vmax.f32 %v802, %v828
      %v837 = vmax.f32 %v803, %v829
      %s838 = scalar_lea.vmem [#allocation2], 32
      %839 = vst.msk [vmem:[%s838 + $0x1] sm:$0xff] %vm709, %v830
      %840 = vst.msk [vmem:[%s838 + $0x11] sm:$0xff] %vm709, %v831
      %841 = vst.msk [vmem:[%s838 + $0x21] sm:$0xff] %vm709, %v832
      %842 = vst.msk [vmem:[%s838 + $0x31] sm:$0xff] %vm709, %v833
      %843 = vst.msk [vmem:[%s838 + $0x41] sm:$0xff] %vm709, %v834
      %844 = vst.msk [vmem:[%s838 + $0x51] sm:$0xff] %vm709, %v835
      %845 = vst.msk [vmem:[%s838 + $0x61] sm:$0xff] %vm709, %v836
      %846 = vst.msk [vmem:[%s838 + $0x71] sm:$0xff] %vm709, %v837
      %s847 = scalar_lea.vmem [#allocation2], 16
      %v848 = vld [vmem:[%s847] sm:$0xff]
      %v849 = vld [vmem:[%s847 + $0x10] sm:$0xff]
      %v850 = vld [vmem:[%s847 + $0x20] sm:$0xff]
      %v851 = vld [vmem:[%s847 + $0x30] sm:$0xff]
      %v852 = vld [vmem:[%s847 + $0x40] sm:$0xff]
      %v853 = vld [vmem:[%s847 + $0x50] sm:$0xff]
      %v854 = vld [vmem:[%s847 + $0x60] sm:$0xff]
      %v855 = vld [vmem:[%s847 + $0x70] sm:$0xff]
      %v856 = vld [vmem:[%s1] sm:$0xf]
      %v857 = vld [vmem:[%s847 + $0x1] sm:$0xff]
      %v858 = vld [vmem:[%s847 + $0x11] sm:$0xff]
      %v859 = vld [vmem:[%s847 + $0x21] sm:$0xff]
      %v860 = vld [vmem:[%s847 + $0x31] sm:$0xff]
      %v861 = vld [vmem:[%s847 + $0x41] sm:$0xff]
      %v862 = vld [vmem:[%s847 + $0x51] sm:$0xff]
      %v863 = vld [vmem:[%s847 + $0x61] sm:$0xff]
      %v864 = vld [vmem:[%s847 + $0x71] sm:$0xff]
      %s865 = scalar_lea.vmem %s1, 4
      %v866 = vld [vmem:[%s865] sm:$0xf]
      %v868 = vsel %vm709, %v857, 0
      %v871 = vsel %vm709, %v858, 0
      %v874 = vsel %vm709, %v859, 0
      %v877 = vsel %vm709, %v860, 0
      %v880 = vsel %vm709, %v861, 0
      %v883 = vsel %vm709, %v862, 0
      %v886 = vsel %vm709, %v863, 0
      %v889 = vsel %vm709, %v864, 0
      %vm891 = vcmask 1043456
      %v893 = vsel %vm891, %v866, 0
      %895 = vmatprep.subr.mxu0 0.0
      %896 = vmatpush1.msra.mxu0 0.0
      %897 = vmatprep.subr.mxu0 0.0
      %898 = vmatpush1.msra.mxu0 0.0
      %899 = vmatprep.subr.mxu0 0.0
      %900 = vmatpush1.msra.mxu0 0.0
      %901 = vmatprep.subr.mxu0 0.0
      %902 = vmatpush1.msra.mxu0 0.0
      %903 = vmatprep.subr.mxu0 0.0
      %904 = vmatpush1.msra.mxu0 0.0
      %905 = vmatprep.subr.mxu0 0.0
      %906 = vmatpush1.msra.mxu0 0.0
      %907 = vmatprep.subr.mxu0 0.0
      %908 = vmatpush1.msra.mxu0 0.0
      %909 = vmatprep.subr.mxu0 0.0
      %910 = vmatpush1.msra.mxu0 0.0
      %911 = vmatprep.subr.mxu0 0.0
      %912 = vmatpush1.msra.mxu0 0.0
      %913 = vmatprep.subr.mxu0 0.0
      %914 = vmatpush1.msra.mxu0 0.0
      %915 = vmatprep.subr.mxu0 0.0
      %916 = vmatpush1.msra.mxu0 0.0
      %917 = vmatprep.subr.mxu0 0.0
      %918 = vmatpush1.msra.mxu0 0.0
      %919 = vmatprep.subr.mxu0 0.0
      %920 = vmatpush1.msra.mxu0 0.0
      %921 = vmatprep.subr.mxu0 0.0
      %922 = vmatpush1.msra.mxu0 0.0
      %923 = vmatprep.subr.mxu0 0.0
      %924 = vmatpush1.msra.mxu0 0.0
      %925 = vmatprep.subr.mxu0 0.0
      %926 = vmatpush1.msra.mxu0 %v893
      %927 = vmatprep.subr.mxu0 0.0
      %928 = vmatpush2.msra.mxu0 0.0
      %929 = vmatprep.subr.mxu0 0.0
      %930 = vmatpush2.msra.mxu0 0.0
      %931 = vmatprep.subr.mxu0 0.0
      %932 = vmatpush2.msra.mxu0 0.0
      %933 = vmatprep.subr.mxu0 0.0
      %934 = vmatpush2.msra.mxu0 0.0
      %935 = vmatprep.subr.mxu0 0.0
      %936 = vmatpush2.msra.mxu0 0.0
      %937 = vmatprep.subr.mxu0 0.0
      %938 = vmatpush2.msra.mxu0 0.0
      %939 = vmatprep.subr.mxu0 0.0
      %940 = vmatpush2.msra.mxu0 0.0
      %941 = vmatprep.subr.mxu0 0.0
      %942 = vmatpush2.msra.mxu0 0.0
      %943 = vmatprep.subr.mxu0 0.0
      %944 = vmatpush2.msra.mxu0 0.0
      %945 = vmatprep.subr.mxu0 0.0
      %946 = vmatpush2.msra.mxu0 0.0
      %947 = vmatprep.subr.mxu0 0.0
      %948 = vmatpush2.msra.mxu0 0.0
      %949 = vmatprep.subr.mxu0 0.0
      %950 = vmatpush2.msra.mxu0 0.0
      %951 = vmatprep.subr.mxu0 0.0
      %952 = vmatpush2.msra.mxu0 0.0
      %953 = vmatprep.subr.mxu0 0.0
      %954 = vmatpush2.msra.mxu0 0.0
      %955 = vmatprep.subr.mxu0 0.0
      %956 = vmatpush2.msra.mxu0 0.0
      %957 = vmatprep.subr.mxu0 0.0
      %958 = vmatpush2.msra.mxu0 0.0
      %959 = vmatprep.mubr.f32.mxu0 0.0
      %960 = vmatmul.mubr.f32.gmra.mxu0 %v868
      %v961 = vpop.f32.mrf.mxu0
      %v962 = vadd.f32 0.0, %v961
      %v963 = vpop.f32.mrf.mxu0
      %964 = vmatprep.mubr.f32.mxu0 0.0
      %965 = vmatmul.mubr.f32.gmra.mxu0 %v871
      %v966 = vpop.f32.mrf.mxu0
      %v967 = vadd.f32 0.0, %v966
      %v968 = vpop.f32.mrf.mxu0
      %969 = vmatprep.mubr.f32.mxu0 0.0
      %970 = vmatmul.mubr.f32.gmra.mxu0 %v874
      %v971 = vpop.f32.mrf.mxu0
      %v972 = vadd.f32 0.0, %v971
      %v973 = vpop.f32.mrf.mxu0
      %974 = vmatprep.mubr.f32.mxu0 0.0
      %975 = vmatmul.mubr.f32.gmra.mxu0 %v877
      %v976 = vpop.f32.mrf.mxu0
      %v977 = vadd.f32 0.0, %v976
      %v978 = vpop.f32.mrf.mxu0
      %979 = vmatprep.mubr.f32.mxu0 0.0
      %980 = vmatmul.mubr.f32.gmra.mxu0 %v880
      %v981 = vpop.f32.mrf.mxu0
      %v982 = vadd.f32 0.0, %v981
      %v983 = vpop.f32.mrf.mxu0
      %984 = vmatprep.mubr.f32.mxu0 0.0
      %985 = vmatmul.mubr.f32.gmra.mxu0 %v883
      %v986 = vpop.f32.mrf.mxu0
      %v987 = vadd.f32 0.0, %v986
      %v988 = vpop.f32.mrf.mxu0
      %989 = vmatprep.mubr.f32.mxu0 0.0
      %990 = vmatmul.mubr.f32.gmra.mxu0 %v886
      %v991 = vpop.f32.mrf.mxu0
      %v992 = vadd.f32 0.0, %v991
      %v993 = vpop.f32.mrf.mxu0
      %994 = vmatprep.mubr.f32.mxu0 0.0
      %995 = vmatmul.mubr.f32.gmra.mxu0 %v889
      %v996 = vpop.f32.mrf.mxu0
      %v997 = vadd.f32 0.0, %v996
      %v998 = vpop.f32.mrf.mxu0
      %999 = vdwg.mxu0
      %v1001 = vsel %vm709, %v848, 0
      %v1004 = vsel %vm709, %v849, 0
      %v1007 = vsel %vm709, %v850, 0
      %v1010 = vsel %vm709, %v851, 0
      %v1013 = vsel %vm709, %v852, 0
      %v1016 = vsel %vm709, %v853, 0
      %v1019 = vsel %vm709, %v854, 0
      %v1022 = vsel %vm709, %v855, 0
      %v1025 = vsel %vm891, %v856, 0
      %1027 = vmatprep.subr.mxu0 0.0
      %1028 = vmatpush1.msra.mxu0 0.0
      %1029 = vmatprep.subr.mxu0 0.0
      %1030 = vmatpush1.msra.mxu0 0.0
      %1031 = vmatprep.subr.mxu0 0.0
      %1032 = vmatpush1.msra.mxu0 0.0
      %1033 = vmatprep.subr.mxu0 0.0
      %1034 = vmatpush1.msra.mxu0 0.0
      %1035 = vmatprep.subr.mxu0 0.0
      %1036 = vmatpush1.msra.mxu0 0.0
      %1037 = vmatprep.subr.mxu0 0.0
      %1038 = vmatpush1.msra.mxu0 0.0
      %1039 = vmatprep.subr.mxu0 0.0
      %1040 = vmatpush1.msra.mxu0 0.0
      %1041 = vmatprep.subr.mxu0 0.0
      %1042 = vmatpush1.msra.mxu0 0.0
      %1043 = vmatprep.subr.mxu0 0.0
      %1044 = vmatpush1.msra.mxu0 0.0
      %1045 = vmatprep.subr.mxu0 0.0
      %1046 = vmatpush1.msra.mxu0 0.0
      %1047 = vmatprep.subr.mxu0 0.0
      %1048 = vmatpush1.msra.mxu0 0.0
      %1049 = vmatprep.subr.mxu0 0.0
      %1050 = vmatpush1.msra.mxu0 0.0
      %1051 = vmatprep.subr.mxu0 0.0
      %1052 = vmatpush1.msra.mxu0 0.0
      %1053 = vmatprep.subr.mxu0 0.0
      %1054 = vmatpush1.msra.mxu0 0.0
      %1055 = vmatprep.subr.mxu0 0.0
      %1056 = vmatpush1.msra.mxu0 0.0
      %1057 = vmatprep.subr.mxu0 0.0
      %1058 = vmatpush1.msra.mxu0 %v1025
      %1059 = vmatprep.subr.mxu0 0.0
      %1060 = vmatpush2.msra.mxu0 0.0
      %1061 = vmatprep.subr.mxu0 0.0
      %1062 = vmatpush2.msra.mxu0 0.0
      %1063 = vmatprep.subr.mxu0 0.0
      %1064 = vmatpush2.msra.mxu0 0.0
      %1065 = vmatprep.subr.mxu0 0.0
      %1066 = vmatpush2.msra.mxu0 0.0
      %1067 = vmatprep.subr.mxu0 0.0
      %1068 = vmatpush2.msra.mxu0 0.0
      %1069 = vmatprep.subr.mxu0 0.0
      %1070 = vmatpush2.msra.mxu0 0.0
      %1071 = vmatprep.subr.mxu0 0.0
      %1072 = vmatpush2.msra.mxu0 0.0
      %1073 = vmatprep.subr.mxu0 0.0
      %1074 = vmatpush2.msra.mxu0 0.0
      %1075 = vmatprep.subr.mxu0 0.0
      %1076 = vmatpush2.msra.mxu0 0.0
      %1077 = vmatprep.subr.mxu0 0.0
      %1078 = vmatpush2.msra.mxu0 0.0
      %1079 = vmatprep.subr.mxu0 0.0
      %1080 = vmatpush2.msra.mxu0 0.0
      %1081 = vmatprep.subr.mxu0 0.0
      %1082 = vmatpush2.msra.mxu0 0.0
      %1083 = vmatprep.subr.mxu0 0.0
      %1084 = vmatpush2.msra.mxu0 0.0
      %1085 = vmatprep.subr.mxu0 0.0
      %1086 = vmatpush2.msra.mxu0 0.0
      %1087 = vmatprep.subr.mxu0 0.0
      %1088 = vmatpush2.msra.mxu0 0.0
      %1089 = vmatprep.subr.mxu0 0.0
      %1090 = vmatpush2.msra.mxu0 0.0
      %1091 = vmatprep.mubr.f32.mxu0 0.0
      %1092 = vmatmul.mubr.f32.gmra.mxu0 %v1001
      %v1093 = vpop.f32.mrf.mxu0
      %v1094 = vadd.f32 %v962, %v1093
      %v1095 = vpop.f32.mrf.mxu0
      %1096 = vmatprep.mubr.f32.mxu0 0.0
      %1097 = vmatmul.mubr.f32.gmra.mxu0 %v1004
      %v1098 = vpop.f32.mrf.mxu0
      %v1099 = vadd.f32 %v967, %v1098
      %v1100 = vpop.f32.mrf.mxu0
      %1101 = vmatprep.mubr.f32.mxu0 0.0
      %1102 = vmatmul.mubr.f32.gmra.mxu0 %v1007
      %v1103 = vpop.f32.mrf.mxu0
      %v1104 = vadd.f32 %v972, %v1103
      %v1105 = vpop.f32.mrf.mxu0
      %1106 = vmatprep.mubr.f32.mxu0 0.0
      %1107 = vmatmul.mubr.f32.gmra.mxu0 %v1010
      %v1108 = vpop.f32.mrf.mxu0
      %v1109 = vadd.f32 %v977, %v1108
      %v1110 = vpop.f32.mrf.mxu0
      %1111 = vmatprep.mubr.f32.mxu0 0.0
      %1112 = vmatmul.mubr.f32.gmra.mxu0 %v1013
      %v1113 = vpop.f32.mrf.mxu0
      %v1114 = vadd.f32 %v982, %v1113
      %v1115 = vpop.f32.mrf.mxu0
      %1116 = vmatprep.mubr.f32.mxu0 0.0
      %1117 = vmatmul.mubr.f32.gmra.mxu0 %v1016
      %v1118 = vpop.f32.mrf.mxu0
      %v1119 = vadd.f32 %v987, %v1118
      %v1120 = vpop.f32.mrf.mxu0
      %1121 = vmatprep.mubr.f32.mxu0 0.0
      %1122 = vmatmul.mubr.f32.gmra.mxu0 %v1019
      %v1123 = vpop.f32.mrf.mxu0
      %v1124 = vadd.f32 %v992, %v1123
      %v1125 = vpop.f32.mrf.mxu0
      %1126 = vmatprep.mubr.f32.mxu0 0.0
      %1127 = vmatmul.mubr.f32.gmra.mxu0 %v1022
      %v1128 = vpop.f32.mrf.mxu0
      %v1129 = vadd.f32 %v997, %v1128
      %v1130 = vpop.f32.mrf.mxu0
      %1131 = vdwg.mxu0
      %v1132 = vld [vmem:[%s847 + $0x2] sm:$0xff]
      %v1133 = vld [vmem:[%s847 + $0x12] sm:$0xff]
      %v1134 = vld [vmem:[%s847 + $0x22] sm:$0xff]
      %v1135 = vld [vmem:[%s847 + $0x32] sm:$0xff]
      %v1136 = vld [vmem:[%s847 + $0x42] sm:$0xff]
      %v1137 = vld [vmem:[%s847 + $0x52] sm:$0xff]
      %v1138 = vld [vmem:[%s847 + $0x62] sm:$0xff]
      %v1139 = vld [vmem:[%s847 + $0x72] sm:$0xff]
      %s1140 = scalar_lea.vmem %s1, 8
      %v1141 = vld [vmem:[%s1140] sm:$0xf]
      %v1143 = vsel %vm709, %v1132, 0
      %v1146 = vsel %vm709, %v1133, 0
      %v1149 = vsel %vm709, %v1134, 0
      %v1152 = vsel %vm709, %v1135, 0
      %v1155 = vsel %vm709, %v1136, 0
      %v1158 = vsel %vm709, %v1137, 0
      %v1161 = vsel %vm709, %v1138, 0
      %v1164 = vsel %vm709, %v1139, 0
      %v1167 = vsel %vm891, %v1141, 0
      %1169 = vmatprep.subr.mxu0 0.0
      %1170 = vmatpush1.msra.mxu0 0.0
      %1171 = vmatprep.subr.mxu0 0.0
      %1172 = vmatpush1.msra.mxu0 0.0
      %1173 = vmatprep.subr.mxu0 0.0
      %1174 = vmatpush1.msra.mxu0 0.0
      %1175 = vmatprep.subr.mxu0 0.0
      %1176 = vmatpush1.msra.mxu0 0.0
      %1177 = vmatprep.subr.mxu0 0.0
      %1178 = vmatpush1.msra.mxu0 0.0
      %1179 = vmatprep.subr.mxu0 0.0
      %1180 = vmatpush1.msra.mxu0 0.0
      %1181 = vmatprep.subr.mxu0 0.0
      %1182 = vmatpush1.msra.mxu0 0.0
      %1183 = vmatprep.subr.mxu0 0.0
      %1184 = vmatpush1.msra.mxu0 0.0
      %1185 = vmatprep.subr.mxu0 0.0
      %1186 = vmatpush1.msra.mxu0 0.0
      %1187 = vmatprep.subr.mxu0 0.0
      %1188 = vmatpush1.msra.mxu0 0.0
      %1189 = vmatprep.subr.mxu0 0.0
      %1190 = vmatpush1.msra.mxu0 0.0
      %1191 = vmatprep.subr.mxu0 0.0
      %1192 = vmatpush1.msra.mxu0 0.0
      %1193 = vmatprep.subr.mxu0 0.0
      %1194 = vmatpush1.msra.mxu0 0.0
      %1195 = vmatprep.subr.mxu0 0.0
      %1196 = vmatpush1.msra.mxu0 0.0
      %1197 = vmatprep.subr.mxu0 0.0
      %1198 = vmatpush1.msra.mxu0 0.0
      %1199 = vmatprep.subr.mxu0 0.0
      %1200 = vmatpush1.msra.mxu0 %v1167
      %1201 = vmatprep.subr.mxu0 0.0
      %1202 = vmatpush2.msra.mxu0 0.0
      %1203 = vmatprep.subr.mxu0 0.0
      %1204 = vmatpush2.msra.mxu0 0.0
      %1205 = vmatprep.subr.mxu0 0.0
      %1206 = vmatpush2.msra.mxu0 0.0
      %1207 = vmatprep.subr.mxu0 0.0
      %1208 = vmatpush2.msra.mxu0 0.0
      %1209 = vmatprep.subr.mxu0 0.0
      %1210 = vmatpush2.msra.mxu0 0.0
      %1211 = vmatprep.subr.mxu0 0.0
      %1212 = vmatpush2.msra.mxu0 0.0
      %1213 = vmatprep.subr.mxu0 0.0
      %1214 = vmatpush2.msra.mxu0 0.0
      %1215 = vmatprep.subr.mxu0 0.0
      %1216 = vmatpush2.msra.mxu0 0.0
      %1217 = vmatprep.subr.mxu0 0.0
      %1218 = vmatpush2.msra.mxu0 0.0
      %1219 = vmatprep.subr.mxu0 0.0
      %1220 = vmatpush2.msra.mxu0 0.0
      %1221 = vmatprep.subr.mxu0 0.0
      %1222 = vmatpush2.msra.mxu0 0.0
      %1223 = vmatprep.subr.mxu0 0.0
      %1224 = vmatpush2.msra.mxu0 0.0
      %1225 = vmatprep.subr.mxu0 0.0
      %1226 = vmatpush2.msra.mxu0 0.0
      %1227 = vmatprep.subr.mxu0 0.0
      %1228 = vmatpush2.msra.mxu0 0.0
      %1229 = vmatprep.subr.mxu0 0.0
      %1230 = vmatpush2.msra.mxu0 0.0
      %1231 = vmatprep.subr.mxu0 0.0
      %1232 = vmatpush2.msra.mxu0 0.0
      %1233 = vmatprep.mubr.f32.mxu0 0.0
      %1234 = vmatmul.mubr.f32.gmra.mxu0 %v1143
      %v1235 = vpop.f32.mrf.mxu0
      %v1236 = vadd.f32 0.0, %v1235
      %v1237 = vpop.f32.mrf.mxu0
      %1238 = vmatprep.mubr.f32.mxu0 0.0
      %1239 = vmatmul.mubr.f32.gmra.mxu0 %v1146
      %v1240 = vpop.f32.mrf.mxu0
      %v1241 = vadd.f32 0.0, %v1240
      %v1242 = vpop.f32.mrf.mxu0
      %1243 = vmatprep.mubr.f32.mxu0 0.0
      %1244 = vmatmul.mubr.f32.gmra.mxu0 %v1149
      %v1245 = vpop.f32.mrf.mxu0
      %v1246 = vadd.f32 0.0, %v1245
      %v1247 = vpop.f32.mrf.mxu0
      %1248 = vmatprep.mubr.f32.mxu0 0.0
      %1249 = vmatmul.mubr.f32.gmra.mxu0 %v1152
      %v1250 = vpop.f32.mrf.mxu0
      %v1251 = vadd.f32 0.0, %v1250
      %v1252 = vpop.f32.mrf.mxu0
      %1253 = vmatprep.mubr.f32.mxu0 0.0
      %1254 = vmatmul.mubr.f32.gmra.mxu0 %v1155
      %v1255 = vpop.f32.mrf.mxu0
      %v1256 = vadd.f32 0.0, %v1255
      %v1257 = vpop.f32.mrf.mxu0
      %1258 = vmatprep.mubr.f32.mxu0 0.0
      %1259 = vmatmul.mubr.f32.gmra.mxu0 %v1158
      %v1260 = vpop.f32.mrf.mxu0
      %v1261 = vadd.f32 0.0, %v1260
      %v1262 = vpop.f32.mrf.mxu0
      %1263 = vmatprep.mubr.f32.mxu0 0.0
      %1264 = vmatmul.mubr.f32.gmra.mxu0 %v1161
      %v1265 = vpop.f32.mrf.mxu0
      %v1266 = vadd.f32 0.0, %v1265
      %v1267 = vpop.f32.mrf.mxu0
      %1268 = vmatprep.mubr.f32.mxu0 0.0
      %1269 = vmatmul.mubr.f32.gmra.mxu0 %v1164
      %v1270 = vpop.f32.mrf.mxu0
      %v1271 = vadd.f32 0.0, %v1270
      %v1272 = vpop.f32.mrf.mxu0
      %1273 = vdwg.mxu0
      %v1274 = vadd.f32 %v1094, %v1236
      %v1275 = vadd.f32 %v1099, %v1241
      %v1276 = vadd.f32 %v1104, %v1246
      %v1277 = vadd.f32 %v1109, %v1251
      %v1278 = vadd.f32 %v1114, %v1256
      %v1279 = vadd.f32 %v1119, %v1261
      %v1280 = vadd.f32 %v1124, %v1266
      %v1281 = vadd.f32 %v1129, %v1271
      %v1282 = vld [vmem:[%s838] sm:$0xff]
      %v1283 = vld [vmem:[%s838 + $0x10] sm:$0xff]
      %v1284 = vld [vmem:[%s838 + $0x20] sm:$0xff]
      %v1285 = vld [vmem:[%s838 + $0x30] sm:$0xff]
      %v1286 = vld [vmem:[%s838 + $0x40] sm:$0xff]
      %v1287 = vld [vmem:[%s838 + $0x50] sm:$0xff]
      %v1288 = vld [vmem:[%s838 + $0x60] sm:$0xff]
      %v1289 = vld [vmem:[%s838 + $0x70] sm:$0xff]
      %s1290 = scalar_lea.vmem %s1, 12
      %v1291 = vld [vmem:[%s1290] sm:$0xf]
      %v1293 = vsel %vm709, %v1282, 0
      %v1296 = vsel %vm709, %v1283, 0
      %v1299 = vsel %vm709, %v1284, 0
      %v1302 = vsel %vm709, %v1285, 0
      %v1305 = vsel %vm709, %v1286, 0
      %v1308 = vsel %vm709, %v1287, 0
      %v1311 = vsel %vm709, %v1288, 0
      %v1314 = vsel %vm709, %v1289, 0
      %v1317 = vsel %vm891, %v1291, 0
      %1319 = vmatprep.subr.mxu0 0.0
      %1320 = vmatpush1.msra.mxu0 0.0
      %1321 = vmatprep.subr.mxu0 0.0
      %1322 = vmatpush1.msra.mxu0 0.0
      %1323 = vmatprep.subr.mxu0 0.0
      %1324 = vmatpush1.msra.mxu0 0.0
      %1325 = vmatprep.subr.mxu0 0.0
      %1326 = vmatpush1.msra.mxu0 0.0
      %1327 = vmatprep.subr.mxu0 0.0
      %1328 = vmatpush1.msra.mxu0 0.0
      %1329 = vmatprep.subr.mxu0 0.0
      %1330 = vmatpush1.msra.mxu0 0.0
      %1331 = vmatprep.subr.mxu0 0.0
      %1332 = vmatpush1.msra.mxu0 0.0
      %1333 = vmatprep.subr.mxu0 0.0
      %1334 = vmatpush1.msra.mxu0 0.0
      %1335 = vmatprep.subr.mxu0 0.0
      %1336 = vmatpush1.msra.mxu0 0.0
      %1337 = vmatprep.subr.mxu0 0.0
      %1338 = vmatpush1.msra.mxu0 0.0
      %1339 = vmatprep.subr.mxu0 0.0
      %1340 = vmatpush1.msra.mxu0 0.0
      %1341 = vmatprep.subr.mxu0 0.0
      %1342 = vmatpush1.msra.mxu0 0.0
      %1343 = vmatprep.subr.mxu0 0.0
      %1344 = vmatpush1.msra.mxu0 0.0
      %1345 = vmatprep.subr.mxu0 0.0
      %1346 = vmatpush1.msra.mxu0 0.0
      %1347 = vmatprep.subr.mxu0 0.0
      %1348 = vmatpush1.msra.mxu0 0.0
      %1349 = vmatprep.subr.mxu0 0.0
      %1350 = vmatpush1.msra.mxu0 %v1317
      %1351 = vmatprep.subr.mxu0 0.0
      %1352 = vmatpush2.msra.mxu0 0.0
      %1353 = vmatprep.subr.mxu0 0.0
      %1354 = vmatpush2.msra.mxu0 0.0
      %1355 = vmatprep.subr.mxu0 0.0
      %1356 = vmatpush2.msra.mxu0 0.0
      %1357 = vmatprep.subr.mxu0 0.0
      %1358 = vmatpush2.msra.mxu0 0.0
      %1359 = vmatprep.subr.mxu0 0.0
      %1360 = vmatpush2.msra.mxu0 0.0
      %1361 = vmatprep.subr.mxu0 0.0
      %1362 = vmatpush2.msra.mxu0 0.0
      %1363 = vmatprep.subr.mxu0 0.0
      %1364 = vmatpush2.msra.mxu0 0.0
      %1365 = vmatprep.subr.mxu0 0.0
      %1366 = vmatpush2.msra.mxu0 0.0
      %1367 = vmatprep.subr.mxu0 0.0
      %1368 = vmatpush2.msra.mxu0 0.0
      %1369 = vmatprep.subr.mxu0 0.0
      %1370 = vmatpush2.msra.mxu0 0.0
      %1371 = vmatprep.subr.mxu0 0.0
      %1372 = vmatpush2.msra.mxu0 0.0
      %1373 = vmatprep.subr.mxu0 0.0
      %1374 = vmatpush2.msra.mxu0 0.0
      %1375 = vmatprep.subr.mxu0 0.0
      %1376 = vmatpush2.msra.mxu0 0.0
      %1377 = vmatprep.subr.mxu0 0.0
      %1378 = vmatpush2.msra.mxu0 0.0
      %1379 = vmatprep.subr.mxu0 0.0
      %1380 = vmatpush2.msra.mxu0 0.0
      %1381 = vmatprep.subr.mxu0 0.0
      %1382 = vmatpush2.msra.mxu0 0.0
      %1383 = vmatprep.mubr.f32.mxu0 0.0
      %1384 = vmatmul.mubr.f32.gmra.mxu0 %v1293
      %v1385 = vpop.f32.mrf.mxu0
      %v1386 = vadd.f32 0.0, %v1385
      %v1387 = vpop.f32.mrf.mxu0
      %1388 = vmatprep.mubr.f32.mxu0 0.0
      %1389 = vmatmul.mubr.f32.gmra.mxu0 %v1296
      %v1390 = vpop.f32.mrf.mxu0
      %v1391 = vadd.f32 0.0, %v1390
      %v1392 = vpop.f32.mrf.mxu0
      %1393 = vmatprep.mubr.f32.mxu0 0.0
      %1394 = vmatmul.mubr.f32.gmra.mxu0 %v1299
      %v1395 = vpop.f32.mrf.mxu0
      %v1396 = vadd.f32 0.0, %v1395
      %v1397 = vpop.f32.mrf.mxu0
      %1398 = vmatprep.mubr.f32.mxu0 0.0
      %1399 = vmatmul.mubr.f32.gmra.mxu0 %v1302
      %v1400 = vpop.f32.mrf.mxu0
      %v1401 = vadd.f32 0.0, %v1400
      %v1402 = vpop.f32.mrf.mxu0
      %1403 = vmatprep.mubr.f32.mxu0 0.0
      %1404 = vmatmul.mubr.f32.gmra.mxu0 %v1305
      %v1405 = vpop.f32.mrf.mxu0
      %v1406 = vadd.f32 0.0, %v1405
      %v1407 = vpop.f32.mrf.mxu0
      %1408 = vmatprep.mubr.f32.mxu0 0.0
      %1409 = vmatmul.mubr.f32.gmra.mxu0 %v1308
      %v1410 = vpop.f32.mrf.mxu0
      %v1411 = vadd.f32 0.0, %v1410
      %v1412 = vpop.f32.mrf.mxu0
      %1413 = vmatprep.mubr.f32.mxu0 0.0
      %1414 = vmatmul.mubr.f32.gmra.mxu0 %v1311
      %v1415 = vpop.f32.mrf.mxu0
      %v1416 = vadd.f32 0.0, %v1415
      %v1417 = vpop.f32.mrf.mxu0
      %1418 = vmatprep.mubr.f32.mxu0 0.0
      %1419 = vmatmul.mubr.f32.gmra.mxu0 %v1314
      %v1420 = vpop.f32.mrf.mxu0
      %v1421 = vadd.f32 0.0, %v1420
      %v1422 = vpop.f32.mrf.mxu0
      %1423 = vdwg.mxu0
      %v1424 = vadd.f32 %v1274, %v1386
      %v1425 = vadd.f32 %v1275, %v1391
      %v1426 = vadd.f32 %v1276, %v1396
      %v1427 = vadd.f32 %v1277, %v1401
      %v1428 = vadd.f32 %v1278, %v1406
      %v1429 = vadd.f32 %v1279, %v1411
      %v1430 = vadd.f32 %v1280, %v1416
      %v1431 = vadd.f32 %v1281, %v1421
      %v1432 = vld [vmem:[%s838 + $0x1] sm:$0xff]
      %v1433 = vld [vmem:[%s838 + $0x11] sm:$0xff]
      %v1434 = vld [vmem:[%s838 + $0x21] sm:$0xff]
      %v1435 = vld [vmem:[%s838 + $0x31] sm:$0xff]
      %v1436 = vld [vmem:[%s838 + $0x41] sm:$0xff]
      %v1437 = vld [vmem:[%s838 + $0x51] sm:$0xff]
      %v1438 = vld [vmem:[%s838 + $0x61] sm:$0xff]
      %v1439 = vld [vmem:[%s838 + $0x71] sm:$0xff]
      %s1440 = scalar_lea.vmem %s1, 16
      %v1441 = vld [vmem:[%s1440] sm:$0xf]
      %v1443 = vsel %vm709, %v1432, 0
      %v1446 = vsel %vm709, %v1433, 0
      %v1449 = vsel %vm709, %v1434, 0
      %v1452 = vsel %vm709, %v1435, 0
      %v1455 = vsel %vm709, %v1436, 0
      %v1458 = vsel %vm709, %v1437, 0
      %v1461 = vsel %vm709, %v1438, 0
      %v1464 = vsel %vm709, %v1439, 0
      %v1467 = vsel %vm891, %v1441, 0
      %1469 = vmatprep.subr.mxu0 0.0
      %1470 = vmatpush1.msra.mxu0 0.0
      %1471 = vmatprep.subr.mxu0 0.0
      %1472 = vmatpush1.msra.mxu0 0.0
      %1473 = vmatprep.subr.mxu0 0.0
      %1474 = vmatpush1.msra.mxu0 0.0
      %1475 = vmatprep.subr.mxu0 0.0
      %1476 = vmatpush1.msra.mxu0 0.0
      %1477 = vmatprep.subr.mxu0 0.0
      %1478 = vmatpush1.msra.mxu0 0.0
      %1479 = vmatprep.subr.mxu0 0.0
      %1480 = vmatpush1.msra.mxu0 0.0
      %1481 = vmatprep.subr.mxu0 0.0
      %1482 = vmatpush1.msra.mxu0 0.0
      %1483 = vmatprep.subr.mxu0 0.0
      %1484 = vmatpush1.msra.mxu0 0.0
      %1485 = vmatprep.subr.mxu0 0.0
      %1486 = vmatpush1.msra.mxu0 0.0
      %1487 = vmatprep.subr.mxu0 0.0
      %1488 = vmatpush1.msra.mxu0 0.0
      %1489 = vmatprep.subr.mxu0 0.0
      %1490 = vmatpush1.msra.mxu0 0.0
      %1491 = vmatprep.subr.mxu0 0.0
      %1492 = vmatpush1.msra.mxu0 0.0
      %1493 = vmatprep.subr.mxu0 0.0
      %1494 = vmatpush1.msra.mxu0 0.0
      %1495 = vmatprep.subr.mxu0 0.0
      %1496 = vmatpush1.msra.mxu0 0.0
      %1497 = vmatprep.subr.mxu0 0.0
      %1498 = vmatpush1.msra.mxu0 0.0
      %1499 = vmatprep.subr.mxu0 0.0
      %1500 = vmatpush1.msra.mxu0 %v1467
      %1501 = vmatprep.subr.mxu0 0.0
      %1502 = vmatpush2.msra.mxu0 0.0
      %1503 = vmatprep.subr.mxu0 0.0
      %1504 = vmatpush2.msra.mxu0 0.0
      %1505 = vmatprep.subr.mxu0 0.0
      %1506 = vmatpush2.msra.mxu0 0.0
      %1507 = vmatprep.subr.mxu0 0.0
      %1508 = vmatpush2.msra.mxu0 0.0
      %1509 = vmatprep.subr.mxu0 0.0
      %1510 = vmatpush2.msra.mxu0 0.0
      %1511 = vmatprep.subr.mxu0 0.0
      %1512 = vmatpush2.msra.mxu0 0.0
      %1513 = vmatprep.subr.mxu0 0.0
      %1514 = vmatpush2.msra.mxu0 0.0
      %1515 = vmatprep.subr.mxu0 0.0
      %1516 = vmatpush2.msra.mxu0 0.0
      %1517 = vmatprep.subr.mxu0 0.0
      %1518 = vmatpush2.msra.mxu0 0.0
      %1519 = vmatprep.subr.mxu0 0.0
      %1520 = vmatpush2.msra.mxu0 0.0
      %1521 = vmatprep.subr.mxu0 0.0
      %1522 = vmatpush2.msra.mxu0 0.0
      %1523 = vmatprep.subr.mxu0 0.0
      %1524 = vmatpush2.msra.mxu0 0.0
      %1525 = vmatprep.subr.mxu0 0.0
      %1526 = vmatpush2.msra.mxu0 0.0
      %1527 = vmatprep.subr.mxu0 0.0
      %1528 = vmatpush2.msra.mxu0 0.0
      %1529 = vmatprep.subr.mxu0 0.0
      %1530 = vmatpush2.msra.mxu0 0.0
      %1531 = vmatprep.subr.mxu0 0.0
      %1532 = vmatpush2.msra.mxu0 0.0
      %1533 = vmatprep.mubr.f32.mxu0 0.0
      %1534 = vmatmul.mubr.f32.gmra.mxu0 %v1443
      %v1535 = vpop.f32.mrf.mxu0
      %v1536 = vadd.f32 0.0, %v1535
      %v1537 = vpop.f32.mrf.mxu0
      %1538 = vmatprep.mubr.f32.mxu0 0.0
      %1539 = vmatmul.mubr.f32.gmra.mxu0 %v1446
      %v1540 = vpop.f32.mrf.mxu0
      %v1541 = vadd.f32 0.0, %v1540
      %v1542 = vpop.f32.mrf.mxu0
      %1543 = vmatprep.mubr.f32.mxu0 0.0
      %1544 = vmatmul.mubr.f32.gmra.mxu0 %v1449
      %v1545 = vpop.f32.mrf.mxu0
      %v1546 = vadd.f32 0.0, %v1545
      %v1547 = vpop.f32.mrf.mxu0
      %1548 = vmatprep.mubr.f32.mxu0 0.0
      %1549 = vmatmul.mubr.f32.gmra.mxu0 %v1452
      %v1550 = vpop.f32.mrf.mxu0
      %v1551 = vadd.f32 0.0, %v1550
      %v1552 = vpop.f32.mrf.mxu0
      %1553 = vmatprep.mubr.f32.mxu0 0.0
      %1554 = vmatmul.mubr.f32.gmra.mxu0 %v1455
      %v1555 = vpop.f32.mrf.mxu0
      %v1556 = vadd.f32 0.0, %v1555
      %v1557 = vpop.f32.mrf.mxu0
      %1558 = vmatprep.mubr.f32.mxu0 0.0
      %1559 = vmatmul.mubr.f32.gmra.mxu0 %v1458
      %v1560 = vpop.f32.mrf.mxu0
      %v1561 = vadd.f32 0.0, %v1560
      %v1562 = vpop.f32.mrf.mxu0
      %1563 = vmatprep.mubr.f32.mxu0 0.0
      %1564 = vmatmul.mubr.f32.gmra.mxu0 %v1461
      %v1565 = vpop.f32.mrf.mxu0
      %v1566 = vadd.f32 0.0, %v1565
      %v1567 = vpop.f32.mrf.mxu0
      %1568 = vmatprep.mubr.f32.mxu0 0.0
      %1569 = vmatmul.mubr.f32.gmra.mxu0 %v1464
      %v1570 = vpop.f32.mrf.mxu0
      %v1571 = vadd.f32 0.0, %v1570
      %v1572 = vpop.f32.mrf.mxu0
      %1573 = vdwg.mxu0
      %v1574 = vadd.f32 %v1424, %v1536
      %v1575 = vadd.f32 %v1425, %v1541
      %v1576 = vadd.f32 %v1426, %v1546
      %v1577 = vadd.f32 %v1427, %v1551
      %v1578 = vadd.f32 %v1428, %v1556
      %v1579 = vadd.f32 %v1429, %v1561
      %v1580 = vadd.f32 %v1430, %v1566
      %v1581 = vadd.f32 %v1431, %v1571
      %v1582 = vld [vmem:[%s838 + $0x2] sm:$0xff]
      %v1583 = vld [vmem:[%s838 + $0x12] sm:$0xff]
      %v1584 = vld [vmem:[%s838 + $0x22] sm:$0xff]
      %v1585 = vld [vmem:[%s838 + $0x32] sm:$0xff]
      %v1586 = vld [vmem:[%s838 + $0x42] sm:$0xff]
      %v1587 = vld [vmem:[%s838 + $0x52] sm:$0xff]
      %v1588 = vld [vmem:[%s838 + $0x62] sm:$0xff]
      %v1589 = vld [vmem:[%s838 + $0x72] sm:$0xff]
      %s1590 = scalar_lea.vmem %s1, 20
      %v1591 = vld [vmem:[%s1590] sm:$0xf]
      %v1593 = vsel %vm709, %v1582, 0
      %v1596 = vsel %vm709, %v1583, 0
      %v1599 = vsel %vm709, %v1584, 0
      %v1602 = vsel %vm709, %v1585, 0
      %v1605 = vsel %vm709, %v1586, 0
      %v1608 = vsel %vm709, %v1587, 0
      %v1611 = vsel %vm709, %v1588, 0
      %v1614 = vsel %vm709, %v1589, 0
      %v1617 = vsel %vm891, %v1591, 0
      %1619 = vmatprep.subr.mxu0 0.0
      %1620 = vmatpush1.msra.mxu0 0.0
      %1621 = vmatprep.subr.mxu0 0.0
      %1622 = vmatpush1.msra.mxu0 0.0
      %1623 = vmatprep.subr.mxu0 0.0
      %1624 = vmatpush1.msra.mxu0 0.0
      %1625 = vmatprep.subr.mxu0 0.0
      %1626 = vmatpush1.msra.mxu0 0.0
      %1627 = vmatprep.subr.mxu0 0.0
      %1628 = vmatpush1.msra.mxu0 0.0
      %1629 = vmatprep.subr.mxu0 0.0
      %1630 = vmatpush1.msra.mxu0 0.0
      %1631 = vmatprep.subr.mxu0 0.0
      %1632 = vmatpush1.msra.mxu0 0.0
      %1633 = vmatprep.subr.mxu0 0.0
      %1634 = vmatpush1.msra.mxu0 0.0
      %1635 = vmatprep.subr.mxu0 0.0
      %1636 = vmatpush1.msra.mxu0 0.0
      %1637 = vmatprep.subr.mxu0 0.0
      %1638 = vmatpush1.msra.mxu0 0.0
      %1639 = vmatprep.subr.mxu0 0.0
      %1640 = vmatpush1.msra.mxu0 0.0
      %1641 = vmatprep.subr.mxu0 0.0
      %1642 = vmatpush1.msra.mxu0 0.0
      %1643 = vmatprep.subr.mxu0 0.0
      %1644 = vmatpush1.msra.mxu0 0.0
      %1645 = vmatprep.subr.mxu0 0.0
      %1646 = vmatpush1.msra.mxu0 0.0
      %1647 = vmatprep.subr.mxu0 0.0
      %1648 = vmatpush1.msra.mxu0 0.0
      %1649 = vmatprep.subr.mxu0 0.0
      %1650 = vmatpush1.msra.mxu0 %v1617
      %1651 = vmatprep.subr.mxu0 0.0
      %1652 = vmatpush2.msra.mxu0 0.0
      %1653 = vmatprep.subr.mxu0 0.0
      %1654 = vmatpush2.msra.mxu0 0.0
      %1655 = vmatprep.subr.mxu0 0.0
      %1656 = vmatpush2.msra.mxu0 0.0
      %1657 = vmatprep.subr.mxu0 0.0
      %1658 = vmatpush2.msra.mxu0 0.0
      %1659 = vmatprep.subr.mxu0 0.0
      %1660 = vmatpush2.msra.mxu0 0.0
      %1661 = vmatprep.subr.mxu0 0.0
      %1662 = vmatpush2.msra.mxu0 0.0
      %1663 = vmatprep.subr.mxu0 0.0
      %1664 = vmatpush2.msra.mxu0 0.0
      %1665 = vmatprep.subr.mxu0 0.0
      %1666 = vmatpush2.msra.mxu0 0.0
      %1667 = vmatprep.subr.mxu0 0.0
      %1668 = vmatpush2.msra.mxu0 0.0
      %1669 = vmatprep.subr.mxu0 0.0
      %1670 = vmatpush2.msra.mxu0 0.0
      %1671 = vmatprep.subr.mxu0 0.0
      %1672 = vmatpush2.msra.mxu0 0.0
      %1673 = vmatprep.subr.mxu0 0.0
      %1674 = vmatpush2.msra.mxu0 0.0
      %1675 = vmatprep.subr.mxu0 0.0
      %1676 = vmatpush2.msra.mxu0 0.0
      %1677 = vmatprep.subr.mxu0 0.0
      %1678 = vmatpush2.msra.mxu0 0.0
      %1679 = vmatprep.subr.mxu0 0.0
      %1680 = vmatpush2.msra.mxu0 0.0
      %1681 = vmatprep.subr.mxu0 0.0
      %1682 = vmatpush2.msra.mxu0 0.0
      %1683 = vmatprep.mubr.f32.mxu0 0.0
      %1684 = vmatmul.mubr.f32.gmra.mxu0 %v1593
      %v1685 = vpop.f32.mrf.mxu0
      %v1686 = vadd.f32 0.0, %v1685
      %v1687 = vpop.f32.mrf.mxu0
      %1688 = vmatprep.mubr.f32.mxu0 0.0
      %1689 = vmatmul.mubr.f32.gmra.mxu0 %v1596
      %v1690 = vpop.f32.mrf.mxu0
      %v1691 = vadd.f32 0.0, %v1690
      %v1692 = vpop.f32.mrf.mxu0
      %1693 = vmatprep.mubr.f32.mxu0 0.0
      %1694 = vmatmul.mubr.f32.gmra.mxu0 %v1599
      %v1695 = vpop.f32.mrf.mxu0
      %v1696 = vadd.f32 0.0, %v1695
      %v1697 = vpop.f32.mrf.mxu0
      %1698 = vmatprep.mubr.f32.mxu0 0.0
      %1699 = vmatmul.mubr.f32.gmra.mxu0 %v1602
      %v1700 = vpop.f32.mrf.mxu0
      %v1701 = vadd.f32 0.0, %v1700
      %v1702 = vpop.f32.mrf.mxu0
      %1703 = vmatprep.mubr.f32.mxu0 0.0
      %1704 = vmatmul.mubr.f32.gmra.mxu0 %v1605
      %v1705 = vpop.f32.mrf.mxu0
      %v1706 = vadd.f32 0.0, %v1705
      %v1707 = vpop.f32.mrf.mxu0
      %1708 = vmatprep.mubr.f32.mxu0 0.0
      %1709 = vmatmul.mubr.f32.gmra.mxu0 %v1608
      %v1710 = vpop.f32.mrf.mxu0
      %v1711 = vadd.f32 0.0, %v1710
      %v1712 = vpop.f32.mrf.mxu0
      %1713 = vmatprep.mubr.f32.mxu0 0.0
      %1714 = vmatmul.mubr.f32.gmra.mxu0 %v1611
      %v1715 = vpop.f32.mrf.mxu0
      %v1716 = vadd.f32 0.0, %v1715
      %v1717 = vpop.f32.mrf.mxu0
      %1718 = vmatprep.mubr.f32.mxu0 0.0
      %1719 = vmatmul.mubr.f32.gmra.mxu0 %v1614
      %v1720 = vpop.f32.mrf.mxu0
      %v1721 = vadd.f32 0.0, %v1720
      %v1722 = vpop.f32.mrf.mxu0
      %1723 = vdwg.mxu0
      %v1724 = vadd.f32 %v1574, %v1686
      %v1725 = vadd.f32 %v1575, %v1691
      %v1726 = vadd.f32 %v1576, %v1696
      %v1727 = vadd.f32 %v1577, %v1701
      %v1728 = vadd.f32 %v1578, %v1706
      %v1729 = vadd.f32 %v1579, %v1711
      %v1730 = vadd.f32 %v1580, %v1716
      %v1731 = vadd.f32 %v1581, %v1721
      %s1732 = scalar_lea.vmem [#allocation2], 48
      %v1733 = vld [vmem:[%s1732] sm:$0xff]
      %v1734 = vld [vmem:[%s1732 + $0x10] sm:$0xff]
      %v1735 = vld [vmem:[%s1732 + $0x20] sm:$0xff]
      %v1736 = vld [vmem:[%s1732 + $0x30] sm:$0xff]
      %v1737 = vld [vmem:[%s1732 + $0x40] sm:$0xff]
      %v1738 = vld [vmem:[%s1732 + $0x50] sm:$0xff]
      %v1739 = vld [vmem:[%s1732 + $0x60] sm:$0xff]
      %v1740 = vld [vmem:[%s1732 + $0x70] sm:$0xff]
      %s1741 = scalar_lea.vmem %s1, 24
      %v1742 = vld [vmem:[%s1741] sm:$0xf]
      %v1744 = vsel %vm709, %v1733, 0
      %v1747 = vsel %vm709, %v1734, 0
      %v1750 = vsel %vm709, %v1735, 0
      %v1753 = vsel %vm709, %v1736, 0
      %v1756 = vsel %vm709, %v1737, 0
      %v1759 = vsel %vm709, %v1738, 0
      %v1762 = vsel %vm709, %v1739, 0
      %v1765 = vsel %vm709, %v1740, 0
      %v1768 = vsel %vm891, %v1742, 0
      %1770 = vmatprep.subr.mxu0 0.0
      %1771 = vmatpush1.msra.mxu0 0.0
      %1772 = vmatprep.subr.mxu0 0.0
      %1773 = vmatpush1.msra.mxu0 0.0
      %1774 = vmatprep.subr.mxu0 0.0
      %1775 = vmatpush1.msra.mxu0 0.0
      %1776 = vmatprep.subr.mxu0 0.0
      %1777 = vmatpush1.msra.mxu0 0.0
      %1778 = vmatprep.subr.mxu0 0.0
      %1779 = vmatpush1.msra.mxu0 0.0
      %1780 = vmatprep.subr.mxu0 0.0
      %1781 = vmatpush1.msra.mxu0 0.0
      %1782 = vmatprep.subr.mxu0 0.0
      %1783 = vmatpush1.msra.mxu0 0.0
      %1784 = vmatprep.subr.mxu0 0.0
      %1785 = vmatpush1.msra.mxu0 0.0
      %1786 = vmatprep.subr.mxu0 0.0
      %1787 = vmatpush1.msra.mxu0 0.0
      %1788 = vmatprep.subr.mxu0 0.0
      %1789 = vmatpush1.msra.mxu0 0.0
      %1790 = vmatprep.subr.mxu0 0.0
      %1791 = vmatpush1.msra.mxu0 0.0
      %1792 = vmatprep.subr.mxu0 0.0
      %1793 = vmatpush1.msra.mxu0 0.0
      %1794 = vmatprep.subr.mxu0 0.0
      %1795 = vmatpush1.msra.mxu0 0.0
      %1796 = vmatprep.subr.mxu0 0.0
      %1797 = vmatpush1.msra.mxu0 0.0
      %1798 = vmatprep.subr.mxu0 0.0
      %1799 = vmatpush1.msra.mxu0 0.0
      %1800 = vmatprep.subr.mxu0 0.0
      %1801 = vmatpush1.msra.mxu0 %v1768
      %1802 = vmatprep.subr.mxu0 0.0
      %1803 = vmatpush2.msra.mxu0 0.0
      %1804 = vmatprep.subr.mxu0 0.0
      %1805 = vmatpush2.msra.mxu0 0.0
      %1806 = vmatprep.subr.mxu0 0.0
      %1807 = vmatpush2.msra.mxu0 0.0
      %1808 = vmatprep.subr.mxu0 0.0
      %1809 = vmatpush2.msra.mxu0 0.0
      %1810 = vmatprep.subr.mxu0 0.0
      %1811 = vmatpush2.msra.mxu0 0.0
      %1812 = vmatprep.subr.mxu0 0.0
      %1813 = vmatpush2.msra.mxu0 0.0
      %1814 = vmatprep.subr.mxu0 0.0
      %1815 = vmatpush2.msra.mxu0 0.0
      %1816 = vmatprep.subr.mxu0 0.0
      %1817 = vmatpush2.msra.mxu0 0.0
      %1818 = vmatprep.subr.mxu0 0.0
      %1819 = vmatpush2.msra.mxu0 0.0
      %1820 = vmatprep.subr.mxu0 0.0
      %1821 = vmatpush2.msra.mxu0 0.0
      %1822 = vmatprep.subr.mxu0 0.0
      %1823 = vmatpush2.msra.mxu0 0.0
      %1824 = vmatprep.subr.mxu0 0.0
      %1825 = vmatpush2.msra.mxu0 0.0
      %1826 = vmatprep.subr.mxu0 0.0
      %1827 = vmatpush2.msra.mxu0 0.0
      %1828 = vmatprep.subr.mxu0 0.0
      %1829 = vmatpush2.msra.mxu0 0.0
      %1830 = vmatprep.subr.mxu0 0.0
      %1831 = vmatpush2.msra.mxu0 0.0
      %1832 = vmatprep.subr.mxu0 0.0
      %1833 = vmatpush2.msra.mxu0 0.0
      %1834 = vmatprep.mubr.f32.mxu0 0.0
      %1835 = vmatmul.mubr.f32.gmra.mxu0 %v1744
      %v1836 = vpop.f32.mrf.mxu0
      %v1837 = vadd.f32 0.0, %v1836
      %v1838 = vpop.f32.mrf.mxu0
      %1839 = vmatprep.mubr.f32.mxu0 0.0
      %1840 = vmatmul.mubr.f32.gmra.mxu0 %v1747
      %v1841 = vpop.f32.mrf.mxu0
      %v1842 = vadd.f32 0.0, %v1841
      %v1843 = vpop.f32.mrf.mxu0
      %1844 = vmatprep.mubr.f32.mxu0 0.0
      %1845 = vmatmul.mubr.f32.gmra.mxu0 %v1750
      %v1846 = vpop.f32.mrf.mxu0
      %v1847 = vadd.f32 0.0, %v1846
      %v1848 = vpop.f32.mrf.mxu0
      %1849 = vmatprep.mubr.f32.mxu0 0.0
      %1850 = vmatmul.mubr.f32.gmra.mxu0 %v1753
      %v1851 = vpop.f32.mrf.mxu0
      %v1852 = vadd.f32 0.0, %v1851
      %v1853 = vpop.f32.mrf.mxu0
      %1854 = vmatprep.mubr.f32.mxu0 0.0
      %1855 = vmatmul.mubr.f32.gmra.mxu0 %v1756
      %v1856 = vpop.f32.mrf.mxu0
      %v1857 = vadd.f32 0.0, %v1856
      %v1858 = vpop.f32.mrf.mxu0
      %1859 = vmatprep.mubr.f32.mxu0 0.0
      %1860 = vmatmul.mubr.f32.gmra.mxu0 %v1759
      %v1861 = vpop.f32.mrf.mxu0
      %v1862 = vadd.f32 0.0, %v1861
      %v1863 = vpop.f32.mrf.mxu0
      %1864 = vmatprep.mubr.f32.mxu0 0.0
      %1865 = vmatmul.mubr.f32.gmra.mxu0 %v1762
      %v1866 = vpop.f32.mrf.mxu0
      %v1867 = vadd.f32 0.0, %v1866
      %v1868 = vpop.f32.mrf.mxu0
      %1869 = vmatprep.mubr.f32.mxu0 0.0
      %1870 = vmatmul.mubr.f32.gmra.mxu0 %v1765
      %v1871 = vpop.f32.mrf.mxu0
      %v1872 = vadd.f32 0.0, %v1871
      %v1873 = vpop.f32.mrf.mxu0
      %1874 = vdwg.mxu0
      %v1875 = vadd.f32 %v1724, %v1837
      %v1876 = vadd.f32 %v1725, %v1842
      %v1877 = vadd.f32 %v1726, %v1847
      %v1878 = vadd.f32 %v1727, %v1852
      %v1879 = vadd.f32 %v1728, %v1857
      %v1880 = vadd.f32 %v1729, %v1862
      %v1881 = vadd.f32 %v1730, %v1867
      %v1882 = vadd.f32 %v1731, %v1872
      %v1883 = vld [vmem:[%s1732 + $0x1] sm:$0xff]
      %v1884 = vld [vmem:[%s1732 + $0x11] sm:$0xff]
      %v1885 = vld [vmem:[%s1732 + $0x21] sm:$0xff]
      %v1886 = vld [vmem:[%s1732 + $0x31] sm:$0xff]
      %v1887 = vld [vmem:[%s1732 + $0x41] sm:$0xff]
      %v1888 = vld [vmem:[%s1732 + $0x51] sm:$0xff]
      %v1889 = vld [vmem:[%s1732 + $0x61] sm:$0xff]
      %v1890 = vld [vmem:[%s1732 + $0x71] sm:$0xff]
      %s1891 = scalar_lea.vmem %s1, 28
      %v1892 = vld [vmem:[%s1891] sm:$0xf]
      %v1894 = vsel %vm709, %v1883, 0
      %v1897 = vsel %vm709, %v1884, 0
      %v1900 = vsel %vm709, %v1885, 0
      %v1903 = vsel %vm709, %v1886, 0
      %v1906 = vsel %vm709, %v1887, 0
      %v1909 = vsel %vm709, %v1888, 0
      %v1912 = vsel %vm709, %v1889, 0
      %v1915 = vsel %vm709, %v1890, 0
      %v1918 = vsel %vm891, %v1892, 0
      %1920 = vmatprep.subr.mxu0 0.0
      %1921 = vmatpush1.msra.mxu0 0.0
      %1922 = vmatprep.subr.mxu0 0.0
      %1923 = vmatpush1.msra.mxu0 0.0
      %1924 = vmatprep.subr.mxu0 0.0
      %1925 = vmatpush1.msra.mxu0 0.0
      %1926 = vmatprep.subr.mxu0 0.0
      %1927 = vmatpush1.msra.mxu0 0.0
      %1928 = vmatprep.subr.mxu0 0.0
      %1929 = vmatpush1.msra.mxu0 0.0
      %1930 = vmatprep.subr.mxu0 0.0
      %1931 = vmatpush1.msra.mxu0 0.0
      %1932 = vmatprep.subr.mxu0 0.0
      %1933 = vmatpush1.msra.mxu0 0.0
      %1934 = vmatprep.subr.mxu0 0.0
      %1935 = vmatpush1.msra.mxu0 0.0
      %1936 = vmatprep.subr.mxu0 0.0
      %1937 = vmatpush1.msra.mxu0 0.0
      %1938 = vmatprep.subr.mxu0 0.0
      %1939 = vmatpush1.msra.mxu0 0.0
      %1940 = vmatprep.subr.mxu0 0.0
      %1941 = vmatpush1.msra.mxu0 0.0
      %1942 = vmatprep.subr.mxu0 0.0
      %1943 = vmatpush1.msra.mxu0 0.0
      %1944 = vmatprep.subr.mxu0 0.0
      %1945 = vmatpush1.msra.mxu0 0.0
      %1946 = vmatprep.subr.mxu0 0.0
      %1947 = vmatpush1.msra.mxu0 0.0
      %1948 = vmatprep.subr.mxu0 0.0
      %1949 = vmatpush1.msra.mxu0 0.0
      %1950 = vmatprep.subr.mxu0 0.0
      %1951 = vmatpush1.msra.mxu0 %v1918
      %1952 = vmatprep.subr.mxu0 0.0
      %1953 = vmatpush2.msra.mxu0 0.0
      %1954 = vmatprep.subr.mxu0 0.0
      %1955 = vmatpush2.msra.mxu0 0.0
      %1956 = vmatprep.subr.mxu0 0.0
      %1957 = vmatpush2.msra.mxu0 0.0
      %1958 = vmatprep.subr.mxu0 0.0
      %1959 = vmatpush2.msra.mxu0 0.0
      %1960 = vmatprep.subr.mxu0 0.0
      %1961 = vmatpush2.msra.mxu0 0.0
      %1962 = vmatprep.subr.mxu0 0.0
      %1963 = vmatpush2.msra.mxu0 0.0
      %1964 = vmatprep.subr.mxu0 0.0
      %1965 = vmatpush2.msra.mxu0 0.0
      %1966 = vmatprep.subr.mxu0 0.0
      %1967 = vmatpush2.msra.mxu0 0.0
      %1968 = vmatprep.subr.mxu0 0.0
      %1969 = vmatpush2.msra.mxu0 0.0
      %1970 = vmatprep.subr.mxu0 0.0
      %1971 = vmatpush2.msra.mxu0 0.0
      %1972 = vmatprep.subr.mxu0 0.0
      %1973 = vmatpush2.msra.mxu0 0.0
      %1974 = vmatprep.subr.mxu0 0.0
      %1975 = vmatpush2.msra.mxu0 0.0
      %1976 = vmatprep.subr.mxu0 0.0
      %1977 = vmatpush2.msra.mxu0 0.0
      %1978 = vmatprep.subr.mxu0 0.0
      %1979 = vmatpush2.msra.mxu0 0.0
      %1980 = vmatprep.subr.mxu0 0.0
      %1981 = vmatpush2.msra.mxu0 0.0
      %1982 = vmatprep.subr.mxu0 0.0
      %1983 = vmatpush2.msra.mxu0 0.0
      %1984 = vmatprep.mubr.f32.mxu0 0.0
      %1985 = vmatmul.mubr.f32.gmra.mxu0 %v1894
      %v1986 = vpop.f32.mrf.mxu0
      %v1987 = vadd.f32 0.0, %v1986
      %v1988 = vpop.f32.mrf.mxu0
      %1989 = vmatprep.mubr.f32.mxu0 0.0
      %1990 = vmatmul.mubr.f32.gmra.mxu0 %v1897
      %v1991 = vpop.f32.mrf.mxu0
      %v1992 = vadd.f32 0.0, %v1991
      %v1993 = vpop.f32.mrf.mxu0
      %1994 = vmatprep.mubr.f32.mxu0 0.0
      %1995 = vmatmul.mubr.f32.gmra.mxu0 %v1900
      %v1996 = vpop.f32.mrf.mxu0
      %v1997 = vadd.f32 0.0, %v1996
      %v1998 = vpop.f32.mrf.mxu0
      %1999 = vmatprep.mubr.f32.mxu0 0.0
      %2000 = vmatmul.mubr.f32.gmra.mxu0 %v1903
      %v2001 = vpop.f32.mrf.mxu0
      %v2002 = vadd.f32 0.0, %v2001
      %v2003 = vpop.f32.mrf.mxu0
      %2004 = vmatprep.mubr.f32.mxu0 0.0
      %2005 = vmatmul.mubr.f32.gmra.mxu0 %v1906
      %v2006 = vpop.f32.mrf.mxu0
      %v2007 = vadd.f32 0.0, %v2006
      %v2008 = vpop.f32.mrf.mxu0
      %2009 = vmatprep.mubr.f32.mxu0 0.0
      %2010 = vmatmul.mubr.f32.gmra.mxu0 %v1909
      %v2011 = vpop.f32.mrf.mxu0
      %v2012 = vadd.f32 0.0, %v2011
      %v2013 = vpop.f32.mrf.mxu0
      %2014 = vmatprep.mubr.f32.mxu0 0.0
      %2015 = vmatmul.mubr.f32.gmra.mxu0 %v1912
      %v2016 = vpop.f32.mrf.mxu0
      %v2017 = vadd.f32 0.0, %v2016
      %v2018 = vpop.f32.mrf.mxu0
      %2019 = vmatprep.mubr.f32.mxu0 0.0
      %2020 = vmatmul.mubr.f32.gmra.mxu0 %v1915
      %v2021 = vpop.f32.mrf.mxu0
      %v2022 = vadd.f32 0.0, %v2021
      %v2023 = vpop.f32.mrf.mxu0
      %2024 = vdwg.mxu0
      %v2025 = vadd.f32 %v1875, %v1987
      %v2026 = vadd.f32 %v1876, %v1992
      %v2027 = vadd.f32 %v1877, %v1997
      %v2028 = vadd.f32 %v1878, %v2002
      %v2029 = vadd.f32 %v1879, %v2007
      %v2030 = vadd.f32 %v1880, %v2012
      %v2031 = vadd.f32 %v1881, %v2017
      %v2032 = vadd.f32 %v1882, %v2022
      %v2033 = vld [vmem:[%s1732 + $0x2] sm:$0xff]
      %v2034 = vld [vmem:[%s1732 + $0x12] sm:$0xff]
      %v2035 = vld [vmem:[%s1732 + $0x22] sm:$0xff]
      %v2036 = vld [vmem:[%s1732 + $0x32] sm:$0xff]
      %v2037 = vld [vmem:[%s1732 + $0x42] sm:$0xff]
      %v2038 = vld [vmem:[%s1732 + $0x52] sm:$0xff]
      %v2039 = vld [vmem:[%s1732 + $0x62] sm:$0xff]
      %v2040 = vld [vmem:[%s1732 + $0x72] sm:$0xff]
      %s2041 = scalar_lea.vmem %s1, 32
      %v2042 = vld [vmem:[%s2041] sm:$0xf]
      %v2044 = vsel %vm709, %v2033, 0
      %v2047 = vsel %vm709, %v2034, 0
      %v2050 = vsel %vm709, %v2035, 0
      %v2053 = vsel %vm709, %v2036, 0
      %v2056 = vsel %vm709, %v2037, 0
      %v2059 = vsel %vm709, %v2038, 0
      %v2062 = vsel %vm709, %v2039, 0
      %v2065 = vsel %vm709, %v2040, 0
      %v2068 = vsel %vm891, %v2042, 0
      %2070 = vmatprep.subr.mxu0 0.0
      %2071 = vmatpush1.msra.mxu0 0.0
      %2072 = vmatprep.subr.mxu0 0.0
      %2073 = vmatpush1.msra.mxu0 0.0
      %2074 = vmatprep.subr.mxu0 0.0
      %2075 = vmatpush1.msra.mxu0 0.0
      %2076 = vmatprep.subr.mxu0 0.0
      %2077 = vmatpush1.msra.mxu0 0.0
      %2078 = vmatprep.subr.mxu0 0.0
      %2079 = vmatpush1.msra.mxu0 0.0
      %2080 = vmatprep.subr.mxu0 0.0
      %2081 = vmatpush1.msra.mxu0 0.0
      %2082 = vmatprep.subr.mxu0 0.0
      %2083 = vmatpush1.msra.mxu0 0.0
      %2084 = vmatprep.subr.mxu0 0.0
      %2085 = vmatpush1.msra.mxu0 0.0
      %2086 = vmatprep.subr.mxu0 0.0
      %2087 = vmatpush1.msra.mxu0 0.0
      %2088 = vmatprep.subr.mxu0 0.0
      %2089 = vmatpush1.msra.mxu0 0.0
      %2090 = vmatprep.subr.mxu0 0.0
      %2091 = vmatpush1.msra.mxu0 0.0
      %2092 = vmatprep.subr.mxu0 0.0
      %2093 = vmatpush1.msra.mxu0 0.0
      %2094 = vmatprep.subr.mxu0 0.0
      %2095 = vmatpush1.msra.mxu0 0.0
      %2096 = vmatprep.subr.mxu0 0.0
      %2097 = vmatpush1.msra.mxu0 0.0
      %2098 = vmatprep.subr.mxu0 0.0
      %2099 = vmatpush1.msra.mxu0 0.0
      %2100 = vmatprep.subr.mxu0 0.0
      %2101 = vmatpush1.msra.mxu0 %v2068
      %2102 = vmatprep.subr.mxu0 0.0
      %2103 = vmatpush2.msra.mxu0 0.0
      %2104 = vmatprep.subr.mxu0 0.0
      %2105 = vmatpush2.msra.mxu0 0.0
      %2106 = vmatprep.subr.mxu0 0.0
      %2107 = vmatpush2.msra.mxu0 0.0
      %2108 = vmatprep.subr.mxu0 0.0
      %2109 = vmatpush2.msra.mxu0 0.0
      %2110 = vmatprep.subr.mxu0 0.0
      %2111 = vmatpush2.msra.mxu0 0.0
      %2112 = vmatprep.subr.mxu0 0.0
      %2113 = vmatpush2.msra.mxu0 0.0
      %2114 = vmatprep.subr.mxu0 0.0
      %2115 = vmatpush2.msra.mxu0 0.0
      %2116 = vmatprep.subr.mxu0 0.0
      %2117 = vmatpush2.msra.mxu0 0.0
      %2118 = vmatprep.subr.mxu0 0.0
      %2119 = vmatpush2.msra.mxu0 0.0
      %2120 = vmatprep.subr.mxu0 0.0
      %2121 = vmatpush2.msra.mxu0 0.0
      %2122 = vmatprep.subr.mxu0 0.0
      %2123 = vmatpush2.msra.mxu0 0.0
      %2124 = vmatprep.subr.mxu0 0.0
      %2125 = vmatpush2.msra.mxu0 0.0
      %2126 = vmatprep.subr.mxu0 0.0
      %2127 = vmatpush2.msra.mxu0 0.0
      %2128 = vmatprep.subr.mxu0 0.0
      %2129 = vmatpush2.msra.mxu0 0.0
      %2130 = vmatprep.subr.mxu0 0.0
      %2131 = vmatpush2.msra.mxu0 0.0
      %2132 = vmatprep.subr.mxu0 0.0
      %2133 = vmatpush2.msra.mxu0 0.0
      %2134 = vmatprep.mubr.f32.mxu0 0.0
      %2135 = vmatmul.mubr.f32.gmra.mxu0 %v2044
      %v2136 = vpop.f32.mrf.mxu0
      %v2137 = vadd.f32 0.0, %v2136
      %v2138 = vpop.f32.mrf.mxu0
      %2139 = vmatprep.mubr.f32.mxu0 0.0
      %2140 = vmatmul.mubr.f32.gmra.mxu0 %v2047
      %v2141 = vpop.f32.mrf.mxu0
      %v2142 = vadd.f32 0.0, %v2141
      %v2143 = vpop.f32.mrf.mxu0
      %2144 = vmatprep.mubr.f32.mxu0 0.0
      %2145 = vmatmul.mubr.f32.gmra.mxu0 %v2050
      %v2146 = vpop.f32.mrf.mxu0
      %v2147 = vadd.f32 0.0, %v2146
      %v2148 = vpop.f32.mrf.mxu0
      %2149 = vmatprep.mubr.f32.mxu0 0.0
      %2150 = vmatmul.mubr.f32.gmra.mxu0 %v2053
      %v2151 = vpop.f32.mrf.mxu0
      %v2152 = vadd.f32 0.0, %v2151
      %v2153 = vpop.f32.mrf.mxu0
      %2154 = vmatprep.mubr.f32.mxu0 0.0
      %2155 = vmatmul.mubr.f32.gmra.mxu0 %v2056
      %v2156 = vpop.f32.mrf.mxu0
      %v2157 = vadd.f32 0.0, %v2156
      %v2158 = vpop.f32.mrf.mxu0
      %2159 = vmatprep.mubr.f32.mxu0 0.0
      %2160 = vmatmul.mubr.f32.gmra.mxu0 %v2059
      %v2161 = vpop.f32.mrf.mxu0
      %v2162 = vadd.f32 0.0, %v2161
      %v2163 = vpop.f32.mrf.mxu0
      %2164 = vmatprep.mubr.f32.mxu0 0.0
      %2165 = vmatmul.mubr.f32.gmra.mxu0 %v2062
      %v2166 = vpop.f32.mrf.mxu0
      %v2167 = vadd.f32 0.0, %v2166
      %v2168 = vpop.f32.mrf.mxu0
      %2169 = vmatprep.mubr.f32.mxu0 0.0
      %2170 = vmatmul.mubr.f32.gmra.mxu0 %v2065
      %v2171 = vpop.f32.mrf.mxu0
      %v2172 = vadd.f32 0.0, %v2171
      %v2173 = vpop.f32.mrf.mxu0
      %2174 = vdwg.mxu0
      %v2175 = vadd.f32 %v2025, %v2137
      %v2176 = vadd.f32 %v2026, %v2142
      %v2177 = vadd.f32 %v2027, %v2147
      %v2178 = vadd.f32 %v2028, %v2152
      %v2179 = vadd.f32 %v2029, %v2157
      %v2180 = vadd.f32 %v2030, %v2162
      %v2181 = vadd.f32 %v2031, %v2167
      %v2182 = vadd.f32 %v2032, %v2172
      %v2183 = vld [vmem:[%s2] sm:$0x1]
      %v2185 = vlaneseq
      %v2186 = vshrl.u32 %v2185, 7
      %v2187 = vsub.s32 0, %v2186
      %v2188 = vrot.slane %v2183, %v2187
      %v2190 = vmul.f32 %v2175, %v2188
      %v2191 = vmul.f32 %v2176, %v2188
      %v2192 = vmul.f32 %v2177, %v2188
      %v2193 = vmul.f32 %v2178, %v2188
      %v2194 = vmul.f32 %v2179, %v2188
      %v2195 = vmul.f32 %v2180, %v2188
      %v2196 = vmul.f32 %v2181, %v2188
      %v2197 = vmul.f32 %v2182, %v2188
      %v2198 = vld [vmem:[%s3] sm:$0x1]
      %v2200 = vlaneseq
      %v2201 = vshrl.u32 %v2200, 7
      %v2202 = vsub.s32 0, %v2201
      %v2203 = vrot.slane %v2198, %v2202
      %v2205 = vadd.f32 %v2190, %v2203
      %v2206 = vadd.f32 %v2191, %v2203
      %v2207 = vadd.f32 %v2192, %v2203
      %v2208 = vadd.f32 %v2193, %v2203
      %v2209 = vadd.f32 %v2194, %v2203
      %v2210 = vadd.f32 %v2195, %v2203
      %v2211 = vadd.f32 %v2196, %v2203
      %v2212 = vadd.f32 %v2197, %v2203
      %v2213 = vmax.f32 %v2205, 0.0
      %v2214 = vmax.f32 %v2206, 0.0
      %v2215 = vmax.f32 %v2207, 0.0
      %v2216 = vmax.f32 %v2208, 0.0
      %v2217 = vmax.f32 %v2209, 0.0
      %v2218 = vmax.f32 %v2210, 0.0
      %v2219 = vmax.f32 %v2211, 0.0
      %v2220 = vmax.f32 %v2212, 0.0
      %s2221 = scalar_lea.vmem [#allocation3], 16
      %2222 = vst.msk [vmem:[%s2221 + $0x1] sm:$0xff] %vm735, %v2213
      %2223 = vst.msk [vmem:[%s2221 + $0x11] sm:$0xff] %vm735, %v2214
      %2224 = vst.msk [vmem:[%s2221 + $0x21] sm:$0xff] %vm735, %v2215
      %2225 = vst.msk [vmem:[%s2221 + $0x31] sm:$0xff] %vm735, %v2216
      %2226 = vst.msk [vmem:[%s2221 + $0x41] sm:$0xff] %vm735, %v2217
      %2227 = vst.msk [vmem:[%s2221 + $0x51] sm:$0xff] %vm735, %v2218
      %2228 = vst.msk [vmem:[%s2221 + $0x61] sm:$0xff] %vm735, %v2219
      %2229 = vst.msk [vmem:[%s2221 + $0x71] sm:$0xff] %vm735, %v2220
      %v2230 = vld [vmem:[#allocation3] sm:$0xff]
      %v2231 = vld [vmem:[#allocation3 + $0x10] sm:$0xff]
      %v2232 = vld [vmem:[#allocation3 + $0x20] sm:$0xff]
      %v2233 = vld [vmem:[#allocation3 + $0x30] sm:$0xff]
      %v2234 = vld [vmem:[#allocation3 + $0x40] sm:$0xff]
      %v2235 = vld [vmem:[#allocation3 + $0x50] sm:$0xff]
      %v2236 = vld [vmem:[#allocation3 + $0x60] sm:$0xff]
      %v2237 = vld [vmem:[#allocation3 + $0x70] sm:$0xff]
      %v2238 = vld [vmem:[%s4] sm:$0xff]
      %v2239 = vld [vmem:[#allocation3 + $0x1] sm:$0xff]
      %v2240 = vld [vmem:[#allocation3 + $0x11] sm:$0xff]
      %v2241 = vld [vmem:[#allocation3 + $0x21] sm:$0xff]
      %v2242 = vld [vmem:[#allocation3 + $0x31] sm:$0xff]
      %v2243 = vld [vmem:[#allocation3 + $0x41] sm:$0xff]
      %v2244 = vld [vmem:[#allocation3 + $0x51] sm:$0xff]
      %v2245 = vld [vmem:[#allocation3 + $0x61] sm:$0xff]
      %v2246 = vld [vmem:[#allocation3 + $0x71] sm:$0xff]
      %s2247 = scalar_lea.vmem %s4, 8
      %v2248 = vld [vmem:[%s2247] sm:$0xff]
      %v2250 = vsel %vm735, %v2239, 0
      %v2253 = vsel %vm735, %v2240, 0
      %v2256 = vsel %vm735, %v2241, 0
      %v2259 = vsel %vm735, %v2242, 0
      %v2262 = vsel %vm735, %v2243, 0
      %v2265 = vsel %vm735, %v2244, 0
      %v2268 = vsel %vm735, %v2245, 0
      %v2271 = vsel %vm735, %v2246, 0
      %2273 = vmatprep.subr.mxu0 0.0
      %2274 = vmatpush1.msra.mxu0 0.0
      %2275 = vmatprep.subr.mxu0 0.0
      %2276 = vmatpush1.msra.mxu0 0.0
      %2277 = vmatprep.subr.mxu0 0.0
      %2278 = vmatpush1.msra.mxu0 0.0
      %2279 = vmatprep.subr.mxu0 0.0
      %2280 = vmatpush1.msra.mxu0 0.0
      %2281 = vmatprep.subr.mxu0 0.0
      %2282 = vmatpush1.msra.mxu0 0.0
      %2283 = vmatprep.subr.mxu0 0.0
      %2284 = vmatpush1.msra.mxu0 0.0
      %2285 = vmatprep.subr.mxu0 0.0
      %2286 = vmatpush1.msra.mxu0 0.0
      %2287 = vmatprep.subr.mxu0 0.0
      %2288 = vmatpush1.msra.mxu0 0.0
      %2289 = vmatprep.subr.mxu0 0.0
      %2290 = vmatpush1.msra.mxu0 0.0
      %2291 = vmatprep.subr.mxu0 0.0
      %2292 = vmatpush1.msra.mxu0 0.0
      %2293 = vmatprep.subr.mxu0 0.0
      %2294 = vmatpush1.msra.mxu0 0.0
      %2295 = vmatprep.subr.mxu0 0.0
      %2296 = vmatpush1.msra.mxu0 0.0
      %2297 = vmatprep.subr.mxu0 0.0
      %2298 = vmatpush1.msra.mxu0 0.0
      %2299 = vmatprep.subr.mxu0 0.0
      %2300 = vmatpush1.msra.mxu0 0.0
      %2301 = vmatprep.subr.mxu0 0.0
      %2302 = vmatpush1.msra.mxu0 0.0
      %2303 = vmatprep.subr.mxu0 0.0
      %2304 = vmatpush1.msra.mxu0 %v2248
      %2305 = vmatprep.subr.mxu0 0.0
      %2306 = vmatpush2.msra.mxu0 0.0
      %2307 = vmatprep.subr.mxu0 0.0
      %2308 = vmatpush2.msra.mxu0 0.0
      %2309 = vmatprep.subr.mxu0 0.0
      %2310 = vmatpush2.msra.mxu0 0.0
      %2311 = vmatprep.subr.mxu0 0.0
      %2312 = vmatpush2.msra.mxu0 0.0
      %2313 = vmatprep.subr.mxu0 0.0
      %2314 = vmatpush2.msra.mxu0 0.0
      %2315 = vmatprep.subr.mxu0 0.0
      %2316 = vmatpush2.msra.mxu0 0.0
      %2317 = vmatprep.subr.mxu0 0.0
      %2318 = vmatpush2.msra.mxu0 0.0
      %2319 = vmatprep.subr.mxu0 0.0
      %2320 = vmatpush2.msra.mxu0 0.0
      %2321 = vmatprep.subr.mxu0 0.0
      %2322 = vmatpush2.msra.mxu0 0.0
      %2323 = vmatprep.subr.mxu0 0.0
      %2324 = vmatpush2.msra.mxu0 0.0
      %2325 = vmatprep.subr.mxu0 0.0
      %2326 = vmatpush2.msra.mxu0 0.0
      %2327 = vmatprep.subr.mxu0 0.0
      %2328 = vmatpush2.msra.mxu0 0.0
      %2329 = vmatprep.subr.mxu0 0.0
      %2330 = vmatpush2.msra.mxu0 0.0
      %2331 = vmatprep.subr.mxu0 0.0
      %2332 = vmatpush2.msra.mxu0 0.0
      %2333 = vmatprep.subr.mxu0 0.0
      %2334 = vmatpush2.msra.mxu0 0.0
      %2335 = vmatprep.subr.mxu0 0.0
      %2336 = vmatpush2.msra.mxu0 0.0
      %2337 = vmatprep.mubr.f32.mxu0 0.0
      %2338 = vmatmul.mubr.f32.gmra.mxu0 %v2250
      %v2339 = vpop.f32.mrf.mxu0
      %v2340 = vadd.f32 0.0, %v2339
      %v2341 = vpop.f32.mrf.mxu0
      %2342 = vmatprep.mubr.f32.mxu0 0.0
      %2343 = vmatmul.mubr.f32.gmra.mxu0 %v2253
      %v2344 = vpop.f32.mrf.mxu0
      %v2345 = vadd.f32 0.0, %v2344
      %v2346 = vpop.f32.mrf.mxu0
      %2347 = vmatprep.mubr.f32.mxu0 0.0
      %2348 = vmatmul.mubr.f32.gmra.mxu0 %v2256
      %v2349 = vpop.f32.mrf.mxu0
      %v2350 = vadd.f32 0.0, %v2349
      %v2351 = vpop.f32.mrf.mxu0
      %2352 = vmatprep.mubr.f32.mxu0 0.0
      %2353 = vmatmul.mubr.f32.gmra.mxu0 %v2259
      %v2354 = vpop.f32.mrf.mxu0
      %v2355 = vadd.f32 0.0, %v2354
      %v2356 = vpop.f32.mrf.mxu0
      %2357 = vmatprep.mubr.f32.mxu0 0.0
      %2358 = vmatmul.mubr.f32.gmra.mxu0 %v2262
      %v2359 = vpop.f32.mrf.mxu0
      %v2360 = vadd.f32 0.0, %v2359
      %v2361 = vpop.f32.mrf.mxu0
      %2362 = vmatprep.mubr.f32.mxu0 0.0
      %2363 = vmatmul.mubr.f32.gmra.mxu0 %v2265
      %v2364 = vpop.f32.mrf.mxu0
      %v2365 = vadd.f32 0.0, %v2364
      %v2366 = vpop.f32.mrf.mxu0
      %2367 = vmatprep.mubr.f32.mxu0 0.0
      %2368 = vmatmul.mubr.f32.gmra.mxu0 %v2268
      %v2369 = vpop.f32.mrf.mxu0
      %v2370 = vadd.f32 0.0, %v2369
      %v2371 = vpop.f32.mrf.mxu0
      %2372 = vmatprep.mubr.f32.mxu0 0.0
      %2373 = vmatmul.mubr.f32.gmra.mxu0 %v2271
      %v2374 = vpop.f32.mrf.mxu0
      %v2375 = vadd.f32 0.0, %v2374
      %v2376 = vpop.f32.mrf.mxu0
      %2377 = vdwg.mxu0
      %v2379 = vsel %vm735, %v2230, 0
      %v2382 = vsel %vm735, %v2231, 0
      %v2385 = vsel %vm735, %v2232, 0
      %v2388 = vsel %vm735, %v2233, 0
      %v2391 = vsel %vm735, %v2234, 0
      %v2394 = vsel %vm735, %v2235, 0
      %v2397 = vsel %vm735, %v2236, 0
      %v2400 = vsel %vm735, %v2237, 0
      %2402 = vmatprep.subr.mxu0 0.0
      %2403 = vmatpush1.msra.mxu0 0.0
      %2404 = vmatprep.subr.mxu0 0.0
      %2405 = vmatpush1.msra.mxu0 0.0
      %2406 = vmatprep.subr.mxu0 0.0
      %2407 = vmatpush1.msra.mxu0 0.0
      %2408 = vmatprep.subr.mxu0 0.0
      %2409 = vmatpush1.msra.mxu0 0.0
      %2410 = vmatprep.subr.mxu0 0.0
      %2411 = vmatpush1.msra.mxu0 0.0
      %2412 = vmatprep.subr.mxu0 0.0
      %2413 = vmatpush1.msra.mxu0 0.0
      %2414 = vmatprep.subr.mxu0 0.0
      %2415 = vmatpush1.msra.mxu0 0.0
      %2416 = vmatprep.subr.mxu0 0.0
      %2417 = vmatpush1.msra.mxu0 0.0
      %2418 = vmatprep.subr.mxu0 0.0
      %2419 = vmatpush1.msra.mxu0 0.0
      %2420 = vmatprep.subr.mxu0 0.0
      %2421 = vmatpush1.msra.mxu0 0.0
      %2422 = vmatprep.subr.mxu0 0.0
      %2423 = vmatpush1.msra.mxu0 0.0
      %2424 = vmatprep.subr.mxu0 0.0
      %2425 = vmatpush1.msra.mxu0 0.0
      %2426 = vmatprep.subr.mxu0 0.0
      %2427 = vmatpush1.msra.mxu0 0.0
      %2428 = vmatprep.subr.mxu0 0.0
      %2429 = vmatpush1.msra.mxu0 0.0
      %2430 = vmatprep.subr.mxu0 0.0
      %2431 = vmatpush1.msra.mxu0 0.0
      %2432 = vmatprep.subr.mxu0 0.0
      %2433 = vmatpush1.msra.mxu0 %v2238
      %2434 = vmatprep.subr.mxu0 0.0
      %2435 = vmatpush2.msra.mxu0 0.0
      %2436 = vmatprep.subr.mxu0 0.0
      %2437 = vmatpush2.msra.mxu0 0.0
      %2438 = vmatprep.subr.mxu0 0.0
      %2439 = vmatpush2.msra.mxu0 0.0
      %2440 = vmatprep.subr.mxu0 0.0
      %2441 = vmatpush2.msra.mxu0 0.0
      %2442 = vmatprep.subr.mxu0 0.0
      %2443 = vmatpush2.msra.mxu0 0.0
      %2444 = vmatprep.subr.mxu0 0.0
      %2445 = vmatpush2.msra.mxu0 0.0
      %2446 = vmatprep.subr.mxu0 0.0
      %2447 = vmatpush2.msra.mxu0 0.0
      %2448 = vmatprep.subr.mxu0 0.0
      %2449 = vmatpush2.msra.mxu0 0.0
      %2450 = vmatprep.subr.mxu0 0.0
      %2451 = vmatpush2.msra.mxu0 0.0
      %2452 = vmatprep.subr.mxu0 0.0
      %2453 = vmatpush2.msra.mxu0 0.0
      %2454 = vmatprep.subr.mxu0 0.0
      %2455 = vmatpush2.msra.mxu0 0.0
      %2456 = vmatprep.subr.mxu0 0.0
      %2457 = vmatpush2.msra.mxu0 0.0
      %2458 = vmatprep.subr.mxu0 0.0
      %2459 = vmatpush2.msra.mxu0 0.0
      %2460 = vmatprep.subr.mxu0 0.0
      %2461 = vmatpush2.msra.mxu0 0.0
      %2462 = vmatprep.subr.mxu0 0.0
      %2463 = vmatpush2.msra.mxu0 0.0
      %2464 = vmatprep.subr.mxu0 0.0
      %2465 = vmatpush2.msra.mxu0 0.0
      %2466 = vmatprep.mubr.f32.mxu0 0.0
      %2467 = vmatmul.mubr.f32.gmra.mxu0 %v2379
      %v2468 = vpop.f32.mrf.mxu0
      %v2469 = vadd.f32 %v2340, %v2468
      %v2470 = vpop.f32.mrf.mxu0
      %2471 = vmatprep.mubr.f32.mxu0 0.0
      %2472 = vmatmul.mubr.f32.gmra.mxu0 %v2382
      %v2473 = vpop.f32.mrf.mxu0
      %v2474 = vadd.f32 %v2345, %v2473
      %v2475 = vpop.f32.mrf.mxu0
      %2476 = vmatprep.mubr.f32.mxu0 0.0
      %2477 = vmatmul.mubr.f32.gmra.mxu0 %v2385
      %v2478 = vpop.f32.mrf.mxu0
      %v2479 = vadd.f32 %v2350, %v2478
      %v2480 = vpop.f32.mrf.mxu0
      %2481 = vmatprep.mubr.f32.mxu0 0.0
      %2482 = vmatmul.mubr.f32.gmra.mxu0 %v2388
      %v2483 = vpop.f32.mrf.mxu0
      %v2484 = vadd.f32 %v2355, %v2483
      %v2485 = vpop.f32.mrf.mxu0
      %2486 = vmatprep.mubr.f32.mxu0 0.0
      %2487 = vmatmul.mubr.f32.gmra.mxu0 %v2391
      %v2488 = vpop.f32.mrf.mxu0
      %v2489 = vadd.f32 %v2360, %v2488
      %v2490 = vpop.f32.mrf.mxu0
      %2491 = vmatprep.mubr.f32.mxu0 0.0
      %2492 = vmatmul.mubr.f32.gmra.mxu0 %v2394
      %v2493 = vpop.f32.mrf.mxu0
      %v2494 = vadd.f32 %v2365, %v2493
      %v2495 = vpop.f32.mrf.mxu0
      %2496 = vmatprep.mubr.f32.mxu0 0.0
      %2497 = vmatmul.mubr.f32.gmra.mxu0 %v2397
      %v2498 = vpop.f32.mrf.mxu0
      %v2499 = vadd.f32 %v2370, %v2498
      %v2500 = vpop.f32.mrf.mxu0
      %2501 = vmatprep.mubr.f32.mxu0 0.0
      %2502 = vmatmul.mubr.f32.gmra.mxu0 %v2400
      %v2503 = vpop.f32.mrf.mxu0
      %v2504 = vadd.f32 %v2375, %v2503
      %v2505 = vpop.f32.mrf.mxu0
      %2506 = vdwg.mxu0
      %v2507 = vld [vmem:[#allocation3 + $0x2] sm:$0xff]
      %v2508 = vld [vmem:[#allocation3 + $0x12] sm:$0xff]
      %v2509 = vld [vmem:[#allocation3 + $0x22] sm:$0xff]
      %v2510 = vld [vmem:[#allocation3 + $0x32] sm:$0xff]
      %v2511 = vld [vmem:[#allocation3 + $0x42] sm:$0xff]
      %v2512 = vld [vmem:[#allocation3 + $0x52] sm:$0xff]
      %v2513 = vld [vmem:[#allocation3 + $0x62] sm:$0xff]
      %v2514 = vld [vmem:[#allocation3 + $0x72] sm:$0xff]
      %s2515 = scalar_lea.vmem %s4, 16
      %v2516 = vld [vmem:[%s2515] sm:$0xff]
      %v2518 = vsel %vm735, %v2507, 0
      %v2521 = vsel %vm735, %v2508, 0
      %v2524 = vsel %vm735, %v2509, 0
      %v2527 = vsel %vm735, %v2510, 0
      %v2530 = vsel %vm735, %v2511, 0
      %v2533 = vsel %vm735, %v2512, 0
      %v2536 = vsel %vm735, %v2513, 0
      %v2539 = vsel %vm735, %v2514, 0
      %2541 = vmatprep.subr.mxu0 0.0
      %2542 = vmatpush1.msra.mxu0 0.0
      %2543 = vmatprep.subr.mxu0 0.0
      %2544 = vmatpush1.msra.mxu0 0.0
      %2545 = vmatprep.subr.mxu0 0.0
      %2546 = vmatpush1.msra.mxu0 0.0
      %2547 = vmatprep.subr.mxu0 0.0
      %2548 = vmatpush1.msra.mxu0 0.0
      %2549 = vmatprep.subr.mxu0 0.0
      %2550 = vmatpush1.msra.mxu0 0.0
      %2551 = vmatprep.subr.mxu0 0.0
      %2552 = vmatpush1.msra.mxu0 0.0
      %2553 = vmatprep.subr.mxu0 0.0
      %2554 = vmatpush1.msra.mxu0 0.0
      %2555 = vmatprep.subr.mxu0 0.0
      %2556 = vmatpush1.msra.mxu0 0.0
      %2557 = vmatprep.subr.mxu0 0.0
      %2558 = vmatpush1.msra.mxu0 0.0
      %2559 = vmatprep.subr.mxu0 0.0
      %2560 = vmatpush1.msra.mxu0 0.0
      %2561 = vmatprep.subr.mxu0 0.0
      %2562 = vmatpush1.msra.mxu0 0.0
      %2563 = vmatprep.subr.mxu0 0.0
      %2564 = vmatpush1.msra.mxu0 0.0
      %2565 = vmatprep.subr.mxu0 0.0
      %2566 = vmatpush1.msra.mxu0 0.0
      %2567 = vmatprep.subr.mxu0 0.0
      %2568 = vmatpush1.msra.mxu0 0.0
      %2569 = vmatprep.subr.mxu0 0.0
      %2570 = vmatpush1.msra.mxu0 0.0
      %2571 = vmatprep.subr.mxu0 0.0
      %2572 = vmatpush1.msra.mxu0 %v2516
      %2573 = vmatprep.subr.mxu0 0.0
      %2574 = vmatpush2.msra.mxu0 0.0
      %2575 = vmatprep.subr.mxu0 0.0
      %2576 = vmatpush2.msra.mxu0 0.0
      %2577 = vmatprep.subr.mxu0 0.0
      %2578 = vmatpush2.msra.mxu0 0.0
      %2579 = vmatprep.subr.mxu0 0.0
      %2580 = vmatpush2.msra.mxu0 0.0
      %2581 = vmatprep.subr.mxu0 0.0
      %2582 = vmatpush2.msra.mxu0 0.0
      %2583 = vmatprep.subr.mxu0 0.0
      %2584 = vmatpush2.msra.mxu0 0.0
      %2585 = vmatprep.subr.mxu0 0.0
      %2586 = vmatpush2.msra.mxu0 0.0
      %2587 = vmatprep.subr.mxu0 0.0
      %2588 = vmatpush2.msra.mxu0 0.0
      %2589 = vmatprep.subr.mxu0 0.0
      %2590 = vmatpush2.msra.mxu0 0.0
      %2591 = vmatprep.subr.mxu0 0.0
      %2592 = vmatpush2.msra.mxu0 0.0
      %2593 = vmatprep.subr.mxu0 0.0
      %2594 = vmatpush2.msra.mxu0 0.0
      %2595 = vmatprep.subr.mxu0 0.0
      %2596 = vmatpush2.msra.mxu0 0.0
      %2597 = vmatprep.subr.mxu0 0.0
      %2598 = vmatpush2.msra.mxu0 0.0
      %2599 = vmatprep.subr.mxu0 0.0
      %2600 = vmatpush2.msra.mxu0 0.0
      %2601 = vmatprep.subr.mxu0 0.0
      %2602 = vmatpush2.msra.mxu0 0.0
      %2603 = vmatprep.subr.mxu0 0.0
      %2604 = vmatpush2.msra.mxu0 0.0
      %2605 = vmatprep.mubr.f32.mxu0 0.0
      %2606 = vmatmul.mubr.f32.gmra.mxu0 %v2518
      %v2607 = vpop.f32.mrf.mxu0
      %v2608 = vadd.f32 0.0, %v2607
      %v2609 = vpop.f32.mrf.mxu0
      %2610 = vmatprep.mubr.f32.mxu0 0.0
      %2611 = vmatmul.mubr.f32.gmra.mxu0 %v2521
      %v2612 = vpop.f32.mrf.mxu0
      %v2613 = vadd.f32 0.0, %v2612
      %v2614 = vpop.f32.mrf.mxu0
      %2615 = vmatprep.mubr.f32.mxu0 0.0
      %2616 = vmatmul.mubr.f32.gmra.mxu0 %v2524
      %v2617 = vpop.f32.mrf.mxu0
      %v2618 = vadd.f32 0.0, %v2617
      %v2619 = vpop.f32.mrf.mxu0
      %2620 = vmatprep.mubr.f32.mxu0 0.0
      %2621 = vmatmul.mubr.f32.gmra.mxu0 %v2527
      %v2622 = vpop.f32.mrf.mxu0
      %v2623 = vadd.f32 0.0, %v2622
      %v2624 = vpop.f32.mrf.mxu0
      %2625 = vmatprep.mubr.f32.mxu0 0.0
      %2626 = vmatmul.mubr.f32.gmra.mxu0 %v2530
      %v2627 = vpop.f32.mrf.mxu0
      %v2628 = vadd.f32 0.0, %v2627
      %v2629 = vpop.f32.mrf.mxu0
      %2630 = vmatprep.mubr.f32.mxu0 0.0
      %2631 = vmatmul.mubr.f32.gmra.mxu0 %v2533
      %v2632 = vpop.f32.mrf.mxu0
      %v2633 = vadd.f32 0.0, %v2632
      %v2634 = vpop.f32.mrf.mxu0
      %2635 = vmatprep.mubr.f32.mxu0 0.0
      %2636 = vmatmul.mubr.f32.gmra.mxu0 %v2536
      %v2637 = vpop.f32.mrf.mxu0
      %v2638 = vadd.f32 0.0, %v2637
      %v2639 = vpop.f32.mrf.mxu0
      %2640 = vmatprep.mubr.f32.mxu0 0.0
      %2641 = vmatmul.mubr.f32.gmra.mxu0 %v2539
      %v2642 = vpop.f32.mrf.mxu0
      %v2643 = vadd.f32 0.0, %v2642
      %v2644 = vpop.f32.mrf.mxu0
      %2645 = vdwg.mxu0
      %v2646 = vadd.f32 %v2469, %v2608
      %v2647 = vadd.f32 %v2474, %v2613
      %v2648 = vadd.f32 %v2479, %v2618
      %v2649 = vadd.f32 %v2484, %v2623
      %v2650 = vadd.f32 %v2489, %v2628
      %v2651 = vadd.f32 %v2494, %v2633
      %v2652 = vadd.f32 %v2499, %v2638
      %v2653 = vadd.f32 %v2504, %v2643
      %v2654 = vld [vmem:[%s2221] sm:$0xff]
      %v2655 = vld [vmem:[%s2221 + $0x10] sm:$0xff]
      %v2656 = vld [vmem:[%s2221 + $0x20] sm:$0xff]
      %v2657 = vld [vmem:[%s2221 + $0x30] sm:$0xff]
      %v2658 = vld [vmem:[%s2221 + $0x40] sm:$0xff]
      %v2659 = vld [vmem:[%s2221 + $0x50] sm:$0xff]
      %v2660 = vld [vmem:[%s2221 + $0x60] sm:$0xff]
      %v2661 = vld [vmem:[%s2221 + $0x70] sm:$0xff]
      %s2662 = scalar_lea.vmem %s4, 24
      %v2663 = vld [vmem:[%s2662] sm:$0xff]
      %v2665 = vsel %vm735, %v2654, 0
      %v2668 = vsel %vm735, %v2655, 0
      %v2671 = vsel %vm735, %v2656, 0
      %v2674 = vsel %vm735, %v2657, 0
      %v2677 = vsel %vm735, %v2658, 0
      %v2680 = vsel %vm735, %v2659, 0
      %v2683 = vsel %vm735, %v2660, 0
      %v2686 = vsel %vm735, %v2661, 0
      %2688 = vmatprep.subr.mxu0 0.0
      %2689 = vmatpush1.msra.mxu0 0.0
      %2690 = vmatprep.subr.mxu0 0.0
      %2691 = vmatpush1.msra.mxu0 0.0
      %2692 = vmatprep.subr.mxu0 0.0
      %2693 = vmatpush1.msra.mxu0 0.0
      %2694 = vmatprep.subr.mxu0 0.0
      %2695 = vmatpush1.msra.mxu0 0.0
      %2696 = vmatprep.subr.mxu0 0.0
      %2697 = vmatpush1.msra.mxu0 0.0
      %2698 = vmatprep.subr.mxu0 0.0
      %2699 = vmatpush1.msra.mxu0 0.0
      %2700 = vmatprep.subr.mxu0 0.0
      %2701 = vmatpush1.msra.mxu0 0.0
      %2702 = vmatprep.subr.mxu0 0.0
      %2703 = vmatpush1.msra.mxu0 0.0
      %2704 = vmatprep.subr.mxu0 0.0
      %2705 = vmatpush1.msra.mxu0 0.0
      %2706 = vmatprep.subr.mxu0 0.0
      %2707 = vmatpush1.msra.mxu0 0.0
      %2708 = vmatprep.subr.mxu0 0.0
      %2709 = vmatpush1.msra.mxu0 0.0
      %2710 = vmatprep.subr.mxu0 0.0
      %2711 = vmatpush1.msra.mxu0 0.0
      %2712 = vmatprep.subr.mxu0 0.0
      %2713 = vmatpush1.msra.mxu0 0.0
      %2714 = vmatprep.subr.mxu0 0.0
      %2715 = vmatpush1.msra.mxu0 0.0
      %2716 = vmatprep.subr.mxu0 0.0
      %2717 = vmatpush1.msra.mxu0 0.0
      %2718 = vmatprep.subr.mxu0 0.0
      %2719 = vmatpush1.msra.mxu0 %v2663
      %2720 = vmatprep.subr.mxu0 0.0
      %2721 = vmatpush2.msra.mxu0 0.0
      %2722 = vmatprep.subr.mxu0 0.0
      %2723 = vmatpush2.msra.mxu0 0.0
      %2724 = vmatprep.subr.mxu0 0.0
      %2725 = vmatpush2.msra.mxu0 0.0
      %2726 = vmatprep.subr.mxu0 0.0
      %2727 = vmatpush2.msra.mxu0 0.0
      %2728 = vmatprep.subr.mxu0 0.0
      %2729 = vmatpush2.msra.mxu0 0.0
      %2730 = vmatprep.subr.mxu0 0.0
      %2731 = vmatpush2.msra.mxu0 0.0
      %2732 = vmatprep.subr.mxu0 0.0
      %2733 = vmatpush2.msra.mxu0 0.0
      %2734 = vmatprep.subr.mxu0 0.0
      %2735 = vmatpush2.msra.mxu0 0.0
      %2736 = vmatprep.subr.mxu0 0.0
      %2737 = vmatpush2.msra.mxu0 0.0
      %2738 = vmatprep.subr.mxu0 0.0
      %2739 = vmatpush2.msra.mxu0 0.0
      %2740 = vmatprep.subr.mxu0 0.0
      %2741 = vmatpush2.msra.mxu0 0.0
      %2742 = vmatprep.subr.mxu0 0.0
      %2743 = vmatpush2.msra.mxu0 0.0
      %2744 = vmatprep.subr.mxu0 0.0
      %2745 = vmatpush2.msra.mxu0 0.0
      %2746 = vmatprep.subr.mxu0 0.0
      %2747 = vmatpush2.msra.mxu0 0.0
      %2748 = vmatprep.subr.mxu0 0.0
      %2749 = vmatpush2.msra.mxu0 0.0
      %2750 = vmatprep.subr.mxu0 0.0
      %2751 = vmatpush2.msra.mxu0 0.0
      %2752 = vmatprep.mubr.f32.mxu0 0.0
      %2753 = vmatmul.mubr.f32.gmra.mxu0 %v2665
      %v2754 = vpop.f32.mrf.mxu0
      %v2755 = vadd.f32 0.0, %v2754
      %v2756 = vpop.f32.mrf.mxu0
      %2757 = vmatprep.mubr.f32.mxu0 0.0
      %2758 = vmatmul.mubr.f32.gmra.mxu0 %v2668
      %v2759 = vpop.f32.mrf.mxu0
      %v2760 = vadd.f32 0.0, %v2759
      %v2761 = vpop.f32.mrf.mxu0
      %2762 = vmatprep.mubr.f32.mxu0 0.0
      %2763 = vmatmul.mubr.f32.gmra.mxu0 %v2671
      %v2764 = vpop.f32.mrf.mxu0
      %v2765 = vadd.f32 0.0, %v2764
      %v2766 = vpop.f32.mrf.mxu0
      %2767 = vmatprep.mubr.f32.mxu0 0.0
      %2768 = vmatmul.mubr.f32.gmra.mxu0 %v2674
      %v2769 = vpop.f32.mrf.mxu0
      %v2770 = vadd.f32 0.0, %v2769
      %v2771 = vpop.f32.mrf.mxu0
      %2772 = vmatprep.mubr.f32.mxu0 0.0
      %2773 = vmatmul.mubr.f32.gmra.mxu0 %v2677
      %v2774 = vpop.f32.mrf.mxu0
      %v2775 = vadd.f32 0.0, %v2774
      %v2776 = vpop.f32.mrf.mxu0
      %2777 = vmatprep.mubr.f32.mxu0 0.0
      %2778 = vmatmul.mubr.f32.gmra.mxu0 %v2680
      %v2779 = vpop.f32.mrf.mxu0
      %v2780 = vadd.f32 0.0, %v2779
      %v2781 = vpop.f32.mrf.mxu0
      %2782 = vmatprep.mubr.f32.mxu0 0.0
      %2783 = vmatmul.mubr.f32.gmra.mxu0 %v2683
      %v2784 = vpop.f32.mrf.mxu0
      %v2785 = vadd.f32 0.0, %v2784
      %v2786 = vpop.f32.mrf.mxu0
      %2787 = vmatprep.mubr.f32.mxu0 0.0
      %2788 = vmatmul.mubr.f32.gmra.mxu0 %v2686
      %v2789 = vpop.f32.mrf.mxu0
      %v2790 = vadd.f32 0.0, %v2789
      %v2791 = vpop.f32.mrf.mxu0
      %2792 = vdwg.mxu0
      %v2793 = vadd.f32 %v2646, %v2755
      %v2794 = vadd.f32 %v2647, %v2760
      %v2795 = vadd.f32 %v2648, %v2765
      %v2796 = vadd.f32 %v2649, %v2770
      %v2797 = vadd.f32 %v2650, %v2775
      %v2798 = vadd.f32 %v2651, %v2780
      %v2799 = vadd.f32 %v2652, %v2785
      %v2800 = vadd.f32 %v2653, %v2790
      %v2801 = vld [vmem:[%s2221 + $0x1] sm:$0xff]
      %v2802 = vld [vmem:[%s2221 + $0x11] sm:$0xff]
      %v2803 = vld [vmem:[%s2221 + $0x21] sm:$0xff]
      %v2804 = vld [vmem:[%s2221 + $0x31] sm:$0xff]
      %v2805 = vld [vmem:[%s2221 + $0x41] sm:$0xff]
      %v2806 = vld [vmem:[%s2221 + $0x51] sm:$0xff]
      %v2807 = vld [vmem:[%s2221 + $0x61] sm:$0xff]
      %v2808 = vld [vmem:[%s2221 + $0x71] sm:$0xff]
      %s2809 = scalar_lea.vmem %s4, 32
      %v2810 = vld [vmem:[%s2809] sm:$0xff]
      %v2812 = vsel %vm735, %v2801, 0
      %v2815 = vsel %vm735, %v2802, 0
      %v2818 = vsel %vm735, %v2803, 0
      %v2821 = vsel %vm735, %v2804, 0
      %v2824 = vsel %vm735, %v2805, 0
      %v2827 = vsel %vm735, %v2806, 0
      %v2830 = vsel %vm735, %v2807, 0
      %v2833 = vsel %vm735, %v2808, 0
      %2835 = vmatprep.subr.mxu0 0.0
      %2836 = vmatpush1.msra.mxu0 0.0
      %2837 = vmatprep.subr.mxu0 0.0
      %2838 = vmatpush1.msra.mxu0 0.0
      %2839 = vmatprep.subr.mxu0 0.0
      %2840 = vmatpush1.msra.mxu0 0.0
      %2841 = vmatprep.subr.mxu0 0.0
      %2842 = vmatpush1.msra.mxu0 0.0
      %2843 = vmatprep.subr.mxu0 0.0
      %2844 = vmatpush1.msra.mxu0 0.0
      %2845 = vmatprep.subr.mxu0 0.0
      %2846 = vmatpush1.msra.mxu0 0.0
      %2847 = vmatprep.subr.mxu0 0.0
      %2848 = vmatpush1.msra.mxu0 0.0
      %2849 = vmatprep.subr.mxu0 0.0
      %2850 = vmatpush1.msra.mxu0 0.0
      %2851 = vmatprep.subr.mxu0 0.0
      %2852 = vmatpush1.msra.mxu0 0.0
      %2853 = vmatprep.subr.mxu0 0.0
      %2854 = vmatpush1.msra.mxu0 0.0
      %2855 = vmatprep.subr.mxu0 0.0
      %2856 = vmatpush1.msra.mxu0 0.0
      %2857 = vmatprep.subr.mxu0 0.0
      %2858 = vmatpush1.msra.mxu0 0.0
      %2859 = vmatprep.subr.mxu0 0.0
      %2860 = vmatpush1.msra.mxu0 0.0
      %2861 = vmatprep.subr.mxu0 0.0
      %2862 = vmatpush1.msra.mxu0 0.0
      %2863 = vmatprep.subr.mxu0 0.0
      %2864 = vmatpush1.msra.mxu0 0.0
      %2865 = vmatprep.subr.mxu0 0.0
      %2866 = vmatpush1.msra.mxu0 %v2810
      %2867 = vmatprep.subr.mxu0 0.0
      %2868 = vmatpush2.msra.mxu0 0.0
      %2869 = vmatprep.subr.mxu0 0.0
      %2870 = vmatpush2.msra.mxu0 0.0
      %2871 = vmatprep.subr.mxu0 0.0
      %2872 = vmatpush2.msra.mxu0 0.0
      %2873 = vmatprep.subr.mxu0 0.0
      %2874 = vmatpush2.msra.mxu0 0.0
      %2875 = vmatprep.subr.mxu0 0.0
      %2876 = vmatpush2.msra.mxu0 0.0
      %2877 = vmatprep.subr.mxu0 0.0
      %2878 = vmatpush2.msra.mxu0 0.0
      %2879 = vmatprep.subr.mxu0 0.0
      %2880 = vmatpush2.msra.mxu0 0.0
      %2881 = vmatprep.subr.mxu0 0.0
      %2882 = vmatpush2.msra.mxu0 0.0
      %2883 = vmatprep.subr.mxu0 0.0
      %2884 = vmatpush2.msra.mxu0 0.0
      %2885 = vmatprep.subr.mxu0 0.0
      %2886 = vmatpush2.msra.mxu0 0.0
      %2887 = vmatprep.subr.mxu0 0.0
      %2888 = vmatpush2.msra.mxu0 0.0
      %2889 = vmatprep.subr.mxu0 0.0
      %2890 = vmatpush2.msra.mxu0 0.0
      %2891 = vmatprep.subr.mxu0 0.0
      %2892 = vmatpush2.msra.mxu0 0.0
      %2893 = vmatprep.subr.mxu0 0.0
      %2894 = vmatpush2.msra.mxu0 0.0
      %2895 = vmatprep.subr.mxu0 0.0
      %2896 = vmatpush2.msra.mxu0 0.0
      %2897 = vmatprep.subr.mxu0 0.0
      %2898 = vmatpush2.msra.mxu0 0.0
      %2899 = vmatprep.mubr.f32.mxu0 0.0
      %2900 = vmatmul.mubr.f32.gmra.mxu0 %v2812
      %v2901 = vpop.f32.mrf.mxu0
      %v2902 = vadd.f32 0.0, %v2901
      %v2903 = vpop.f32.mrf.mxu0
      %2904 = vmatprep.mubr.f32.mxu0 0.0
      %2905 = vmatmul.mubr.f32.gmra.mxu0 %v2815
      %v2906 = vpop.f32.mrf.mxu0
      %v2907 = vadd.f32 0.0, %v2906
      %v2908 = vpop.f32.mrf.mxu0
      %2909 = vmatprep.mubr.f32.mxu0 0.0
      %2910 = vmatmul.mubr.f32.gmra.mxu0 %v2818
      %v2911 = vpop.f32.mrf.mxu0
      %v2912 = vadd.f32 0.0, %v2911
      %v2913 = vpop.f32.mrf.mxu0
      %2914 = vmatprep.mubr.f32.mxu0 0.0
      %2915 = vmatmul.mubr.f32.gmra.mxu0 %v2821
      %v2916 = vpop.f32.mrf.mxu0
      %v2917 = vadd.f32 0.0, %v2916
      %v2918 = vpop.f32.mrf.mxu0
      %2919 = vmatprep.mubr.f32.mxu0 0.0
      %2920 = vmatmul.mubr.f32.gmra.mxu0 %v2824
      %v2921 = vpop.f32.mrf.mxu0
      %v2922 = vadd.f32 0.0, %v2921
      %v2923 = vpop.f32.mrf.mxu0
      %2924 = vmatprep.mubr.f32.mxu0 0.0
      %2925 = vmatmul.mubr.f32.gmra.mxu0 %v2827
      %v2926 = vpop.f32.mrf.mxu0
      %v2927 = vadd.f32 0.0, %v2926
      %v2928 = vpop.f32.mrf.mxu0
      %2929 = vmatprep.mubr.f32.mxu0 0.0
      %2930 = vmatmul.mubr.f32.gmra.mxu0 %v2830
      %v2931 = vpop.f32.mrf.mxu0
      %v2932 = vadd.f32 0.0, %v2931
      %v2933 = vpop.f32.mrf.mxu0
      %2934 = vmatprep.mubr.f32.mxu0 0.0
      %2935 = vmatmul.mubr.f32.gmra.mxu0 %v2833
      %v2936 = vpop.f32.mrf.mxu0
      %v2937 = vadd.f32 0.0, %v2936
      %v2938 = vpop.f32.mrf.mxu0
      %2939 = vdwg.mxu0
      %v2940 = vadd.f32 %v2793, %v2902
      %v2941 = vadd.f32 %v2794, %v2907
      %v2942 = vadd.f32 %v2795, %v2912
      %v2943 = vadd.f32 %v2796, %v2917
      %v2944 = vadd.f32 %v2797, %v2922
      %v2945 = vadd.f32 %v2798, %v2927
      %v2946 = vadd.f32 %v2799, %v2932
      %v2947 = vadd.f32 %v2800, %v2937
      %v2948 = vld [vmem:[%s2221 + $0x2] sm:$0xff]
      %v2949 = vld [vmem:[%s2221 + $0x12] sm:$0xff]
      %v2950 = vld [vmem:[%s2221 + $0x22] sm:$0xff]
      %v2951 = vld [vmem:[%s2221 + $0x32] sm:$0xff]
      %v2952 = vld [vmem:[%s2221 + $0x42] sm:$0xff]
      %v2953 = vld [vmem:[%s2221 + $0x52] sm:$0xff]
      %v2954 = vld [vmem:[%s2221 + $0x62] sm:$0xff]
      %v2955 = vld [vmem:[%s2221 + $0x72] sm:$0xff]
      %s2956 = scalar_lea.vmem %s4, 40
      %v2957 = vld [vmem:[%s2956] sm:$0xff]
      %v2959 = vsel %vm735, %v2948, 0
      %v2962 = vsel %vm735, %v2949, 0
      %v2965 = vsel %vm735, %v2950, 0
      %v2968 = vsel %vm735, %v2951, 0
      %v2971 = vsel %vm735, %v2952, 0
      %v2974 = vsel %vm735, %v2953, 0
      %v2977 = vsel %vm735, %v2954, 0
      %v2980 = vsel %vm735, %v2955, 0
      %2982 = vmatprep.subr.mxu0 0.0
      %2983 = vmatpush1.msra.mxu0 0.0
      %2984 = vmatprep.subr.mxu0 0.0
      %2985 = vmatpush1.msra.mxu0 0.0
      %2986 = vmatprep.subr.mxu0 0.0
      %2987 = vmatpush1.msra.mxu0 0.0
      %2988 = vmatprep.subr.mxu0 0.0
      %2989 = vmatpush1.msra.mxu0 0.0
      %2990 = vmatprep.subr.mxu0 0.0
      %2991 = vmatpush1.msra.mxu0 0.0
      %2992 = vmatprep.subr.mxu0 0.0
      %2993 = vmatpush1.msra.mxu0 0.0
      %2994 = vmatprep.subr.mxu0 0.0
      %2995 = vmatpush1.msra.mxu0 0.0
      %2996 = vmatprep.subr.mxu0 0.0
      %2997 = vmatpush1.msra.mxu0 0.0
      %2998 = vmatprep.subr.mxu0 0.0
      %2999 = vmatpush1.msra.mxu0 0.0
      %3000 = vmatprep.subr.mxu0 0.0
      %3001 = vmatpush1.msra.mxu0 0.0
      %3002 = vmatprep.subr.mxu0 0.0
      %3003 = vmatpush1.msra.mxu0 0.0
      %3004 = vmatprep.subr.mxu0 0.0
      %3005 = vmatpush1.msra.mxu0 0.0
      %3006 = vmatprep.subr.mxu0 0.0
      %3007 = vmatpush1.msra.mxu0 0.0
      %3008 = vmatprep.subr.mxu0 0.0
      %3009 = vmatpush1.msra.mxu0 0.0
      %3010 = vmatprep.subr.mxu0 0.0
      %3011 = vmatpush1.msra.mxu0 0.0
      %3012 = vmatprep.subr.mxu0 0.0
      %3013 = vmatpush1.msra.mxu0 %v2957
      %3014 = vmatprep.subr.mxu0 0.0
      %3015 = vmatpush2.msra.mxu0 0.0
      %3016 = vmatprep.subr.mxu0 0.0
      %3017 = vmatpush2.msra.mxu0 0.0
      %3018 = vmatprep.subr.mxu0 0.0
      %3019 = vmatpush2.msra.mxu0 0.0
      %3020 = vmatprep.subr.mxu0 0.0
      %3021 = vmatpush2.msra.mxu0 0.0
      %3022 = vmatprep.subr.mxu0 0.0
      %3023 = vmatpush2.msra.mxu0 0.0
      %3024 = vmatprep.subr.mxu0 0.0
      %3025 = vmatpush2.msra.mxu0 0.0
      %3026 = vmatprep.subr.mxu0 0.0
      %3027 = vmatpush2.msra.mxu0 0.0
      %3028 = vmatprep.subr.mxu0 0.0
      %3029 = vmatpush2.msra.mxu0 0.0
      %3030 = vmatprep.subr.mxu0 0.0
      %3031 = vmatpush2.msra.mxu0 0.0
      %3032 = vmatprep.subr.mxu0 0.0
      %3033 = vmatpush2.msra.mxu0 0.0
      %3034 = vmatprep.subr.mxu0 0.0
      %3035 = vmatpush2.msra.mxu0 0.0
      %3036 = vmatprep.subr.mxu0 0.0
      %3037 = vmatpush2.msra.mxu0 0.0
      %3038 = vmatprep.subr.mxu0 0.0
      %3039 = vmatpush2.msra.mxu0 0.0
      %3040 = vmatprep.subr.mxu0 0.0
      %3041 = vmatpush2.msra.mxu0 0.0
      %3042 = vmatprep.subr.mxu0 0.0
      %3043 = vmatpush2.msra.mxu0 0.0
      %3044 = vmatprep.subr.mxu0 0.0
      %3045 = vmatpush2.msra.mxu0 0.0
      %3046 = vmatprep.mubr.f32.mxu0 0.0
      %3047 = vmatmul.mubr.f32.gmra.mxu0 %v2959
      %v3048 = vpop.f32.mrf.mxu0
      %v3049 = vadd.f32 0.0, %v3048
      %v3050 = vpop.f32.mrf.mxu0
      %3051 = vmatprep.mubr.f32.mxu0 0.0
      %3052 = vmatmul.mubr.f32.gmra.mxu0 %v2962
      %v3053 = vpop.f32.mrf.mxu0
      %v3054 = vadd.f32 0.0, %v3053
      %v3055 = vpop.f32.mrf.mxu0
      %3056 = vmatprep.mubr.f32.mxu0 0.0
      %3057 = vmatmul.mubr.f32.gmra.mxu0 %v2965
      %v3058 = vpop.f32.mrf.mxu0
      %v3059 = vadd.f32 0.0, %v3058
      %v3060 = vpop.f32.mrf.mxu0
      %3061 = vmatprep.mubr.f32.mxu0 0.0
      %3062 = vmatmul.mubr.f32.gmra.mxu0 %v2968
      %v3063 = vpop.f32.mrf.mxu0
      %v3064 = vadd.f32 0.0, %v3063
      %v3065 = vpop.f32.mrf.mxu0
      %3066 = vmatprep.mubr.f32.mxu0 0.0
      %3067 = vmatmul.mubr.f32.gmra.mxu0 %v2971
      %v3068 = vpop.f32.mrf.mxu0
      %v3069 = vadd.f32 0.0, %v3068
      %v3070 = vpop.f32.mrf.mxu0
      %3071 = vmatprep.mubr.f32.mxu0 0.0
      %3072 = vmatmul.mubr.f32.gmra.mxu0 %v2974
      %v3073 = vpop.f32.mrf.mxu0
      %v3074 = vadd.f32 0.0, %v3073
      %v3075 = vpop.f32.mrf.mxu0
      %3076 = vmatprep.mubr.f32.mxu0 0.0
      %3077 = vmatmul.mubr.f32.gmra.mxu0 %v2977
      %v3078 = vpop.f32.mrf.mxu0
      %v3079 = vadd.f32 0.0, %v3078
      %v3080 = vpop.f32.mrf.mxu0
      %3081 = vmatprep.mubr.f32.mxu0 0.0
      %3082 = vmatmul.mubr.f32.gmra.mxu0 %v2980
      %v3083 = vpop.f32.mrf.mxu0
      %v3084 = vadd.f32 0.0, %v3083
      %v3085 = vpop.f32.mrf.mxu0
      %3086 = vdwg.mxu0
      %v3087 = vadd.f32 %v2940, %v3049
      %v3088 = vadd.f32 %v2941, %v3054
      %v3089 = vadd.f32 %v2942, %v3059
      %v3090 = vadd.f32 %v2943, %v3064
      %v3091 = vadd.f32 %v2944, %v3069
      %v3092 = vadd.f32 %v2945, %v3074
      %v3093 = vadd.f32 %v2946, %v3079
      %v3094 = vadd.f32 %v2947, %v3084
      %s3095 = scalar_lea.vmem [#allocation3], 32
      %v3096 = vld [vmem:[%s3095] sm:$0xff]
      %v3097 = vld [vmem:[%s3095 + $0x10] sm:$0xff]
      %v3098 = vld [vmem:[%s3095 + $0x20] sm:$0xff]
      %v3099 = vld [vmem:[%s3095 + $0x30] sm:$0xff]
      %v3100 = vld [vmem:[%s3095 + $0x40] sm:$0xff]
      %v3101 = vld [vmem:[%s3095 + $0x50] sm:$0xff]
      %v3102 = vld [vmem:[%s3095 + $0x60] sm:$0xff]
      %v3103 = vld [vmem:[%s3095 + $0x70] sm:$0xff]
      %s3104 = scalar_lea.vmem %s4, 48
      %v3105 = vld [vmem:[%s3104] sm:$0xff]
      %v3107 = vsel %vm735, %v3096, 0
      %v3110 = vsel %vm735, %v3097, 0
      %v3113 = vsel %vm735, %v3098, 0
      %v3116 = vsel %vm735, %v3099, 0
      %v3119 = vsel %vm735, %v3100, 0
      %v3122 = vsel %vm735, %v3101, 0
      %v3125 = vsel %vm735, %v3102, 0
      %v3128 = vsel %vm735, %v3103, 0
      %3130 = vmatprep.subr.mxu0 0.0
      %3131 = vmatpush1.msra.mxu0 0.0
      %3132 = vmatprep.subr.mxu0 0.0
      %3133 = vmatpush1.msra.mxu0 0.0
      %3134 = vmatprep.subr.mxu0 0.0
      %3135 = vmatpush1.msra.mxu0 0.0
      %3136 = vmatprep.subr.mxu0 0.0
      %3137 = vmatpush1.msra.mxu0 0.0
      %3138 = vmatprep.subr.mxu0 0.0
      %3139 = vmatpush1.msra.mxu0 0.0
      %3140 = vmatprep.subr.mxu0 0.0
      %3141 = vmatpush1.msra.mxu0 0.0
      %3142 = vmatprep.subr.mxu0 0.0
      %3143 = vmatpush1.msra.mxu0 0.0
      %3144 = vmatprep.subr.mxu0 0.0
      %3145 = vmatpush1.msra.mxu0 0.0
      %3146 = vmatprep.subr.mxu0 0.0
      %3147 = vmatpush1.msra.mxu0 0.0
      %3148 = vmatprep.subr.mxu0 0.0
      %3149 = vmatpush1.msra.mxu0 0.0
      %3150 = vmatprep.subr.mxu0 0.0
      %3151 = vmatpush1.msra.mxu0 0.0
      %3152 = vmatprep.subr.mxu0 0.0
      %3153 = vmatpush1.msra.mxu0 0.0
      %3154 = vmatprep.subr.mxu0 0.0
      %3155 = vmatpush1.msra.mxu0 0.0
      %3156 = vmatprep.subr.mxu0 0.0
      %3157 = vmatpush1.msra.mxu0 0.0
      %3158 = vmatprep.subr.mxu0 0.0
      %3159 = vmatpush1.msra.mxu0 0.0
      %3160 = vmatprep.subr.mxu0 0.0
      %3161 = vmatpush1.msra.mxu0 %v3105
      %3162 = vmatprep.subr.mxu0 0.0
      %3163 = vmatpush2.msra.mxu0 0.0
      %3164 = vmatprep.subr.mxu0 0.0
      %3165 = vmatpush2.msra.mxu0 0.0
      %3166 = vmatprep.subr.mxu0 0.0
      %3167 = vmatpush2.msra.mxu0 0.0
      %3168 = vmatprep.subr.mxu0 0.0
      %3169 = vmatpush2.msra.mxu0 0.0
      %3170 = vmatprep.subr.mxu0 0.0
      %3171 = vmatpush2.msra.mxu0 0.0
      %3172 = vmatprep.subr.mxu0 0.0
      %3173 = vmatpush2.msra.mxu0 0.0
      %3174 = vmatprep.subr.mxu0 0.0
      %3175 = vmatpush2.msra.mxu0 0.0
      %3176 = vmatprep.subr.mxu0 0.0
      %3177 = vmatpush2.msra.mxu0 0.0
      %3178 = vmatprep.subr.mxu0 0.0
      %3179 = vmatpush2.msra.mxu0 0.0
      %3180 = vmatprep.subr.mxu0 0.0
      %3181 = vmatpush2.msra.mxu0 0.0
      %3182 = vmatprep.subr.mxu0 0.0
      %3183 = vmatpush2.msra.mxu0 0.0
      %3184 = vmatprep.subr.mxu0 0.0
      %3185 = vmatpush2.msra.mxu0 0.0
      %3186 = vmatprep.subr.mxu0 0.0
      %3187 = vmatpush2.msra.mxu0 0.0
      %3188 = vmatprep.subr.mxu0 0.0
      %3189 = vmatpush2.msra.mxu0 0.0
      %3190 = vmatprep.subr.mxu0 0.0
      %3191 = vmatpush2.msra.mxu0 0.0
      %3192 = vmatprep.subr.mxu0 0.0
      %3193 = vmatpush2.msra.mxu0 0.0
      %3194 = vmatprep.mubr.f32.mxu0 0.0
      %3195 = vmatmul.mubr.f32.gmra.mxu0 %v3107
      %v3196 = vpop.f32.mrf.mxu0
      %v3197 = vadd.f32 0.0, %v3196
      %v3198 = vpop.f32.mrf.mxu0
      %3199 = vmatprep.mubr.f32.mxu0 0.0
      %3200 = vmatmul.mubr.f32.gmra.mxu0 %v3110
      %v3201 = vpop.f32.mrf.mxu0
      %v3202 = vadd.f32 0.0, %v3201
      %v3203 = vpop.f32.mrf.mxu0
      %3204 = vmatprep.mubr.f32.mxu0 0.0
      %3205 = vmatmul.mubr.f32.gmra.mxu0 %v3113
      %v3206 = vpop.f32.mrf.mxu0
      %v3207 = vadd.f32 0.0, %v3206
      %v3208 = vpop.f32.mrf.mxu0
      %3209 = vmatprep.mubr.f32.mxu0 0.0
      %3210 = vmatmul.mubr.f32.gmra.mxu0 %v3116
      %v3211 = vpop.f32.mrf.mxu0
      %v3212 = vadd.f32 0.0, %v3211
      %v3213 = vpop.f32.mrf.mxu0
      %3214 = vmatprep.mubr.f32.mxu0 0.0
      %3215 = vmatmul.mubr.f32.gmra.mxu0 %v3119
      %v3216 = vpop.f32.mrf.mxu0
      %v3217 = vadd.f32 0.0, %v3216
      %v3218 = vpop.f32.mrf.mxu0
      %3219 = vmatprep.mubr.f32.mxu0 0.0
      %3220 = vmatmul.mubr.f32.gmra.mxu0 %v3122
      %v3221 = vpop.f32.mrf.mxu0
      %v3222 = vadd.f32 0.0, %v3221
      %v3223 = vpop.f32.mrf.mxu0
      %3224 = vmatprep.mubr.f32.mxu0 0.0
      %3225 = vmatmul.mubr.f32.gmra.mxu0 %v3125
      %v3226 = vpop.f32.mrf.mxu0
      %v3227 = vadd.f32 0.0, %v3226
      %v3228 = vpop.f32.mrf.mxu0
      %3229 = vmatprep.mubr.f32.mxu0 0.0
      %3230 = vmatmul.mubr.f32.gmra.mxu0 %v3128
      %v3231 = vpop.f32.mrf.mxu0
      %v3232 = vadd.f32 0.0, %v3231
      %v3233 = vpop.f32.mrf.mxu0
      %3234 = vdwg.mxu0
      %v3235 = vadd.f32 %v3087, %v3197
      %v3236 = vadd.f32 %v3088, %v3202
      %v3237 = vadd.f32 %v3089, %v3207
      %v3238 = vadd.f32 %v3090, %v3212
      %v3239 = vadd.f32 %v3091, %v3217
      %v3240 = vadd.f32 %v3092, %v3222
      %v3241 = vadd.f32 %v3093, %v3227
      %v3242 = vadd.f32 %v3094, %v3232
      %v3243 = vld [vmem:[%s3095 + $0x1] sm:$0xff]
      %v3244 = vld [vmem:[%s3095 + $0x11] sm:$0xff]
      %v3245 = vld [vmem:[%s3095 + $0x21] sm:$0xff]
      %v3246 = vld [vmem:[%s3095 + $0x31] sm:$0xff]
      %v3247 = vld [vmem:[%s3095 + $0x41] sm:$0xff]
      %v3248 = vld [vmem:[%s3095 + $0x51] sm:$0xff]
      %v3249 = vld [vmem:[%s3095 + $0x61] sm:$0xff]
      %v3250 = vld [vmem:[%s3095 + $0x71] sm:$0xff]
      %s3251 = scalar_lea.vmem %s4, 56
      %v3252 = vld [vmem:[%s3251] sm:$0xff]
      %v3254 = vsel %vm735, %v3243, 0
      %v3257 = vsel %vm735, %v3244, 0
      %v3260 = vsel %vm735, %v3245, 0
      %v3263 = vsel %vm735, %v3246, 0
      %v3266 = vsel %vm735, %v3247, 0
      %v3269 = vsel %vm735, %v3248, 0
      %v3272 = vsel %vm735, %v3249, 0
      %v3275 = vsel %vm735, %v3250, 0
      %3277 = vmatprep.subr.mxu0 0.0
      %3278 = vmatpush1.msra.mxu0 0.0
      %3279 = vmatprep.subr.mxu0 0.0
      %3280 = vmatpush1.msra.mxu0 0.0
      %3281 = vmatprep.subr.mxu0 0.0
      %3282 = vmatpush1.msra.mxu0 0.0
      %3283 = vmatprep.subr.mxu0 0.0
      %3284 = vmatpush1.msra.mxu0 0.0
      %3285 = vmatprep.subr.mxu0 0.0
      %3286 = vmatpush1.msra.mxu0 0.0
      %3287 = vmatprep.subr.mxu0 0.0
      %3288 = vmatpush1.msra.mxu0 0.0
      %3289 = vmatprep.subr.mxu0 0.0
      %3290 = vmatpush1.msra.mxu0 0.0
      %3291 = vmatprep.subr.mxu0 0.0
      %3292 = vmatpush1.msra.mxu0 0.0
      %3293 = vmatprep.subr.mxu0 0.0
      %3294 = vmatpush1.msra.mxu0 0.0
      %3295 = vmatprep.subr.mxu0 0.0
      %3296 = vmatpush1.msra.mxu0 0.0
      %3297 = vmatprep.subr.mxu0 0.0
      %3298 = vmatpush1.msra.mxu0 0.0
      %3299 = vmatprep.subr.mxu0 0.0
      %3300 = vmatpush1.msra.mxu0 0.0
      %3301 = vmatprep.subr.mxu0 0.0
      %3302 = vmatpush1.msra.mxu0 0.0
      %3303 = vmatprep.subr.mxu0 0.0
      %3304 = vmatpush1.msra.mxu0 0.0
      %3305 = vmatprep.subr.mxu0 0.0
      %3306 = vmatpush1.msra.mxu0 0.0
      %3307 = vmatprep.subr.mxu0 0.0
      %3308 = vmatpush1.msra.mxu0 %v3252
      %3309 = vmatprep.subr.mxu0 0.0
      %3310 = vmatpush2.msra.mxu0 0.0
      %3311 = vmatprep.subr.mxu0 0.0
      %3312 = vmatpush2.msra.mxu0 0.0
      %3313 = vmatprep.subr.mxu0 0.0
      %3314 = vmatpush2.msra.mxu0 0.0
      %3315 = vmatprep.subr.mxu0 0.0
      %3316 = vmatpush2.msra.mxu0 0.0
      %3317 = vmatprep.subr.mxu0 0.0
      %3318 = vmatpush2.msra.mxu0 0.0
      %3319 = vmatprep.subr.mxu0 0.0
      %3320 = vmatpush2.msra.mxu0 0.0
      %3321 = vmatprep.subr.mxu0 0.0
      %3322 = vmatpush2.msra.mxu0 0.0
      %3323 = vmatprep.subr.mxu0 0.0
      %3324 = vmatpush2.msra.mxu0 0.0
      %3325 = vmatprep.subr.mxu0 0.0
      %3326 = vmatpush2.msra.mxu0 0.0
      %3327 = vmatprep.subr.mxu0 0.0
      %3328 = vmatpush2.msra.mxu0 0.0
      %3329 = vmatprep.subr.mxu0 0.0
      %3330 = vmatpush2.msra.mxu0 0.0
      %3331 = vmatprep.subr.mxu0 0.0
      %3332 = vmatpush2.msra.mxu0 0.0
      %3333 = vmatprep.subr.mxu0 0.0
      %3334 = vmatpush2.msra.mxu0 0.0
      %3335 = vmatprep.subr.mxu0 0.0
      %3336 = vmatpush2.msra.mxu0 0.0
      %3337 = vmatprep.subr.mxu0 0.0
      %3338 = vmatpush2.msra.mxu0 0.0
      %3339 = vmatprep.subr.mxu0 0.0
      %3340 = vmatpush2.msra.mxu0 0.0
      %3341 = vmatprep.mubr.f32.mxu0 0.0
      %3342 = vmatmul.mubr.f32.gmra.mxu0 %v3254
      %v3343 = vpop.f32.mrf.mxu0
      %v3344 = vadd.f32 0.0, %v3343
      %v3345 = vpop.f32.mrf.mxu0
      %3346 = vmatprep.mubr.f32.mxu0 0.0
      %3347 = vmatmul.mubr.f32.gmra.mxu0 %v3257
      %v3348 = vpop.f32.mrf.mxu0
      %v3349 = vadd.f32 0.0, %v3348
      %v3350 = vpop.f32.mrf.mxu0
      %3351 = vmatprep.mubr.f32.mxu0 0.0
      %3352 = vmatmul.mubr.f32.gmra.mxu0 %v3260
      %v3353 = vpop.f32.mrf.mxu0
      %v3354 = vadd.f32 0.0, %v3353
      %v3355 = vpop.f32.mrf.mxu0
      %3356 = vmatprep.mubr.f32.mxu0 0.0
      %3357 = vmatmul.mubr.f32.gmra.mxu0 %v3263
      %v3358 = vpop.f32.mrf.mxu0
      %v3359 = vadd.f32 0.0, %v3358
      %v3360 = vpop.f32.mrf.mxu0
      %3361 = vmatprep.mubr.f32.mxu0 0.0
      %3362 = vmatmul.mubr.f32.gmra.mxu0 %v3266
      %v3363 = vpop.f32.mrf.mxu0
      %v3364 = vadd.f32 0.0, %v3363
      %v3365 = vpop.f32.mrf.mxu0
      %3366 = vmatprep.mubr.f32.mxu0 0.0
      %3367 = vmatmul.mubr.f32.gmra.mxu0 %v3269
      %v3368 = vpop.f32.mrf.mxu0
      %v3369 = vadd.f32 0.0, %v3368
      %v3370 = vpop.f32.mrf.mxu0
      %3371 = vmatprep.mubr.f32.mxu0 0.0
      %3372 = vmatmul.mubr.f32.gmra.mxu0 %v3272
      %v3373 = vpop.f32.mrf.mxu0
      %v3374 = vadd.f32 0.0, %v3373
      %v3375 = vpop.f32.mrf.mxu0
      %3376 = vmatprep.mubr.f32.mxu0 0.0
      %3377 = vmatmul.mubr.f32.gmra.mxu0 %v3275
      %v3378 = vpop.f32.mrf.mxu0
      %v3379 = vadd.f32 0.0, %v3378
      %v3380 = vpop.f32.mrf.mxu0
      %3381 = vdwg.mxu0
      %v3382 = vadd.f32 %v3235, %v3344
      %v3383 = vadd.f32 %v3236, %v3349
      %v3384 = vadd.f32 %v3237, %v3354
      %v3385 = vadd.f32 %v3238, %v3359
      %v3386 = vadd.f32 %v3239, %v3364
      %v3387 = vadd.f32 %v3240, %v3369
      %v3388 = vadd.f32 %v3241, %v3374
      %v3389 = vadd.f32 %v3242, %v3379
      %v3390 = vld [vmem:[%s3095 + $0x2] sm:$0xff]
      %v3391 = vld [vmem:[%s3095 + $0x12] sm:$0xff]
      %v3392 = vld [vmem:[%s3095 + $0x22] sm:$0xff]
      %v3393 = vld [vmem:[%s3095 + $0x32] sm:$0xff]
      %v3394 = vld [vmem:[%s3095 + $0x42] sm:$0xff]
      %v3395 = vld [vmem:[%s3095 + $0x52] sm:$0xff]
      %v3396 = vld [vmem:[%s3095 + $0x62] sm:$0xff]
      %v3397 = vld [vmem:[%s3095 + $0x72] sm:$0xff]
      %s3398 = scalar_lea.vmem %s4, 64
      %v3399 = vld [vmem:[%s3398] sm:$0xff]
      %v3401 = vsel %vm735, %v3390, 0
      %v3404 = vsel %vm735, %v3391, 0
      %v3407 = vsel %vm735, %v3392, 0
      %v3410 = vsel %vm735, %v3393, 0
      %v3413 = vsel %vm735, %v3394, 0
      %v3416 = vsel %vm735, %v3395, 0
      %v3419 = vsel %vm735, %v3396, 0
      %v3422 = vsel %vm735, %v3397, 0
      %3424 = vmatprep.subr.mxu0 0.0
      %3425 = vmatpush1.msra.mxu0 0.0
      %3426 = vmatprep.subr.mxu0 0.0
      %3427 = vmatpush1.msra.mxu0 0.0
      %3428 = vmatprep.subr.mxu0 0.0
      %3429 = vmatpush1.msra.mxu0 0.0
      %3430 = vmatprep.subr.mxu0 0.0
      %3431 = vmatpush1.msra.mxu0 0.0
      %3432 = vmatprep.subr.mxu0 0.0
      %3433 = vmatpush1.msra.mxu0 0.0
      %3434 = vmatprep.subr.mxu0 0.0
      %3435 = vmatpush1.msra.mxu0 0.0
      %3436 = vmatprep.subr.mxu0 0.0
      %3437 = vmatpush1.msra.mxu0 0.0
      %3438 = vmatprep.subr.mxu0 0.0
      %3439 = vmatpush1.msra.mxu0 0.0
      %3440 = vmatprep.subr.mxu0 0.0
      %3441 = vmatpush1.msra.mxu0 0.0
      %3442 = vmatprep.subr.mxu0 0.0
      %3443 = vmatpush1.msra.mxu0 0.0
      %3444 = vmatprep.subr.mxu0 0.0
      %3445 = vmatpush1.msra.mxu0 0.0
      %3446 = vmatprep.subr.mxu0 0.0
      %3447 = vmatpush1.msra.mxu0 0.0
      %3448 = vmatprep.subr.mxu0 0.0
      %3449 = vmatpush1.msra.mxu0 0.0
      %3450 = vmatprep.subr.mxu0 0.0
      %3451 = vmatpush1.msra.mxu0 0.0
      %3452 = vmatprep.subr.mxu0 0.0
      %3453 = vmatpush1.msra.mxu0 0.0
      %3454 = vmatprep.subr.mxu0 0.0
      %3455 = vmatpush1.msra.mxu0 %v3399
      %3456 = vmatprep.subr.mxu0 0.0
      %3457 = vmatpush2.msra.mxu0 0.0
      %3458 = vmatprep.subr.mxu0 0.0
      %3459 = vmatpush2.msra.mxu0 0.0
      %3460 = vmatprep.subr.mxu0 0.0
      %3461 = vmatpush2.msra.mxu0 0.0
      %3462 = vmatprep.subr.mxu0 0.0
      %3463 = vmatpush2.msra.mxu0 0.0
      %3464 = vmatprep.subr.mxu0 0.0
      %3465 = vmatpush2.msra.mxu0 0.0
      %3466 = vmatprep.subr.mxu0 0.0
      %3467 = vmatpush2.msra.mxu0 0.0
      %3468 = vmatprep.subr.mxu0 0.0
      %3469 = vmatpush2.msra.mxu0 0.0
      %3470 = vmatprep.subr.mxu0 0.0
      %3471 = vmatpush2.msra.mxu0 0.0
      %3472 = vmatprep.subr.mxu0 0.0
      %3473 = vmatpush2.msra.mxu0 0.0
      %3474 = vmatprep.subr.mxu0 0.0
      %3475 = vmatpush2.msra.mxu0 0.0
      %3476 = vmatprep.subr.mxu0 0.0
      %3477 = vmatpush2.msra.mxu0 0.0
      %3478 = vmatprep.subr.mxu0 0.0
      %3479 = vmatpush2.msra.mxu0 0.0
      %3480 = vmatprep.subr.mxu0 0.0
      %3481 = vmatpush2.msra.mxu0 0.0
      %3482 = vmatprep.subr.mxu0 0.0
      %3483 = vmatpush2.msra.mxu0 0.0
      %3484 = vmatprep.subr.mxu0 0.0
      %3485 = vmatpush2.msra.mxu0 0.0
      %3486 = vmatprep.subr.mxu0 0.0
      %3487 = vmatpush2.msra.mxu0 0.0
      %3488 = vmatprep.mubr.f32.mxu0 0.0
      %3489 = vmatmul.mubr.f32.gmra.mxu0 %v3401
      %v3490 = vpop.f32.mrf.mxu0
      %v3491 = vadd.f32 0.0, %v3490
      %v3492 = vpop.f32.mrf.mxu0
      %3493 = vmatprep.mubr.f32.mxu0 0.0
      %3494 = vmatmul.mubr.f32.gmra.mxu0 %v3404
      %v3495 = vpop.f32.mrf.mxu0
      %v3496 = vadd.f32 0.0, %v3495
      %v3497 = vpop.f32.mrf.mxu0
      %3498 = vmatprep.mubr.f32.mxu0 0.0
      %3499 = vmatmul.mubr.f32.gmra.mxu0 %v3407
      %v3500 = vpop.f32.mrf.mxu0
      %v3501 = vadd.f32 0.0, %v3500
      %v3502 = vpop.f32.mrf.mxu0
      %3503 = vmatprep.mubr.f32.mxu0 0.0
      %3504 = vmatmul.mubr.f32.gmra.mxu0 %v3410
      %v3505 = vpop.f32.mrf.mxu0
      %v3506 = vadd.f32 0.0, %v3505
      %v3507 = vpop.f32.mrf.mxu0
      %3508 = vmatprep.mubr.f32.mxu0 0.0
      %3509 = vmatmul.mubr.f32.gmra.mxu0 %v3413
      %v3510 = vpop.f32.mrf.mxu0
      %v3511 = vadd.f32 0.0, %v3510
      %v3512 = vpop.f32.mrf.mxu0
      %3513 = vmatprep.mubr.f32.mxu0 0.0
      %3514 = vmatmul.mubr.f32.gmra.mxu0 %v3416
      %v3515 = vpop.f32.mrf.mxu0
      %v3516 = vadd.f32 0.0, %v3515
      %v3517 = vpop.f32.mrf.mxu0
      %3518 = vmatprep.mubr.f32.mxu0 0.0
      %3519 = vmatmul.mubr.f32.gmra.mxu0 %v3419
      %v3520 = vpop.f32.mrf.mxu0
      %v3521 = vadd.f32 0.0, %v3520
      %v3522 = vpop.f32.mrf.mxu0
      %3523 = vmatprep.mubr.f32.mxu0 0.0
      %3524 = vmatmul.mubr.f32.gmra.mxu0 %v3422
      %v3525 = vpop.f32.mrf.mxu0
      %v3526 = vadd.f32 0.0, %v3525
      %v3527 = vpop.f32.mrf.mxu0
      %3528 = vdwg.mxu0
      %v3529 = vadd.f32 %v3382, %v3491
      %v3530 = vadd.f32 %v3383, %v3496
      %v3531 = vadd.f32 %v3384, %v3501
      %v3532 = vadd.f32 %v3385, %v3506
      %v3533 = vadd.f32 %v3386, %v3511
      %v3534 = vadd.f32 %v3387, %v3516
      %v3535 = vadd.f32 %v3388, %v3521
      %v3536 = vadd.f32 %v3389, %v3526
      %v3537 = vld [vmem:[%s5] sm:$0x1]
      %v3539 = vlaneseq
      %v3540 = vshrl.u32 %v3539, 7
      %v3541 = vsub.s32 0, %v3540
      %v3542 = vrot.slane %v3537, %v3541
      %v3544 = vmul.f32 %v3529, %v3542
      %v3545 = vmul.f32 %v3530, %v3542
      %v3546 = vmul.f32 %v3531, %v3542
      %v3547 = vmul.f32 %v3532, %v3542
      %v3548 = vmul.f32 %v3533, %v3542
      %v3549 = vmul.f32 %v3534, %v3542
      %v3550 = vmul.f32 %v3535, %v3542
      %v3551 = vmul.f32 %v3536, %v3542
      %v3552 = vld [vmem:[%s6] sm:$0x1]
      %v3554 = vlaneseq
      %v3555 = vshrl.u32 %v3554, 7
      %v3556 = vsub.s32 0, %v3555
      %v3557 = vrot.slane %v3552, %v3556
      %v3559 = vadd.f32 %v3544, %v3557
      %v3560 = vadd.f32 %v3545, %v3557
      %v3561 = vadd.f32 %v3546, %v3557
      %v3562 = vadd.f32 %v3547, %v3557
      %v3563 = vadd.f32 %v3548, %v3557
      %v3564 = vadd.f32 %v3549, %v3557
      %v3565 = vadd.f32 %v3550, %v3557
      %v3566 = vadd.f32 %v3551, %v3557
      %v3567 = vmax.f32 %v3559, 0.0
      %v3568 = vmax.f32 %v3560, 0.0
      %v3569 = vmax.f32 %v3561, 0.0
      %v3570 = vmax.f32 %v3562, 0.0
      %v3571 = vmax.f32 %v3563, 0.0
      %v3572 = vmax.f32 %v3564, 0.0
      %v3573 = vmax.f32 %v3565, 0.0
      %v3574 = vmax.f32 %v3566, 0.0
      %v3575 = vld [vmem:[%s847 + $0x1] sm:$0xff]
      %v3576 = vld [vmem:[%s847 + $0x11] sm:$0xff]
      %v3577 = vld [vmem:[%s847 + $0x21] sm:$0xff]
      %v3578 = vld [vmem:[%s847 + $0x31] sm:$0xff]
      %v3579 = vld [vmem:[%s847 + $0x41] sm:$0xff]
      %v3580 = vld [vmem:[%s847 + $0x51] sm:$0xff]
      %v3581 = vld [vmem:[%s847 + $0x61] sm:$0xff]
      %v3582 = vld [vmem:[%s847 + $0x71] sm:$0xff]
      %v3583 = vld [vmem:[%s7] sm:$0x1]
      %v3585 = vlaneseq
      %v3586 = vshrl.u32 %v3585, 7
      %v3587 = vsub.s32 0, %v3586
      %v3588 = vrot.slane %v3583, %v3587
      %v3590 = vmul.f32 %v3575, %v3588
      %v3591 = vmul.f32 %v3576, %v3588
      %v3592 = vmul.f32 %v3577, %v3588
      %v3593 = vmul.f32 %v3578, %v3588
      %v3594 = vmul.f32 %v3579, %v3588
      %v3595 = vmul.f32 %v3580, %v3588
      %v3596 = vmul.f32 %v3581, %v3588
      %v3597 = vmul.f32 %v3582, %v3588
      %v3598 = vadd.f32 %v3590, 0.0
      %v3599 = vadd.f32 %v3591, 0.0
      %v3600 = vadd.f32 %v3592, 0.0
      %v3601 = vadd.f32 %v3593, 0.0
      %v3602 = vadd.f32 %v3594, 0.0
      %v3603 = vadd.f32 %v3595, 0.0
      %v3604 = vadd.f32 %v3596, 0.0
      %v3605 = vadd.f32 %v3597, 0.0
      %v3606 = vld [vmem:[%s838 + $0x1] sm:$0xff]
      %v3607 = vld [vmem:[%s838 + $0x11] sm:$0xff]
      %v3608 = vld [vmem:[%s838 + $0x21] sm:$0xff]
      %v3609 = vld [vmem:[%s838 + $0x31] sm:$0xff]
      %v3610 = vld [vmem:[%s838 + $0x41] sm:$0xff]
      %v3611 = vld [vmem:[%s838 + $0x51] sm:$0xff]
      %v3612 = vld [vmem:[%s838 + $0x61] sm:$0xff]
      %v3613 = vld [vmem:[%s838 + $0x71] sm:$0xff]
      %s3614 = scalar_lea.vmem %s7, 1
      %v3615 = vld [vmem:[%s3614] sm:$0x1]
      %v3617 = vlaneseq
      %v3618 = vshrl.u32 %v3617, 7
      %v3619 = vsub.s32 0, %v3618
      %v3620 = vrot.slane %v3615, %v3619
      %v3622 = vmul.f32 %v3606, %v3620
      %v3623 = vmul.f32 %v3607, %v3620
      %v3624 = vmul.f32 %v3608, %v3620
      %v3625 = vmul.f32 %v3609, %v3620
      %v3626 = vmul.f32 %v3610, %v3620
      %v3627 = vmul.f32 %v3611, %v3620
      %v3628 = vmul.f32 %v3612, %v3620
      %v3629 = vmul.f32 %v3613, %v3620
      %v3630 = vadd.f32 %v3598, %v3622
      %v3631 = vadd.f32 %v3599, %v3623
      %v3632 = vadd.f32 %v3600, %v3624
      %v3633 = vadd.f32 %v3601, %v3625
      %v3634 = vadd.f32 %v3602, %v3626
      %v3635 = vadd.f32 %v3603, %v3627
      %v3636 = vadd.f32 %v3604, %v3628
      %v3637 = vadd.f32 %v3605, %v3629
      %v3638 = vld [vmem:[%s1732 + $0x1] sm:$0xff]
      %v3639 = vld [vmem:[%s1732 + $0x11] sm:$0xff]
      %v3640 = vld [vmem:[%s1732 + $0x21] sm:$0xff]
      %v3641 = vld [vmem:[%s1732 + $0x31] sm:$0xff]
      %v3642 = vld [vmem:[%s1732 + $0x41] sm:$0xff]
      %v3643 = vld [vmem:[%s1732 + $0x51] sm:$0xff]
      %v3644 = vld [vmem:[%s1732 + $0x61] sm:$0xff]
      %v3645 = vld [vmem:[%s1732 + $0x71] sm:$0xff]
      %s3646 = scalar_lea.vmem %s7, 2
      %v3647 = vld [vmem:[%s3646] sm:$0x1]
      %v3649 = vlaneseq
      %v3650 = vshrl.u32 %v3649, 7
      %v3651 = vsub.s32 0, %v3650
      %v3652 = vrot.slane %v3647, %v3651
      %v3654 = vmul.f32 %v3638, %v3652
      %v3655 = vmul.f32 %v3639, %v3652
      %v3656 = vmul.f32 %v3640, %v3652
      %v3657 = vmul.f32 %v3641, %v3652
      %v3658 = vmul.f32 %v3642, %v3652
      %v3659 = vmul.f32 %v3643, %v3652
      %v3660 = vmul.f32 %v3644, %v3652
      %v3661 = vmul.f32 %v3645, %v3652
      %v3662 = vadd.f32 %v3630, %v3654
      %v3663 = vadd.f32 %v3631, %v3655
      %v3664 = vadd.f32 %v3632, %v3656
      %v3665 = vadd.f32 %v3633, %v3657
      %v3666 = vadd.f32 %v3634, %v3658
      %v3667 = vadd.f32 %v3635, %v3659
      %v3668 = vadd.f32 %v3636, %v3660
      %v3669 = vadd.f32 %v3637, %v3661
      %v3670 = vld [vmem:[%s8] sm:$0x1]
      %v3672 = vlaneseq
      %v3673 = vshrl.u32 %v3672, 7
      %v3674 = vsub.s32 0, %v3673
      %v3675 = vrot.slane %v3670, %v3674
      %v3677 = vadd.f32 %v3662, %v3675
      %v3678 = vadd.f32 %v3663, %v3675
      %v3679 = vadd.f32 %v3664, %v3675
      %v3680 = vadd.f32 %v3665, %v3675
      %v3681 = vadd.f32 %v3666, %v3675
      %v3682 = vadd.f32 %v3667, %v3675
      %v3683 = vadd.f32 %v3668, %v3675
      %v3684 = vadd.f32 %v3669, %v3675
      %v3685 = vand.u32 2147483647, %v3677
      %v3686 = vand.u32 2147483647, %v3678
      %v3687 = vand.u32 2147483647, %v3679
      %v3688 = vand.u32 2147483647, %v3680
      %v3689 = vand.u32 2147483647, %v3681
      %v3690 = vand.u32 2147483647, %v3682
      %v3691 = vand.u32 2147483647, %v3683
      %v3692 = vand.u32 2147483647, %v3684
      %s3693 = scalar_lea.vmem [#allocation4], 8
      %3694 = vst.msk [vmem:[%s3693] sm:$0xff] %vm709, %v3685
      %3695 = vst.msk [vmem:[%s3693 + $0x8] sm:$0xff] %vm709, %v3686
      %3696 = vst.msk [vmem:[%s3693 + $0x10] sm:$0xff] %vm709, %v3687
      %3697 = vst.msk [vmem:[%s3693 + $0x18] sm:$0xff] %vm709, %v3688
      %3698 = vst.msk [vmem:[%s3693 + $0x20] sm:$0xff] %vm709, %v3689
      %3699 = vst.msk [vmem:[%s3693 + $0x28] sm:$0xff] %vm709, %v3690
      %3700 = vst.msk [vmem:[%s3693 + $0x30] sm:$0xff] %vm709, %v3691
      %3701 = vst.msk [vmem:[%s3693 + $0x38] sm:$0xff] %vm709, %v3692
      %v3702 = vld [vmem:[#allocation2 + $0x1] sm:$0xff]
      %v3703 = vld [vmem:[#allocation2 + $0x11] sm:$0xff]
      %v3704 = vld [vmem:[#allocation2 + $0x21] sm:$0xff]
      %v3705 = vld [vmem:[#allocation2 + $0x31] sm:$0xff]
      %v3706 = vld [vmem:[#allocation2 + $0x41] sm:$0xff]
      %v3707 = vld [vmem:[#allocation2 + $0x51] sm:$0xff]
      %v3708 = vld [vmem:[#allocation2 + $0x61] sm:$0xff]
      %v3709 = vld [vmem:[#allocation2 + $0x71] sm:$0xff]
      %v3710 = vld [vmem:[%s9] sm:$0x1]
      %v3712 = vlaneseq
      %v3713 = vshrl.u32 %v3712, 7
      %v3714 = vsub.s32 0, %v3713
      %v3715 = vrot.slane %v3710, %v3714
      %v3717 = vmul.f32 %v3702, %v3715
      %v3718 = vmul.f32 %v3703, %v3715
      %v3719 = vmul.f32 %v3704, %v3715
      %v3720 = vmul.f32 %v3705, %v3715
      %v3721 = vmul.f32 %v3706, %v3715
      %v3722 = vmul.f32 %v3707, %v3715
      %v3723 = vmul.f32 %v3708, %v3715
      %v3724 = vmul.f32 %v3709, %v3715
      %v3725 = vadd.f32 %v3717, 0.0
      %v3726 = vadd.f32 %v3718, 0.0
      %v3727 = vadd.f32 %v3719, 0.0
      %v3728 = vadd.f32 %v3720, 0.0
      %v3729 = vadd.f32 %v3721, 0.0
      %v3730 = vadd.f32 %v3722, 0.0
      %v3731 = vadd.f32 %v3723, 0.0
      %v3732 = vadd.f32 %v3724, 0.0
      %v3733 = vld [vmem:[%s847 + $0x1] sm:$0xff]
      %v3734 = vld [vmem:[%s847 + $0x11] sm:$0xff]
      %v3735 = vld [vmem:[%s847 + $0x21] sm:$0xff]
      %v3736 = vld [vmem:[%s847 + $0x31] sm:$0xff]
      %v3737 = vld [vmem:[%s847 + $0x41] sm:$0xff]
      %v3738 = vld [vmem:[%s847 + $0x51] sm:$0xff]
      %v3739 = vld [vmem:[%s847 + $0x61] sm:$0xff]
      %v3740 = vld [vmem:[%s847 + $0x71] sm:$0xff]
      %s3741 = scalar_lea.vmem %s9, 1
      %v3742 = vld [vmem:[%s3741] sm:$0x1]
      %v3744 = vlaneseq
      %v3745 = vshrl.u32 %v3744, 7
      %v3746 = vsub.s32 0, %v3745
      %v3747 = vrot.slane %v3742, %v3746
      %v3749 = vmul.f32 %v3733, %v3747
      %v3750 = vmul.f32 %v3734, %v3747
      %v3751 = vmul.f32 %v3735, %v3747
      %v3752 = vmul.f32 %v3736, %v3747
      %v3753 = vmul.f32 %v3737, %v3747
      %v3754 = vmul.f32 %v3738, %v3747
      %v3755 = vmul.f32 %v3739, %v3747
      %v3756 = vmul.f32 %v3740, %v3747
      %v3757 = vadd.f32 %v3725, %v3749
      %v3758 = vadd.f32 %v3726, %v3750
      %v3759 = vadd.f32 %v3727, %v3751
      %v3760 = vadd.f32 %v3728, %v3752
      %v3761 = vadd.f32 %v3729, %v3753
      %v3762 = vadd.f32 %v3730, %v3754
      %v3763 = vadd.f32 %v3731, %v3755
      %v3764 = vadd.f32 %v3732, %v3756
      %v3765 = vld [vmem:[%s838 + $0x1] sm:$0xff]
      %v3766 = vld [vmem:[%s838 + $0x11] sm:$0xff]
      %v3767 = vld [vmem:[%s838 + $0x21] sm:$0xff]
      %v3768 = vld [vmem:[%s838 + $0x31] sm:$0xff]
      %v3769 = vld [vmem:[%s838 + $0x41] sm:$0xff]
      %v3770 = vld [vmem:[%s838 + $0x51] sm:$0xff]
      %v3771 = vld [vmem:[%s838 + $0x61] sm:$0xff]
      %v3772 = vld [vmem:[%s838 + $0x71] sm:$0xff]
      %s3773 = scalar_lea.vmem %s9, 2
      %v3774 = vld [vmem:[%s3773] sm:$0x1]
      %v3776 = vlaneseq
      %v3777 = vshrl.u32 %v3776, 7
      %v3778 = vsub.s32 0, %v3777
      %v3779 = vrot.slane %v3774, %v3778
      %v3781 = vmul.f32 %v3765, %v3779
      %v3782 = vmul.f32 %v3766, %v3779
      %v3783 = vmul.f32 %v3767, %v3779
      %v3784 = vmul.f32 %v3768, %v3779
      %v3785 = vmul.f32 %v3769, %v3779
      %v3786 = vmul.f32 %v3770, %v3779
      %v3787 = vmul.f32 %v3771, %v3779
      %v3788 = vmul.f32 %v3772, %v3779
      %v3789 = vadd.f32 %v3757, %v3781
      %v3790 = vadd.f32 %v3758, %v3782
      %v3791 = vadd.f32 %v3759, %v3783
      %v3792 = vadd.f32 %v3760, %v3784
      %v3793 = vadd.f32 %v3761, %v3785
      %v3794 = vadd.f32 %v3762, %v3786
      %v3795 = vadd.f32 %v3763, %v3787
      %v3796 = vadd.f32 %v3764, %v3788
      %v3797 = vld [vmem:[%s1732 + $0x1] sm:$0xff]
      %v3798 = vld [vmem:[%s1732 + $0x11] sm:$0xff]
      %v3799 = vld [vmem:[%s1732 + $0x21] sm:$0xff]
      %v3800 = vld [vmem:[%s1732 + $0x31] sm:$0xff]
      %v3801 = vld [vmem:[%s1732 + $0x41] sm:$0xff]
      %v3802 = vld [vmem:[%s1732 + $0x51] sm:$0xff]
      %v3803 = vld [vmem:[%s1732 + $0x61] sm:$0xff]
      %v3804 = vld [vmem:[%s1732 + $0x71] sm:$0xff]
      %s3805 = scalar_lea.vmem %s9, 3
      %v3806 = vld [vmem:[%s3805] sm:$0x1]
      %v3808 = vlaneseq
      %v3809 = vshrl.u32 %v3808, 7
      %v3810 = vsub.s32 0, %v3809
      %v3811 = vrot.slane %v3806, %v3810
      %v3813 = vmul.f32 %v3797, %v3811
      %v3814 = vmul.f32 %v3798, %v3811
      %v3815 = vmul.f32 %v3799, %v3811
      %v3816 = vmul.f32 %v3800, %v3811
      %v3817 = vmul.f32 %v3801, %v3811
      %v3818 = vmul.f32 %v3802, %v3811
      %v3819 = vmul.f32 %v3803, %v3811
      %v3820 = vmul.f32 %v3804, %v3811
      %v3821 = vadd.f32 %v3789, %v3813
      %v3822 = vadd.f32 %v3790, %v3814
      %v3823 = vadd.f32 %v3791, %v3815
      %v3824 = vadd.f32 %v3792, %v3816
      %v3825 = vadd.f32 %v3793, %v3817
      %v3826 = vadd.f32 %v3794, %v3818
      %v3827 = vadd.f32 %v3795, %v3819
      %v3828 = vadd.f32 %v3796, %v3820
      %s3829 = scalar_lea.vmem [#allocation2], 64
      %v3830 = vld [vmem:[%s3829 + $0x1] sm:$0xff]
      %v3831 = vld [vmem:[%s3829 + $0x11] sm:$0xff]
      %v3832 = vld [vmem:[%s3829 + $0x21] sm:$0xff]
      %v3833 = vld [vmem:[%s3829 + $0x31] sm:$0xff]
      %v3834 = vld [vmem:[%s3829 + $0x41] sm:$0xff]
      %v3835 = vld [vmem:[%s3829 + $0x51] sm:$0xff]
      %v3836 = vld [vmem:[%s3829 + $0x61] sm:$0xff]
      %v3837 = vld [vmem:[%s3829 + $0x71] sm:$0xff]
      %s3838 = scalar_lea.vmem %s9, 4
      %v3839 = vld [vmem:[%s3838] sm:$0x1]
      %v3841 = vlaneseq
      %v3842 = vshrl.u32 %v3841, 7
      %v3843 = vsub.s32 0, %v3842
      %v3844 = vrot.slane %v3839, %v3843
      %v3846 = vmul.f32 %v3830, %v3844
      %v3847 = vmul.f32 %v3831, %v3844
      %v3848 = vmul.f32 %v3832, %v3844
      %v3849 = vmul.f32 %v3833, %v3844
      %v3850 = vmul.f32 %v3834, %v3844
      %v3851 = vmul.f32 %v3835, %v3844
      %v3852 = vmul.f32 %v3836, %v3844
      %v3853 = vmul.f32 %v3837, %v3844
      %v3854 = vadd.f32 %v3821, %v3846
      %v3855 = vadd.f32 %v3822, %v3847
      %v3856 = vadd.f32 %v3823, %v3848
      %v3857 = vadd.f32 %v3824, %v3849
      %v3858 = vadd.f32 %v3825, %v3850
      %v3859 = vadd.f32 %v3826, %v3851
      %v3860 = vadd.f32 %v3827, %v3852
      %v3861 = vadd.f32 %v3828, %v3853
      %v3862 = vld [vmem:[%s10] sm:$0x1]
      %v3864 = vlaneseq
      %v3865 = vshrl.u32 %v3864, 7
      %v3866 = vsub.s32 0, %v3865
      %v3867 = vrot.slane %v3862, %v3866
      %v3869 = vadd.f32 %v3854, %v3867
      %v3870 = vadd.f32 %v3855, %v3867
      %v3871 = vadd.f32 %v3856, %v3867
      %v3872 = vadd.f32 %v3857, %v3867
      %v3873 = vadd.f32 %v3858, %v3867
      %v3874 = vadd.f32 %v3859, %v3867
      %v3875 = vadd.f32 %v3860, %v3867
      %v3876 = vadd.f32 %v3861, %v3867
      %v3877 = vand.u32 2147483647, %v3869
      %v3878 = vand.u32 2147483647, %v3870
      %v3879 = vand.u32 2147483647, %v3871
      %v3880 = vand.u32 2147483647, %v3872
      %v3881 = vand.u32 2147483647, %v3873
      %v3882 = vand.u32 2147483647, %v3874
      %v3883 = vand.u32 2147483647, %v3875
      %v3884 = vand.u32 2147483647, %v3876
      %s3885 = scalar_lea.vmem [#allocation5], 16
      %3886 = vst.msk [vmem:[%s3885] sm:$0xff] %vm709, %v3877
      %3887 = vst.msk [vmem:[%s3885 + $0x8] sm:$0xff] %vm709, %v3878
      %3888 = vst.msk [vmem:[%s3885 + $0x10] sm:$0xff] %vm709, %v3879
      %3889 = vst.msk [vmem:[%s3885 + $0x18] sm:$0xff] %vm709, %v3880
      %3890 = vst.msk [vmem:[%s3885 + $0x20] sm:$0xff] %vm709, %v3881
      %3891 = vst.msk [vmem:[%s3885 + $0x28] sm:$0xff] %vm709, %v3882
      %3892 = vst.msk [vmem:[%s3885 + $0x30] sm:$0xff] %vm709, %v3883
      %3893 = vst.msk [vmem:[%s3885 + $0x38] sm:$0xff] %vm709, %v3884
      %v3894 = vld [vmem:[#allocation4] sm:$0xff]
      %v3895 = vld [vmem:[#allocation4 + $0x8] sm:$0xff]
      %v3896 = vld [vmem:[#allocation4 + $0x10] sm:$0xff]
      %v3897 = vld [vmem:[#allocation4 + $0x18] sm:$0xff]
      %v3898 = vld [vmem:[#allocation4 + $0x20] sm:$0xff]
      %v3899 = vld [vmem:[#allocation4 + $0x28] sm:$0xff]
      %v3900 = vld [vmem:[#allocation4 + $0x30] sm:$0xff]
      %v3901 = vld [vmem:[#allocation4 + $0x38] sm:$0xff]
      %v3902 = vld [vmem:[%s11] sm:$0xf]
      %v3903 = vld [vmem:[%s3693] sm:$0xff]
      %v3904 = vld [vmem:[%s3693 + $0x8] sm:$0xff]
      %v3905 = vld [vmem:[%s3693 + $0x10] sm:$0xff]
      %v3906 = vld [vmem:[%s3693 + $0x18] sm:$0xff]
      %v3907 = vld [vmem:[%s3693 + $0x20] sm:$0xff]
      %v3908 = vld [vmem:[%s3693 + $0x28] sm:$0xff]
      %v3909 = vld [vmem:[%s3693 + $0x30] sm:$0xff]
      %v3910 = vld [vmem:[%s3693 + $0x38] sm:$0xff]
      %s3911 = scalar_lea.vmem %s11, 4
      %v3912 = vld [vmem:[%s3911] sm:$0xf]
      %v3914 = vsel %vm709, %v3903, 0
      %v3917 = vsel %vm709, %v3904, 0
      %v3920 = vsel %vm709, %v3905, 0
      %v3923 = vsel %vm709, %v3906, 0
      %v3926 = vsel %vm709, %v3907, 0
      %v3929 = vsel %vm709, %v3908, 0
      %v3932 = vsel %vm709, %v3909, 0
      %v3935 = vsel %vm709, %v3910, 0
      %v3938 = vsel %vm891, %v3912, 0
      %3940 = vmatprep.subr.mxu0 0.0
      %3941 = vmatpush1.msra.mxu0 0.0
      %3942 = vmatprep.subr.mxu0 0.0
      %3943 = vmatpush1.msra.mxu0 0.0
      %3944 = vmatprep.subr.mxu0 0.0
      %3945 = vmatpush1.msra.mxu0 0.0
      %3946 = vmatprep.subr.mxu0 0.0
      %3947 = vmatpush1.msra.mxu0 0.0
      %3948 = vmatprep.subr.mxu0 0.0
      %3949 = vmatpush1.msra.mxu0 0.0
      %3950 = vmatprep.subr.mxu0 0.0
      %3951 = vmatpush1.msra.mxu0 0.0
      %3952 = vmatprep.subr.mxu0 0.0
      %3953 = vmatpush1.msra.mxu0 0.0
      %3954 = vmatprep.subr.mxu0 0.0
      %3955 = vmatpush1.msra.mxu0 0.0
      %3956 = vmatprep.subr.mxu0 0.0
      %3957 = vmatpush1.msra.mxu0 0.0
      %3958 = vmatprep.subr.mxu0 0.0
      %3959 = vmatpush1.msra.mxu0 0.0
      %3960 = vmatprep.subr.mxu0 0.0
      %3961 = vmatpush1.msra.mxu0 0.0
      %3962 = vmatprep.subr.mxu0 0.0
      %3963 = vmatpush1.msra.mxu0 0.0
      %3964 = vmatprep.subr.mxu0 0.0
      %3965 = vmatpush1.msra.mxu0 0.0
      %3966 = vmatprep.subr.mxu0 0.0
      %3967 = vmatpush1.msra.mxu0 0.0
      %3968 = vmatprep.subr.mxu0 0.0
      %3969 = vmatpush1.msra.mxu0 0.0
      %3970 = vmatprep.subr.mxu0 0.0
      %3971 = vmatpush1.msra.mxu0 %v3938
      %3972 = vmatprep.subr.mxu0 0.0
      %3973 = vmatpush2.msra.mxu0 0.0
      %3974 = vmatprep.subr.mxu0 0.0
      %3975 = vmatpush2.msra.mxu0 0.0
      %3976 = vmatprep.subr.mxu0 0.0
      %3977 = vmatpush2.msra.mxu0 0.0
      %3978 = vmatprep.subr.mxu0 0.0
      %3979 = vmatpush2.msra.mxu0 0.0
      %3980 = vmatprep.subr.mxu0 0.0
      %3981 = vmatpush2.msra.mxu0 0.0
      %3982 = vmatprep.subr.mxu0 0.0
      %3983 = vmatpush2.msra.mxu0 0.0
      %3984 = vmatprep.subr.mxu0 0.0
      %3985 = vmatpush2.msra.mxu0 0.0
      %3986 = vmatprep.subr.mxu0 0.0
      %3987 = vmatpush2.msra.mxu0 0.0
      %3988 = vmatprep.subr.mxu0 0.0
      %3989 = vmatpush2.msra.mxu0 0.0
      %3990 = vmatprep.subr.mxu0 0.0
      %3991 = vmatpush2.msra.mxu0 0.0
      %3992 = vmatprep.subr.mxu0 0.0
      %3993 = vmatpush2.msra.mxu0 0.0
      %3994 = vmatprep.subr.mxu0 0.0
      %3995 = vmatpush2.msra.mxu0 0.0
      %3996 = vmatprep.subr.mxu0 0.0
      %3997 = vmatpush2.msra.mxu0 0.0
      %3998 = vmatprep.subr.mxu0 0.0
      %3999 = vmatpush2.msra.mxu0 0.0
      %4000 = vmatprep.subr.mxu0 0.0
      %4001 = vmatpush2.msra.mxu0 0.0
      %4002 = vmatprep.subr.mxu0 0.0
      %4003 = vmatpush2.msra.mxu0 0.0
      %4004 = vmatprep.mubr.f32.mxu0 0.0
      %4005 = vmatmul.mubr.f32.gmra.mxu0 %v3914
      %v4006 = vpop.f32.mrf.mxu0
      %v4007 = vadd.f32 0.0, %v4006
      %v4008 = vpop.f32.mrf.mxu0
      %4009 = vmatprep.mubr.f32.mxu0 0.0
      %4010 = vmatmul.mubr.f32.gmra.mxu0 %v3917
      %v4011 = vpop.f32.mrf.mxu0
      %v4012 = vadd.f32 0.0, %v4011
      %v4013 = vpop.f32.mrf.mxu0
      %4014 = vmatprep.mubr.f32.mxu0 0.0
      %4015 = vmatmul.mubr.f32.gmra.mxu0 %v3920
      %v4016 = vpop.f32.mrf.mxu0
      %v4017 = vadd.f32 0.0, %v4016
      %v4018 = vpop.f32.mrf.mxu0
      %4019 = vmatprep.mubr.f32.mxu0 0.0
      %4020 = vmatmul.mubr.f32.gmra.mxu0 %v3923
      %v4021 = vpop.f32.mrf.mxu0
      %v4022 = vadd.f32 0.0, %v4021
      %v4023 = vpop.f32.mrf.mxu0
      %4024 = vmatprep.mubr.f32.mxu0 0.0
      %4025 = vmatmul.mubr.f32.gmra.mxu0 %v3926
      %v4026 = vpop.f32.mrf.mxu0
      %v4027 = vadd.f32 0.0, %v4026
      %v4028 = vpop.f32.mrf.mxu0
      %4029 = vmatprep.mubr.f32.mxu0 0.0
      %4030 = vmatmul.mubr.f32.gmra.mxu0 %v3929
      %v4031 = vpop.f32.mrf.mxu0
      %v4032 = vadd.f32 0.0, %v4031
      %v4033 = vpop.f32.mrf.mxu0
      %4034 = vmatprep.mubr.f32.mxu0 0.0
      %4035 = vmatmul.mubr.f32.gmra.mxu0 %v3932
      %v4036 = vpop.f32.mrf.mxu0
      %v4037 = vadd.f32 0.0, %v4036
      %v4038 = vpop.f32.mrf.mxu0
      %4039 = vmatprep.mubr.f32.mxu0 0.0
      %4040 = vmatmul.mubr.f32.gmra.mxu0 %v3935
      %v4041 = vpop.f32.mrf.mxu0
      %v4042 = vadd.f32 0.0, %v4041
      %v4043 = vpop.f32.mrf.mxu0
      %4044 = vdwg.mxu0
      %v4046 = vsel %vm709, %v3894, 0
      %v4049 = vsel %vm709, %v3895, 0
      %v4052 = vsel %vm709, %v3896, 0
      %v4055 = vsel %vm709, %v3897, 0
      %v4058 = vsel %vm709, %v3898, 0
      %v4061 = vsel %vm709, %v3899, 0
      %v4064 = vsel %vm709, %v3900, 0
      %v4067 = vsel %vm709, %v3901, 0
      %v4070 = vsel %vm891, %v3902, 0
      %4072 = vmatprep.subr.mxu0 0.0
      %4073 = vmatpush1.msra.mxu0 0.0
      %4074 = vmatprep.subr.mxu0 0.0
      %4075 = vmatpush1.msra.mxu0 0.0
      %4076 = vmatprep.subr.mxu0 0.0
      %4077 = vmatpush1.msra.mxu0 0.0
      %4078 = vmatprep.subr.mxu0 0.0
      %4079 = vmatpush1.msra.mxu0 0.0
      %4080 = vmatprep.subr.mxu0 0.0
      %4081 = vmatpush1.msra.mxu0 0.0
      %4082 = vmatprep.subr.mxu0 0.0
      %4083 = vmatpush1.msra.mxu0 0.0
      %4084 = vmatprep.subr.mxu0 0.0
      %4085 = vmatpush1.msra.mxu0 0.0
      %4086 = vmatprep.subr.mxu0 0.0
      %4087 = vmatpush1.msra.mxu0 0.0
      %4088 = vmatprep.subr.mxu0 0.0
      %4089 = vmatpush1.msra.mxu0 0.0
      %4090 = vmatprep.subr.mxu0 0.0
      %4091 = vmatpush1.msra.mxu0 0.0
      %4092 = vmatprep.subr.mxu0 0.0
      %4093 = vmatpush1.msra.mxu0 0.0
      %4094 = vmatprep.subr.mxu0 0.0
      %4095 = vmatpush1.msra.mxu0 0.0
      %4096 = vmatprep.subr.mxu0 0.0
      %4097 = vmatpush1.msra.mxu0 0.0
      %4098 = vmatprep.subr.mxu0 0.0
      %4099 = vmatpush1.msra.mxu0 0.0
      %4100 = vmatprep.subr.mxu0 0.0
      %4101 = vmatpush1.msra.mxu0 0.0
      %4102 = vmatprep.subr.mxu0 0.0
      %4103 = vmatpush1.msra.mxu0 %v4070
      %4104 = vmatprep.subr.mxu0 0.0
      %4105 = vmatpush2.msra.mxu0 0.0
      %4106 = vmatprep.subr.mxu0 0.0
      %4107 = vmatpush2.msra.mxu0 0.0
      %4108 = vmatprep.subr.mxu0 0.0
      %4109 = vmatpush2.msra.mxu0 0.0
      %4110 = vmatprep.subr.mxu0 0.0
      %4111 = vmatpush2.msra.mxu0 0.0
      %4112 = vmatprep.subr.mxu0 0.0
      %4113 = vmatpush2.msra.mxu0 0.0
      %4114 = vmatprep.subr.mxu0 0.0
      %4115 = vmatpush2.msra.mxu0 0.0
      %4116 = vmatprep.subr.mxu0 0.0
      %4117 = vmatpush2.msra.mxu0 0.0
      %4118 = vmatprep.subr.mxu0 0.0
      %4119 = vmatpush2.msra.mxu0 0.0
      %4120 = vmatprep.subr.mxu0 0.0
      %4121 = vmatpush2.msra.mxu0 0.0
      %4122 = vmatprep.subr.mxu0 0.0
      %4123 = vmatpush2.msra.mxu0 0.0
      %4124 = vmatprep.subr.mxu0 0.0
      %4125 = vmatpush2.msra.mxu0 0.0
      %4126 = vmatprep.subr.mxu0 0.0
      %4127 = vmatpush2.msra.mxu0 0.0
      %4128 = vmatprep.subr.mxu0 0.0
      %4129 = vmatpush2.msra.mxu0 0.0
      %4130 = vmatprep.subr.mxu0 0.0
      %4131 = vmatpush2.msra.mxu0 0.0
      %4132 = vmatprep.subr.mxu0 0.0
      %4133 = vmatpush2.msra.mxu0 0.0
      %4134 = vmatprep.subr.mxu0 0.0
      %4135 = vmatpush2.msra.mxu0 0.0
      %4136 = vmatprep.mubr.f32.mxu0 0.0
      %4137 = vmatmul.mubr.f32.gmra.mxu0 %v4046
      %v4138 = vpop.f32.mrf.mxu0
      %v4139 = vadd.f32 %v4007, %v4138
      %v4140 = vpop.f32.mrf.mxu0
      %4141 = vmatprep.mubr.f32.mxu0 0.0
      %4142 = vmatmul.mubr.f32.gmra.mxu0 %v4049
      %v4143 = vpop.f32.mrf.mxu0
      %v4144 = vadd.f32 %v4012, %v4143
      %v4145 = vpop.f32.mrf.mxu0
      %4146 = vmatprep.mubr.f32.mxu0 0.0
      %4147 = vmatmul.mubr.f32.gmra.mxu0 %v4052
      %v4148 = vpop.f32.mrf.mxu0
      %v4149 = vadd.f32 %v4017, %v4148
      %v4150 = vpop.f32.mrf.mxu0
      %4151 = vmatprep.mubr.f32.mxu0 0.0
      %4152 = vmatmul.mubr.f32.gmra.mxu0 %v4055
      %v4153 = vpop.f32.mrf.mxu0
      %v4154 = vadd.f32 %v4022, %v4153
      %v4155 = vpop.f32.mrf.mxu0
      %4156 = vmatprep.mubr.f32.mxu0 0.0
      %4157 = vmatmul.mubr.f32.gmra.mxu0 %v4058
      %v4158 = vpop.f32.mrf.mxu0
      %v4159 = vadd.f32 %v4027, %v4158
      %v4160 = vpop.f32.mrf.mxu0
      %4161 = vmatprep.mubr.f32.mxu0 0.0
      %4162 = vmatmul.mubr.f32.gmra.mxu0 %v4061
      %v4163 = vpop.f32.mrf.mxu0
      %v4164 = vadd.f32 %v4032, %v4163
      %v4165 = vpop.f32.mrf.mxu0
      %4166 = vmatprep.mubr.f32.mxu0 0.0
      %4167 = vmatmul.mubr.f32.gmra.mxu0 %v4064
      %v4168 = vpop.f32.mrf.mxu0
      %v4169 = vadd.f32 %v4037, %v4168
      %v4170 = vpop.f32.mrf.mxu0
      %4171 = vmatprep.mubr.f32.mxu0 0.0
      %4172 = vmatmul.mubr.f32.gmra.mxu0 %v4067
      %v4173 = vpop.f32.mrf.mxu0
      %v4174 = vadd.f32 %v4042, %v4173
      %v4175 = vpop.f32.mrf.mxu0
      %4176 = vdwg.mxu0
      %s4177 = scalar_lea.vmem [#allocation4], 16
      %v4178 = vld [vmem:[%s4177] sm:$0xff]
      %v4179 = vld [vmem:[%s4177 + $0x8] sm:$0xff]
      %v4180 = vld [vmem:[%s4177 + $0x10] sm:$0xff]
      %v4181 = vld [vmem:[%s4177 + $0x18] sm:$0xff]
      %v4182 = vld [vmem:[%s4177 + $0x20] sm:$0xff]
      %v4183 = vld [vmem:[%s4177 + $0x28] sm:$0xff]
      %v4184 = vld [vmem:[%s4177 + $0x30] sm:$0xff]
      %v4185 = vld [vmem:[%s4177 + $0x38] sm:$0xff]
      %s4186 = scalar_lea.vmem %s11, 8
      %v4187 = vld [vmem:[%s4186] sm:$0xf]
      %v4189 = vsel %vm709, %v4178, 0
      %v4192 = vsel %vm709, %v4179, 0
      %v4195 = vsel %vm709, %v4180, 0
      %v4198 = vsel %vm709, %v4181, 0
      %v4201 = vsel %vm709, %v4182, 0
      %v4204 = vsel %vm709, %v4183, 0
      %v4207 = vsel %vm709, %v4184, 0
      %v4210 = vsel %vm709, %v4185, 0
      %v4213 = vsel %vm891, %v4187, 0
      %4215 = vmatprep.subr.mxu0 0.0
      %4216 = vmatpush1.msra.mxu0 0.0
      %4217 = vmatprep.subr.mxu0 0.0
      %4218 = vmatpush1.msra.mxu0 0.0
      %4219 = vmatprep.subr.mxu0 0.0
      %4220 = vmatpush1.msra.mxu0 0.0
      %4221 = vmatprep.subr.mxu0 0.0
      %4222 = vmatpush1.msra.mxu0 0.0
      %4223 = vmatprep.subr.mxu0 0.0
      %4224 = vmatpush1.msra.mxu0 0.0
      %4225 = vmatprep.subr.mxu0 0.0
      %4226 = vmatpush1.msra.mxu0 0.0
      %4227 = vmatprep.subr.mxu0 0.0
      %4228 = vmatpush1.msra.mxu0 0.0
      %4229 = vmatprep.subr.mxu0 0.0
      %4230 = vmatpush1.msra.mxu0 0.0
      %4231 = vmatprep.subr.mxu0 0.0
      %4232 = vmatpush1.msra.mxu0 0.0
      %4233 = vmatprep.subr.mxu0 0.0
      %4234 = vmatpush1.msra.mxu0 0.0
      %4235 = vmatprep.subr.mxu0 0.0
      %4236 = vmatpush1.msra.mxu0 0.0
      %4237 = vmatprep.subr.mxu0 0.0
      %4238 = vmatpush1.msra.mxu0 0.0
      %4239 = vmatprep.subr.mxu0 0.0
      %4240 = vmatpush1.msra.mxu0 0.0
      %4241 = vmatprep.subr.mxu0 0.0
      %4242 = vmatpush1.msra.mxu0 0.0
      %4243 = vmatprep.subr.mxu0 0.0
      %4244 = vmatpush1.msra.mxu0 0.0
      %4245 = vmatprep.subr.mxu0 0.0
      %4246 = vmatpush1.msra.mxu0 %v4213
      %4247 = vmatprep.subr.mxu0 0.0
      %4248 = vmatpush2.msra.mxu0 0.0
      %4249 = vmatprep.subr.mxu0 0.0
      %4250 = vmatpush2.msra.mxu0 0.0
      %4251 = vmatprep.subr.mxu0 0.0
      %4252 = vmatpush2.msra.mxu0 0.0
      %4253 = vmatprep.subr.mxu0 0.0
      %4254 = vmatpush2.msra.mxu0 0.0
      %4255 = vmatprep.subr.mxu0 0.0
      %4256 = vmatpush2.msra.mxu0 0.0
      %4257 = vmatprep.subr.mxu0 0.0
      %4258 = vmatpush2.msra.mxu0 0.0
      %4259 = vmatprep.subr.mxu0 0.0
      %4260 = vmatpush2.msra.mxu0 0.0
      %4261 = vmatprep.subr.mxu0 0.0
      %4262 = vmatpush2.msra.mxu0 0.0
      %4263 = vmatprep.subr.mxu0 0.0
      %4264 = vmatpush2.msra.mxu0 0.0
      %4265 = vmatprep.subr.mxu0 0.0
      %4266 = vmatpush2.msra.mxu0 0.0
      %4267 = vmatprep.subr.mxu0 0.0
      %4268 = vmatpush2.msra.mxu0 0.0
      %4269 = vmatprep.subr.mxu0 0.0
      %4270 = vmatpush2.msra.mxu0 0.0
      %4271 = vmatprep.subr.mxu0 0.0
      %4272 = vmatpush2.msra.mxu0 0.0
      %4273 = vmatprep.subr.mxu0 0.0
      %4274 = vmatpush2.msra.mxu0 0.0
      %4275 = vmatprep.subr.mxu0 0.0
      %4276 = vmatpush2.msra.mxu0 0.0
      %4277 = vmatprep.subr.mxu0 0.0
      %4278 = vmatpush2.msra.mxu0 0.0
      %4279 = vmatprep.mubr.f32.mxu0 0.0
      %4280 = vmatmul.mubr.f32.gmra.mxu0 %v4189
      %v4281 = vpop.f32.mrf.mxu0
      %v4282 = vadd.f32 0.0, %v4281
      %v4283 = vpop.f32.mrf.mxu0
      %4284 = vmatprep.mubr.f32.mxu0 0.0
      %4285 = vmatmul.mubr.f32.gmra.mxu0 %v4192
      %v4286 = vpop.f32.mrf.mxu0
      %v4287 = vadd.f32 0.0, %v4286
      %v4288 = vpop.f32.mrf.mxu0
      %4289 = vmatprep.mubr.f32.mxu0 0.0
      %4290 = vmatmul.mubr.f32.gmra.mxu0 %v4195
      %v4291 = vpop.f32.mrf.mxu0
      %v4292 = vadd.f32 0.0, %v4291
      %v4293 = vpop.f32.mrf.mxu0
      %4294 = vmatprep.mubr.f32.mxu0 0.0
      %4295 = vmatmul.mubr.f32.gmra.mxu0 %v4198
      %v4296 = vpop.f32.mrf.mxu0
      %v4297 = vadd.f32 0.0, %v4296
      %v4298 = vpop.f32.mrf.mxu0
      %4299 = vmatprep.mubr.f32.mxu0 0.0
      %4300 = vmatmul.mubr.f32.gmra.mxu0 %v4201
      %v4301 = vpop.f32.mrf.mxu0
      %v4302 = vadd.f32 0.0, %v4301
      %v4303 = vpop.f32.mrf.mxu0
      %4304 = vmatprep.mubr.f32.mxu0 0.0
      %4305 = vmatmul.mubr.f32.gmra.mxu0 %v4204
      %v4306 = vpop.f32.mrf.mxu0
      %v4307 = vadd.f32 0.0, %v4306
      %v4308 = vpop.f32.mrf.mxu0
      %4309 = vmatprep.mubr.f32.mxu0 0.0
      %4310 = vmatmul.mubr.f32.gmra.mxu0 %v4207
      %v4311 = vpop.f32.mrf.mxu0
      %v4312 = vadd.f32 0.0, %v4311
      %v4313 = vpop.f32.mrf.mxu0
      %4314 = vmatprep.mubr.f32.mxu0 0.0
      %4315 = vmatmul.mubr.f32.gmra.mxu0 %v4210
      %v4316 = vpop.f32.mrf.mxu0
      %v4317 = vadd.f32 0.0, %v4316
      %v4318 = vpop.f32.mrf.mxu0
      %4319 = vdwg.mxu0
      %v4320 = vadd.f32 %v4139, %v4282
      %v4321 = vadd.f32 %v4144, %v4287
      %v4322 = vadd.f32 %v4149, %v4292
      %v4323 = vadd.f32 %v4154, %v4297
      %v4324 = vadd.f32 %v4159, %v4302
      %v4325 = vadd.f32 %v4164, %v4307
      %v4326 = vadd.f32 %v4169, %v4312
      %v4327 = vadd.f32 %v4174, %v4317
      %v4328 = vld [vmem:[%s12] sm:$0x1]
      %v4330 = vlaneseq
      %v4331 = vshrl.u32 %v4330, 7
      %v4332 = vsub.s32 0, %v4331
      %v4333 = vrot.slane %v4328, %v4332
      %v4335 = vmul.f32 %v4320, %v4333
      %v4336 = vmul.f32 %v4321, %v4333
      %v4337 = vmul.f32 %v4322, %v4333
      %v4338 = vmul.f32 %v4323, %v4333
      %v4339 = vmul.f32 %v4324, %v4333
      %v4340 = vmul.f32 %v4325, %v4333
      %v4341 = vmul.f32 %v4326, %v4333
      %v4342 = vmul.f32 %v4327, %v4333
      %v4343 = vld [vmem:[%s13] sm:$0x1]
      %v4345 = vlaneseq
      %v4346 = vshrl.u32 %v4345, 7
      %v4347 = vsub.s32 0, %v4346
      %v4348 = vrot.slane %v4343, %v4347
      %v4350 = vadd.f32 %v4335, %v4348
      %v4351 = vadd.f32 %v4336, %v4348
      %v4352 = vadd.f32 %v4337, %v4348
      %v4353 = vadd.f32 %v4338, %v4348
      %v4354 = vadd.f32 %v4339, %v4348
      %v4355 = vadd.f32 %v4340, %v4348
      %v4356 = vadd.f32 %v4341, %v4348
      %v4357 = vadd.f32 %v4342, %v4348
      %v4358 = vmax.f32 %v4350, 0.0
      %v4359 = vmax.f32 %v4351, 0.0
      %v4360 = vmax.f32 %v4352, 0.0
      %v4361 = vmax.f32 %v4353, 0.0
      %v4362 = vmax.f32 %v4354, 0.0
      %v4363 = vmax.f32 %v4355, 0.0
      %v4364 = vmax.f32 %v4356, 0.0
      %v4365 = vmax.f32 %v4357, 0.0
      %v4366 = vld [vmem:[#allocation5] sm:$0xff]
      %v4367 = vld [vmem:[#allocation5 + $0x8] sm:$0xff]
      %v4368 = vld [vmem:[#allocation5 + $0x10] sm:$0xff]
      %v4369 = vld [vmem:[#allocation5 + $0x18] sm:$0xff]
      %v4370 = vld [vmem:[#allocation5 + $0x20] sm:$0xff]
      %v4371 = vld [vmem:[#allocation5 + $0x28] sm:$0xff]
      %v4372 = vld [vmem:[#allocation5 + $0x30] sm:$0xff]
      %v4373 = vld [vmem:[#allocation5 + $0x38] sm:$0xff]
      %v4374 = vld [vmem:[%s14] sm:$0xf]
      %s4375 = scalar_lea.vmem [#allocation5], 8
      %v4376 = vld [vmem:[%s4375] sm:$0xff]
      %v4377 = vld [vmem:[%s4375 + $0x8] sm:$0xff]
      %v4378 = vld [vmem:[%s4375 + $0x10] sm:$0xff]
      %v4379 = vld [vmem:[%s4375 + $0x18] sm:$0xff]
      %v4380 = vld [vmem:[%s4375 + $0x20] sm:$0xff]
      %v4381 = vld [vmem:[%s4375 + $0x28] sm:$0xff]
      %v4382 = vld [vmem:[%s4375 + $0x30] sm:$0xff]
      %v4383 = vld [vmem:[%s4375 + $0x38] sm:$0xff]
      %s4384 = scalar_lea.vmem %s14, 4
      %v4385 = vld [vmem:[%s4384] sm:$0xf]
      %v4387 = vsel %vm709, %v4376, 0
      %v4390 = vsel %vm709, %v4377, 0
      %v4393 = vsel %vm709, %v4378, 0
      %v4396 = vsel %vm709, %v4379, 0
      %v4399 = vsel %vm709, %v4380, 0
      %v4402 = vsel %vm709, %v4381, 0
      %v4405 = vsel %vm709, %v4382, 0
      %v4408 = vsel %vm709, %v4383, 0
      %v4411 = vsel %vm891, %v4385, 0
      %4413 = vmatprep.subr.mxu0 0.0
      %4414 = vmatpush1.msra.mxu0 0.0
      %4415 = vmatprep.subr.mxu0 0.0
      %4416 = vmatpush1.msra.mxu0 0.0
      %4417 = vmatprep.subr.mxu0 0.0
      %4418 = vmatpush1.msra.mxu0 0.0
      %4419 = vmatprep.subr.mxu0 0.0
      %4420 = vmatpush1.msra.mxu0 0.0
      %4421 = vmatprep.subr.mxu0 0.0
      %4422 = vmatpush1.msra.mxu0 0.0
      %4423 = vmatprep.subr.mxu0 0.0
      %4424 = vmatpush1.msra.mxu0 0.0
      %4425 = vmatprep.subr.mxu0 0.0
      %4426 = vmatpush1.msra.mxu0 0.0
      %4427 = vmatprep.subr.mxu0 0.0
      %4428 = vmatpush1.msra.mxu0 0.0
      %4429 = vmatprep.subr.mxu0 0.0
      %4430 = vmatpush1.msra.mxu0 0.0
      %4431 = vmatprep.subr.mxu0 0.0
      %4432 = vmatpush1.msra.mxu0 0.0
      %4433 = vmatprep.subr.mxu0 0.0
      %4434 = vmatpush1.msra.mxu0 0.0
      %4435 = vmatprep.subr.mxu0 0.0
      %4436 = vmatpush1.msra.mxu0 0.0
      %4437 = vmatprep.subr.mxu0 0.0
      %4438 = vmatpush1.msra.mxu0 0.0
      %4439 = vmatprep.subr.mxu0 0.0
      %4440 = vmatpush1.msra.mxu0 0.0
      %4441 = vmatprep.subr.mxu0 0.0
      %4442 = vmatpush1.msra.mxu0 0.0
      %4443 = vmatprep.subr.mxu0 0.0
      %4444 = vmatpush1.msra.mxu0 %v4411
      %4445 = vmatprep.subr.mxu0 0.0
      %4446 = vmatpush2.msra.mxu0 0.0
      %4447 = vmatprep.subr.mxu0 0.0
      %4448 = vmatpush2.msra.mxu0 0.0
      %4449 = vmatprep.subr.mxu0 0.0
      %4450 = vmatpush2.msra.mxu0 0.0
      %4451 = vmatprep.subr.mxu0 0.0
      %4452 = vmatpush2.msra.mxu0 0.0
      %4453 = vmatprep.subr.mxu0 0.0
      %4454 = vmatpush2.msra.mxu0 0.0
      %4455 = vmatprep.subr.mxu0 0.0
      %4456 = vmatpush2.msra.mxu0 0.0
      %4457 = vmatprep.subr.mxu0 0.0
      %4458 = vmatpush2.msra.mxu0 0.0
      %4459 = vmatprep.subr.mxu0 0.0
      %4460 = vmatpush2.msra.mxu0 0.0
      %4461 = vmatprep.subr.mxu0 0.0
      %4462 = vmatpush2.msra.mxu0 0.0
      %4463 = vmatprep.subr.mxu0 0.0
      %4464 = vmatpush2.msra.mxu0 0.0
      %4465 = vmatprep.subr.mxu0 0.0
      %4466 = vmatpush2.msra.mxu0 0.0
      %4467 = vmatprep.subr.mxu0 0.0
      %4468 = vmatpush2.msra.mxu0 0.0
      %4469 = vmatprep.subr.mxu0 0.0
      %4470 = vmatpush2.msra.mxu0 0.0
      %4471 = vmatprep.subr.mxu0 0.0
      %4472 = vmatpush2.msra.mxu0 0.0
      %4473 = vmatprep.subr.mxu0 0.0
      %4474 = vmatpush2.msra.mxu0 0.0
      %4475 = vmatprep.subr.mxu0 0.0
      %4476 = vmatpush2.msra.mxu0 0.0
      %4477 = vmatprep.mubr.f32.mxu0 0.0
      %4478 = vmatmul.mubr.f32.gmra.mxu0 %v4387
      %v4479 = vpop.f32.mrf.mxu0
      %v4480 = vadd.f32 0.0, %v4479
      %v4481 = vpop.f32.mrf.mxu0
      %4482 = vmatprep.mubr.f32.mxu0 0.0
      %4483 = vmatmul.mubr.f32.gmra.mxu0 %v4390
      %v4484 = vpop.f32.mrf.mxu0
      %v4485 = vadd.f32 0.0, %v4484
      %v4486 = vpop.f32.mrf.mxu0
      %4487 = vmatprep.mubr.f32.mxu0 0.0
      %4488 = vmatmul.mubr.f32.gmra.mxu0 %v4393
      %v4489 = vpop.f32.mrf.mxu0
      %v4490 = vadd.f32 0.0, %v4489
      %v4491 = vpop.f32.mrf.mxu0
      %4492 = vmatprep.mubr.f32.mxu0 0.0
      %4493 = vmatmul.mubr.f32.gmra.mxu0 %v4396
      %v4494 = vpop.f32.mrf.mxu0
      %v4495 = vadd.f32 0.0, %v4494
      %v4496 = vpop.f32.mrf.mxu0
      %4497 = vmatprep.mubr.f32.mxu0 0.0
      %4498 = vmatmul.mubr.f32.gmra.mxu0 %v4399
      %v4499 = vpop.f32.mrf.mxu0
      %v4500 = vadd.f32 0.0, %v4499
      %v4501 = vpop.f32.mrf.mxu0
      %4502 = vmatprep.mubr.f32.mxu0 0.0
      %4503 = vmatmul.mubr.f32.gmra.mxu0 %v4402
      %v4504 = vpop.f32.mrf.mxu0
      %v4505 = vadd.f32 0.0, %v4504
      %v4506 = vpop.f32.mrf.mxu0
      %4507 = vmatprep.mubr.f32.mxu0 0.0
      %4508 = vmatmul.mubr.f32.gmra.mxu0 %v4405
      %v4509 = vpop.f32.mrf.mxu0
      %v4510 = vadd.f32 0.0, %v4509
      %v4511 = vpop.f32.mrf.mxu0
      %4512 = vmatprep.mubr.f32.mxu0 0.0
      %4513 = vmatmul.mubr.f32.gmra.mxu0 %v4408
      %v4514 = vpop.f32.mrf.mxu0
      %v4515 = vadd.f32 0.0, %v4514
      %v4516 = vpop.f32.mrf.mxu0
      %4517 = vdwg.mxu0
      %v4519 = vsel %vm709, %v4366, 0
      %v4522 = vsel %vm709, %v4367, 0
      %v4525 = vsel %vm709, %v4368, 0
      %v4528 = vsel %vm709, %v4369, 0
      %v4531 = vsel %vm709, %v4370, 0
      %v4534 = vsel %vm709, %v4371, 0
      %v4537 = vsel %vm709, %v4372, 0
      %v4540 = vsel %vm709, %v4373, 0
      %v4543 = vsel %vm891, %v4374, 0
      %4545 = vmatprep.subr.mxu0 0.0
      %4546 = vmatpush1.msra.mxu0 0.0
      %4547 = vmatprep.subr.mxu0 0.0
      %4548 = vmatpush1.msra.mxu0 0.0
      %4549 = vmatprep.subr.mxu0 0.0
      %4550 = vmatpush1.msra.mxu0 0.0
      %4551 = vmatprep.subr.mxu0 0.0
      %4552 = vmatpush1.msra.mxu0 0.0
      %4553 = vmatprep.subr.mxu0 0.0
      %4554 = vmatpush1.msra.mxu0 0.0
      %4555 = vmatprep.subr.mxu0 0.0
      %4556 = vmatpush1.msra.mxu0 0.0
      %4557 = vmatprep.subr.mxu0 0.0
      %4558 = vmatpush1.msra.mxu0 0.0
      %4559 = vmatprep.subr.mxu0 0.0
      %4560 = vmatpush1.msra.mxu0 0.0
      %4561 = vmatprep.subr.mxu0 0.0
      %4562 = vmatpush1.msra.mxu0 0.0
      %4563 = vmatprep.subr.mxu0 0.0
      %4564 = vmatpush1.msra.mxu0 0.0
      %4565 = vmatprep.subr.mxu0 0.0
      %4566 = vmatpush1.msra.mxu0 0.0
      %4567 = vmatprep.subr.mxu0 0.0
      %4568 = vmatpush1.msra.mxu0 0.0
      %4569 = vmatprep.subr.mxu0 0.0
      %4570 = vmatpush1.msra.mxu0 0.0
      %4571 = vmatprep.subr.mxu0 0.0
      %4572 = vmatpush1.msra.mxu0 0.0
      %4573 = vmatprep.subr.mxu0 0.0
      %4574 = vmatpush1.msra.mxu0 0.0
      %4575 = vmatprep.subr.mxu0 0.0
      %4576 = vmatpush1.msra.mxu0 %v4543
      %4577 = vmatprep.subr.mxu0 0.0
      %4578 = vmatpush2.msra.mxu0 0.0
      %4579 = vmatprep.subr.mxu0 0.0
      %4580 = vmatpush2.msra.mxu0 0.0
      %4581 = vmatprep.subr.mxu0 0.0
      %4582 = vmatpush2.msra.mxu0 0.0
      %4583 = vmatprep.subr.mxu0 0.0
      %4584 = vmatpush2.msra.mxu0 0.0
      %4585 = vmatprep.subr.mxu0 0.0
      %4586 = vmatpush2.msra.mxu0 0.0
      %4587 = vmatprep.subr.mxu0 0.0
      %4588 = vmatpush2.msra.mxu0 0.0
      %4589 = vmatprep.subr.mxu0 0.0
      %4590 = vmatpush2.msra.mxu0 0.0
      %4591 = vmatprep.subr.mxu0 0.0
      %4592 = vmatpush2.msra.mxu0 0.0
      %4593 = vmatprep.subr.mxu0 0.0
      %4594 = vmatpush2.msra.mxu0 0.0
      %4595 = vmatprep.subr.mxu0 0.0
      %4596 = vmatpush2.msra.mxu0 0.0
      %4597 = vmatprep.subr.mxu0 0.0
      %4598 = vmatpush2.msra.mxu0 0.0
      %4599 = vmatprep.subr.mxu0 0.0
      %4600 = vmatpush2.msra.mxu0 0.0
      %4601 = vmatprep.subr.mxu0 0.0
      %4602 = vmatpush2.msra.mxu0 0.0
      %4603 = vmatprep.subr.mxu0 0.0
      %4604 = vmatpush2.msra.mxu0 0.0
      %4605 = vmatprep.subr.mxu0 0.0
      %4606 = vmatpush2.msra.mxu0 0.0
      %4607 = vmatprep.subr.mxu0 0.0
      %4608 = vmatpush2.msra.mxu0 0.0
      %4609 = vmatprep.mubr.f32.mxu0 0.0
      %4610 = vmatmul.mubr.f32.gmra.mxu0 %v4519
      %v4611 = vpop.f32.mrf.mxu0
      %v4612 = vadd.f32 %v4480, %v4611
      %v4613 = vpop.f32.mrf.mxu0
      %4614 = vmatprep.mubr.f32.mxu0 0.0
      %4615 = vmatmul.mubr.f32.gmra.mxu0 %v4522
      %v4616 = vpop.f32.mrf.mxu0
      %v4617 = vadd.f32 %v4485, %v4616
      %v4618 = vpop.f32.mrf.mxu0
      %4619 = vmatprep.mubr.f32.mxu0 0.0
      %4620 = vmatmul.mubr.f32.gmra.mxu0 %v4525
      %v4621 = vpop.f32.mrf.mxu0
      %v4622 = vadd.f32 %v4490, %v4621
      %v4623 = vpop.f32.mrf.mxu0
      %4624 = vmatprep.mubr.f32.mxu0 0.0
      %4625 = vmatmul.mubr.f32.gmra.mxu0 %v4528
      %v4626 = vpop.f32.mrf.mxu0
      %v4627 = vadd.f32 %v4495, %v4626
      %v4628 = vpop.f32.mrf.mxu0
      %4629 = vmatprep.mubr.f32.mxu0 0.0
      %4630 = vmatmul.mubr.f32.gmra.mxu0 %v4531
      %v4631 = vpop.f32.mrf.mxu0
      %v4632 = vadd.f32 %v4500, %v4631
      %v4633 = vpop.f32.mrf.mxu0
      %4634 = vmatprep.mubr.f32.mxu0 0.0
      %4635 = vmatmul.mubr.f32.gmra.mxu0 %v4534
      %v4636 = vpop.f32.mrf.mxu0
      %v4637 = vadd.f32 %v4505, %v4636
      %v4638 = vpop.f32.mrf.mxu0
      %4639 = vmatprep.mubr.f32.mxu0 0.0
      %4640 = vmatmul.mubr.f32.gmra.mxu0 %v4537
      %v4641 = vpop.f32.mrf.mxu0
      %v4642 = vadd.f32 %v4510, %v4641
      %v4643 = vpop.f32.mrf.mxu0
      %4644 = vmatprep.mubr.f32.mxu0 0.0
      %4645 = vmatmul.mubr.f32.gmra.mxu0 %v4540
      %v4646 = vpop.f32.mrf.mxu0
      %v4647 = vadd.f32 %v4515, %v4646
      %v4648 = vpop.f32.mrf.mxu0
      %4649 = vdwg.mxu0
      %v4650 = vld [vmem:[%s3885] sm:$0xff]
      %v4651 = vld [vmem:[%s3885 + $0x8] sm:$0xff]
      %v4652 = vld [vmem:[%s3885 + $0x10] sm:$0xff]
      %v4653 = vld [vmem:[%s3885 + $0x18] sm:$0xff]
      %v4654 = vld [vmem:[%s3885 + $0x20] sm:$0xff]
      %v4655 = vld [vmem:[%s3885 + $0x28] sm:$0xff]
      %v4656 = vld [vmem:[%s3885 + $0x30] sm:$0xff]
      %v4657 = vld [vmem:[%s3885 + $0x38] sm:$0xff]
      %s4658 = scalar_lea.vmem %s14, 8
      %v4659 = vld [vmem:[%s4658] sm:$0xf]
      %v4661 = vsel %vm709, %v4650, 0
      %v4664 = vsel %vm709, %v4651, 0
      %v4667 = vsel %vm709, %v4652, 0
      %v4670 = vsel %vm709, %v4653, 0
      %v4673 = vsel %vm709, %v4654, 0
      %v4676 = vsel %vm709, %v4655, 0
      %v4679 = vsel %vm709, %v4656, 0
      %v4682 = vsel %vm709, %v4657, 0
      %v4685 = vsel %vm891, %v4659, 0
      %4687 = vmatprep.subr.mxu0 0.0
      %4688 = vmatpush1.msra.mxu0 0.0
      %4689 = vmatprep.subr.mxu0 0.0
      %4690 = vmatpush1.msra.mxu0 0.0
      %4691 = vmatprep.subr.mxu0 0.0
      %4692 = vmatpush1.msra.mxu0 0.0
      %4693 = vmatprep.subr.mxu0 0.0
      %4694 = vmatpush1.msra.mxu0 0.0
      %4695 = vmatprep.subr.mxu0 0.0
      %4696 = vmatpush1.msra.mxu0 0.0
      %4697 = vmatprep.subr.mxu0 0.0
      %4698 = vmatpush1.msra.mxu0 0.0
      %4699 = vmatprep.subr.mxu0 0.0
      %4700 = vmatpush1.msra.mxu0 0.0
      %4701 = vmatprep.subr.mxu0 0.0
      %4702 = vmatpush1.msra.mxu0 0.0
      %4703 = vmatprep.subr.mxu0 0.0
      %4704 = vmatpush1.msra.mxu0 0.0
      %4705 = vmatprep.subr.mxu0 0.0
      %4706 = vmatpush1.msra.mxu0 0.0
      %4707 = vmatprep.subr.mxu0 0.0
      %4708 = vmatpush1.msra.mxu0 0.0
      %4709 = vmatprep.subr.mxu0 0.0
      %4710 = vmatpush1.msra.mxu0 0.0
      %4711 = vmatprep.subr.mxu0 0.0
      %4712 = vmatpush1.msra.mxu0 0.0
      %4713 = vmatprep.subr.mxu0 0.0
      %4714 = vmatpush1.msra.mxu0 0.0
      %4715 = vmatprep.subr.mxu0 0.0
      %4716 = vmatpush1.msra.mxu0 0.0
      %4717 = vmatprep.subr.mxu0 0.0
      %4718 = vmatpush1.msra.mxu0 %v4685
      %4719 = vmatprep.subr.mxu0 0.0
      %4720 = vmatpush2.msra.mxu0 0.0
      %4721 = vmatprep.subr.mxu0 0.0
      %4722 = vmatpush2.msra.mxu0 0.0
      %4723 = vmatprep.subr.mxu0 0.0
      %4724 = vmatpush2.msra.mxu0 0.0
      %4725 = vmatprep.subr.mxu0 0.0
      %4726 = vmatpush2.msra.mxu0 0.0
      %4727 = vmatprep.subr.mxu0 0.0
      %4728 = vmatpush2.msra.mxu0 0.0
      %4729 = vmatprep.subr.mxu0 0.0
      %4730 = vmatpush2.msra.mxu0 0.0
      %4731 = vmatprep.subr.mxu0 0.0
      %4732 = vmatpush2.msra.mxu0 0.0
      %4733 = vmatprep.subr.mxu0 0.0
      %4734 = vmatpush2.msra.mxu0 0.0
      %4735 = vmatprep.subr.mxu0 0.0
      %4736 = vmatpush2.msra.mxu0 0.0
      %4737 = vmatprep.subr.mxu0 0.0
      %4738 = vmatpush2.msra.mxu0 0.0
      %4739 = vmatprep.subr.mxu0 0.0
      %4740 = vmatpush2.msra.mxu0 0.0
      %4741 = vmatprep.subr.mxu0 0.0
      %4742 = vmatpush2.msra.mxu0 0.0
      %4743 = vmatprep.subr.mxu0 0.0
      %4744 = vmatpush2.msra.mxu0 0.0
      %4745 = vmatprep.subr.mxu0 0.0
      %4746 = vmatpush2.msra.mxu0 0.0
      %4747 = vmatprep.subr.mxu0 0.0
      %4748 = vmatpush2.msra.mxu0 0.0
      %4749 = vmatprep.subr.mxu0 0.0
      %4750 = vmatpush2.msra.mxu0 0.0
      %4751 = vmatprep.mubr.f32.mxu0 0.0
      %4752 = vmatmul.mubr.f32.gmra.mxu0 %v4661
      %v4753 = vpop.f32.mrf.mxu0
      %v4754 = vadd.f32 0.0, %v4753
      %v4755 = vpop.f32.mrf.mxu0
      %4756 = vmatprep.mubr.f32.mxu0 0.0
      %4757 = vmatmul.mubr.f32.gmra.mxu0 %v4664
      %v4758 = vpop.f32.mrf.mxu0
      %v4759 = vadd.f32 0.0, %v4758
      %v4760 = vpop.f32.mrf.mxu0
      %4761 = vmatprep.mubr.f32.mxu0 0.0
      %4762 = vmatmul.mubr.f32.gmra.mxu0 %v4667
      %v4763 = vpop.f32.mrf.mxu0
      %v4764 = vadd.f32 0.0, %v4763
      %v4765 = vpop.f32.mrf.mxu0
      %4766 = vmatprep.mubr.f32.mxu0 0.0
      %4767 = vmatmul.mubr.f32.gmra.mxu0 %v4670
      %v4768 = vpop.f32.mrf.mxu0
      %v4769 = vadd.f32 0.0, %v4768
      %v4770 = vpop.f32.mrf.mxu0
      %4771 = vmatprep.mubr.f32.mxu0 0.0
      %4772 = vmatmul.mubr.f32.gmra.mxu0 %v4673
      %v4773 = vpop.f32.mrf.mxu0
      %v4774 = vadd.f32 0.0, %v4773
      %v4775 = vpop.f32.mrf.mxu0
      %4776 = vmatprep.mubr.f32.mxu0 0.0
      %4777 = vmatmul.mubr.f32.gmra.mxu0 %v4676
      %v4778 = vpop.f32.mrf.mxu0
      %v4779 = vadd.f32 0.0, %v4778
      %v4780 = vpop.f32.mrf.mxu0
      %4781 = vmatprep.mubr.f32.mxu0 0.0
      %4782 = vmatmul.mubr.f32.gmra.mxu0 %v4679
      %v4783 = vpop.f32.mrf.mxu0
      %v4784 = vadd.f32 0.0, %v4783
      %v4785 = vpop.f32.mrf.mxu0
      %4786 = vmatprep.mubr.f32.mxu0 0.0
      %4787 = vmatmul.mubr.f32.gmra.mxu0 %v4682
      %v4788 = vpop.f32.mrf.mxu0
      %v4789 = vadd.f32 0.0, %v4788
      %v4790 = vpop.f32.mrf.mxu0
      %4791 = vdwg.mxu0
      %v4792 = vadd.f32 %v4612, %v4754
      %v4793 = vadd.f32 %v4617, %v4759
      %v4794 = vadd.f32 %v4622, %v4764
      %v4795 = vadd.f32 %v4627, %v4769
      %v4796 = vadd.f32 %v4632, %v4774
      %v4797 = vadd.f32 %v4637, %v4779
      %v4798 = vadd.f32 %v4642, %v4784
      %v4799 = vadd.f32 %v4647, %v4789
      %s4800 = scalar_lea.vmem [#allocation5], 24
      %v4801 = vld [vmem:[%s4800] sm:$0xff]
      %v4802 = vld [vmem:[%s4800 + $0x8] sm:$0xff]
      %v4803 = vld [vmem:[%s4800 + $0x10] sm:$0xff]
      %v4804 = vld [vmem:[%s4800 + $0x18] sm:$0xff]
      %v4805 = vld [vmem:[%s4800 + $0x20] sm:$0xff]
      %v4806 = vld [vmem:[%s4800 + $0x28] sm:$0xff]
      %v4807 = vld [vmem:[%s4800 + $0x30] sm:$0xff]
      %v4808 = vld [vmem:[%s4800 + $0x38] sm:$0xff]
      %s4809 = scalar_lea.vmem %s14, 12
      %v4810 = vld [vmem:[%s4809] sm:$0xf]
      %v4812 = vsel %vm709, %v4801, 0
      %v4815 = vsel %vm709, %v4802, 0
      %v4818 = vsel %vm709, %v4803, 0
      %v4821 = vsel %vm709, %v4804, 0
      %v4824 = vsel %vm709, %v4805, 0
      %v4827 = vsel %vm709, %v4806, 0
      %v4830 = vsel %vm709, %v4807, 0
      %v4833 = vsel %vm709, %v4808, 0
      %v4836 = vsel %vm891, %v4810, 0
      %4838 = vmatprep.subr.mxu0 0.0
      %4839 = vmatpush1.msra.mxu0 0.0
      %4840 = vmatprep.subr.mxu0 0.0
      %4841 = vmatpush1.msra.mxu0 0.0
      %4842 = vmatprep.subr.mxu0 0.0
      %4843 = vmatpush1.msra.mxu0 0.0
      %4844 = vmatprep.subr.mxu0 0.0
      %4845 = vmatpush1.msra.mxu0 0.0
      %4846 = vmatprep.subr.mxu0 0.0
      %4847 = vmatpush1.msra.mxu0 0.0
      %4848 = vmatprep.subr.mxu0 0.0
      %4849 = vmatpush1.msra.mxu0 0.0
      %4850 = vmatprep.subr.mxu0 0.0
      %4851 = vmatpush1.msra.mxu0 0.0
      %4852 = vmatprep.subr.mxu0 0.0
      %4853 = vmatpush1.msra.mxu0 0.0
      %4854 = vmatprep.subr.mxu0 0.0
      %4855 = vmatpush1.msra.mxu0 0.0
      %4856 = vmatprep.subr.mxu0 0.0
      %4857 = vmatpush1.msra.mxu0 0.0
      %4858 = vmatprep.subr.mxu0 0.0
      %4859 = vmatpush1.msra.mxu0 0.0
      %4860 = vmatprep.subr.mxu0 0.0
      %4861 = vmatpush1.msra.mxu0 0.0
      %4862 = vmatprep.subr.mxu0 0.0
      %4863 = vmatpush1.msra.mxu0 0.0
      %4864 = vmatprep.subr.mxu0 0.0
      %4865 = vmatpush1.msra.mxu0 0.0
      %4866 = vmatprep.subr.mxu0 0.0
      %4867 = vmatpush1.msra.mxu0 0.0
      %4868 = vmatprep.subr.mxu0 0.0
      %4869 = vmatpush1.msra.mxu0 %v4836
      %4870 = vmatprep.subr.mxu0 0.0
      %4871 = vmatpush2.msra.mxu0 0.0
      %4872 = vmatprep.subr.mxu0 0.0
      %4873 = vmatpush2.msra.mxu0 0.0
      %4874 = vmatprep.subr.mxu0 0.0
      %4875 = vmatpush2.msra.mxu0 0.0
      %4876 = vmatprep.subr.mxu0 0.0
      %4877 = vmatpush2.msra.mxu0 0.0
      %4878 = vmatprep.subr.mxu0 0.0
      %4879 = vmatpush2.msra.mxu0 0.0
      %4880 = vmatprep.subr.mxu0 0.0
      %4881 = vmatpush2.msra.mxu0 0.0
      %4882 = vmatprep.subr.mxu0 0.0
      %4883 = vmatpush2.msra.mxu0 0.0
      %4884 = vmatprep.subr.mxu0 0.0
      %4885 = vmatpush2.msra.mxu0 0.0
      %4886 = vmatprep.subr.mxu0 0.0
      %4887 = vmatpush2.msra.mxu0 0.0
      %4888 = vmatprep.subr.mxu0 0.0
      %4889 = vmatpush2.msra.mxu0 0.0
      %4890 = vmatprep.subr.mxu0 0.0
      %4891 = vmatpush2.msra.mxu0 0.0
      %4892 = vmatprep.subr.mxu0 0.0
      %4893 = vmatpush2.msra.mxu0 0.0
      %4894 = vmatprep.subr.mxu0 0.0
      %4895 = vmatpush2.msra.mxu0 0.0
      %4896 = vmatprep.subr.mxu0 0.0
      %4897 = vmatpush2.msra.mxu0 0.0
      %4898 = vmatprep.subr.mxu0 0.0
      %4899 = vmatpush2.msra.mxu0 0.0
      %4900 = vmatprep.subr.mxu0 0.0
      %4901 = vmatpush2.msra.mxu0 0.0
      %4902 = vmatprep.mubr.f32.mxu0 0.0
      %4903 = vmatmul.mubr.f32.gmra.mxu0 %v4812
      %v4904 = vpop.f32.mrf.mxu0
      %v4905 = vadd.f32 0.0, %v4904
      %v4906 = vpop.f32.mrf.mxu0
      %4907 = vmatprep.mubr.f32.mxu0 0.0
      %4908 = vmatmul.mubr.f32.gmra.mxu0 %v4815
      %v4909 = vpop.f32.mrf.mxu0
      %v4910 = vadd.f32 0.0, %v4909
      %v4911 = vpop.f32.mrf.mxu0
      %4912 = vmatprep.mubr.f32.mxu0 0.0
      %4913 = vmatmul.mubr.f32.gmra.mxu0 %v4818
      %v4914 = vpop.f32.mrf.mxu0
      %v4915 = vadd.f32 0.0, %v4914
      %v4916 = vpop.f32.mrf.mxu0
      %4917 = vmatprep.mubr.f32.mxu0 0.0
      %4918 = vmatmul.mubr.f32.gmra.mxu0 %v4821
      %v4919 = vpop.f32.mrf.mxu0
      %v4920 = vadd.f32 0.0, %v4919
      %v4921 = vpop.f32.mrf.mxu0
      %4922 = vmatprep.mubr.f32.mxu0 0.0
      %4923 = vmatmul.mubr.f32.gmra.mxu0 %v4824
      %v4924 = vpop.f32.mrf.mxu0
      %v4925 = vadd.f32 0.0, %v4924
      %v4926 = vpop.f32.mrf.mxu0
      %4927 = vmatprep.mubr.f32.mxu0 0.0
      %4928 = vmatmul.mubr.f32.gmra.mxu0 %v4827
      %v4929 = vpop.f32.mrf.mxu0
      %v4930 = vadd.f32 0.0, %v4929
      %v4931 = vpop.f32.mrf.mxu0
      %4932 = vmatprep.mubr.f32.mxu0 0.0
      %4933 = vmatmul.mubr.f32.gmra.mxu0 %v4830
      %v4934 = vpop.f32.mrf.mxu0
      %v4935 = vadd.f32 0.0, %v4934
      %v4936 = vpop.f32.mrf.mxu0
      %4937 = vmatprep.mubr.f32.mxu0 0.0
      %4938 = vmatmul.mubr.f32.gmra.mxu0 %v4833
      %v4939 = vpop.f32.mrf.mxu0
      %v4940 = vadd.f32 0.0, %v4939
      %v4941 = vpop.f32.mrf.mxu0
      %4942 = vdwg.mxu0
      %v4943 = vadd.f32 %v4792, %v4905
      %v4944 = vadd.f32 %v4793, %v4910
      %v4945 = vadd.f32 %v4794, %v4915
      %v4946 = vadd.f32 %v4795, %v4920
      %v4947 = vadd.f32 %v4796, %v4925
      %v4948 = vadd.f32 %v4797, %v4930
      %v4949 = vadd.f32 %v4798, %v4935
      %v4950 = vadd.f32 %v4799, %v4940
      %s4951 = scalar_lea.vmem [#allocation5], 32
      %v4952 = vld [vmem:[%s4951] sm:$0xff]
      %v4953 = vld [vmem:[%s4951 + $0x8] sm:$0xff]
      %v4954 = vld [vmem:[%s4951 + $0x10] sm:$0xff]
      %v4955 = vld [vmem:[%s4951 + $0x18] sm:$0xff]
      %v4956 = vld [vmem:[%s4951 + $0x20] sm:$0xff]
      %v4957 = vld [vmem:[%s4951 + $0x28] sm:$0xff]
      %v4958 = vld [vmem:[%s4951 + $0x30] sm:$0xff]
      %v4959 = vld [vmem:[%s4951 + $0x38] sm:$0xff]
      %s4960 = scalar_lea.vmem %s14, 16
      %v4961 = vld [vmem:[%s4960] sm:$0xf]
      %v4963 = vsel %vm709, %v4952, 0
      %v4966 = vsel %vm709, %v4953, 0
      %v4969 = vsel %vm709, %v4954, 0
      %v4972 = vsel %vm709, %v4955, 0
      %v4975 = vsel %vm709, %v4956, 0
      %v4978 = vsel %vm709, %v4957, 0
      %v4981 = vsel %vm709, %v4958, 0
      %v4984 = vsel %vm709, %v4959, 0
      %v4987 = vsel %vm891, %v4961, 0
      %4989 = vmatprep.subr.mxu0 0.0
      %4990 = vmatpush1.msra.mxu0 0.0
      %4991 = vmatprep.subr.mxu0 0.0
      %4992 = vmatpush1.msra.mxu0 0.0
      %4993 = vmatprep.subr.mxu0 0.0
      %4994 = vmatpush1.msra.mxu0 0.0
      %4995 = vmatprep.subr.mxu0 0.0
      %4996 = vmatpush1.msra.mxu0 0.0
      %4997 = vmatprep.subr.mxu0 0.0
      %4998 = vmatpush1.msra.mxu0 0.0
      %4999 = vmatprep.subr.mxu0 0.0
      %5000 = vmatpush1.msra.mxu0 0.0
      %5001 = vmatprep.subr.mxu0 0.0
      %5002 = vmatpush1.msra.mxu0 0.0
      %5003 = vmatprep.subr.mxu0 0.0
      %5004 = vmatpush1.msra.mxu0 0.0
      %5005 = vmatprep.subr.mxu0 0.0
      %5006 = vmatpush1.msra.mxu0 0.0
      %5007 = vmatprep.subr.mxu0 0.0
      %5008 = vmatpush1.msra.mxu0 0.0
      %5009 = vmatprep.subr.mxu0 0.0
      %5010 = vmatpush1.msra.mxu0 0.0
      %5011 = vmatprep.subr.mxu0 0.0
      %5012 = vmatpush1.msra.mxu0 0.0
      %5013 = vmatprep.subr.mxu0 0.0
      %5014 = vmatpush1.msra.mxu0 0.0
      %5015 = vmatprep.subr.mxu0 0.0
      %5016 = vmatpush1.msra.mxu0 0.0
      %5017 = vmatprep.subr.mxu0 0.0
      %5018 = vmatpush1.msra.mxu0 0.0
      %5019 = vmatprep.subr.mxu0 0.0
      %5020 = vmatpush1.msra.mxu0 %v4987
      %5021 = vmatprep.subr.mxu0 0.0
      %5022 = vmatpush2.msra.mxu0 0.0
      %5023 = vmatprep.subr.mxu0 0.0
      %5024 = vmatpush2.msra.mxu0 0.0
      %5025 = vmatprep.subr.mxu0 0.0
      %5026 = vmatpush2.msra.mxu0 0.0
      %5027 = vmatprep.subr.mxu0 0.0
      %5028 = vmatpush2.msra.mxu0 0.0
      %5029 = vmatprep.subr.mxu0 0.0
      %5030 = vmatpush2.msra.mxu0 0.0
      %5031 = vmatprep.subr.mxu0 0.0
      %5032 = vmatpush2.msra.mxu0 0.0
      %5033 = vmatprep.subr.mxu0 0.0
      %5034 = vmatpush2.msra.mxu0 0.0
      %5035 = vmatprep.subr.mxu0 0.0
      %5036 = vmatpush2.msra.mxu0 0.0
      %5037 = vmatprep.subr.mxu0 0.0
      %5038 = vmatpush2.msra.mxu0 0.0
      %5039 = vmatprep.subr.mxu0 0.0
      %5040 = vmatpush2.msra.mxu0 0.0
      %5041 = vmatprep.subr.mxu0 0.0
      %5042 = vmatpush2.msra.mxu0 0.0
      %5043 = vmatprep.subr.mxu0 0.0
      %5044 = vmatpush2.msra.mxu0 0.0
      %5045 = vmatprep.subr.mxu0 0.0
      %5046 = vmatpush2.msra.mxu0 0.0
      %5047 = vmatprep.subr.mxu0 0.0
      %5048 = vmatpush2.msra.mxu0 0.0
      %5049 = vmatprep.subr.mxu0 0.0
      %5050 = vmatpush2.msra.mxu0 0.0
      %5051 = vmatprep.subr.mxu0 0.0
      %5052 = vmatpush2.msra.mxu0 0.0
      %5053 = vmatprep.mubr.f32.mxu0 0.0
      %5054 = vmatmul.mubr.f32.gmra.mxu0 %v4963
      %v5055 = vpop.f32.mrf.mxu0
      %v5056 = vadd.f32 0.0, %v5055
      %v5057 = vpop.f32.mrf.mxu0
      %5058 = vmatprep.mubr.f32.mxu0 0.0
      %5059 = vmatmul.mubr.f32.gmra.mxu0 %v4966
      %v5060 = vpop.f32.mrf.mxu0
      %v5061 = vadd.f32 0.0, %v5060
      %v5062 = vpop.f32.mrf.mxu0
      %5063 = vmatprep.mubr.f32.mxu0 0.0
      %5064 = vmatmul.mubr.f32.gmra.mxu0 %v4969
      %v5065 = vpop.f32.mrf.mxu0
      %v5066 = vadd.f32 0.0, %v5065
      %v5067 = vpop.f32.mrf.mxu0
      %5068 = vmatprep.mubr.f32.mxu0 0.0
      %5069 = vmatmul.mubr.f32.gmra.mxu0 %v4972
      %v5070 = vpop.f32.mrf.mxu0
      %v5071 = vadd.f32 0.0, %v5070
      %v5072 = vpop.f32.mrf.mxu0
      %5073 = vmatprep.mubr.f32.mxu0 0.0
      %5074 = vmatmul.mubr.f32.gmra.mxu0 %v4975
      %v5075 = vpop.f32.mrf.mxu0
      %v5076 = vadd.f32 0.0, %v5075
      %v5077 = vpop.f32.mrf.mxu0
      %5078 = vmatprep.mubr.f32.mxu0 0.0
      %5079 = vmatmul.mubr.f32.gmra.mxu0 %v4978
      %v5080 = vpop.f32.mrf.mxu0
      %v5081 = vadd.f32 0.0, %v5080
      %v5082 = vpop.f32.mrf.mxu0
      %5083 = vmatprep.mubr.f32.mxu0 0.0
      %5084 = vmatmul.mubr.f32.gmra.mxu0 %v4981
      %v5085 = vpop.f32.mrf.mxu0
      %v5086 = vadd.f32 0.0, %v5085
      %v5087 = vpop.f32.mrf.mxu0
      %5088 = vmatprep.mubr.f32.mxu0 0.0
      %5089 = vmatmul.mubr.f32.gmra.mxu0 %v4984
      %v5090 = vpop.f32.mrf.mxu0
      %v5091 = vadd.f32 0.0, %v5090
      %v5092 = vpop.f32.mrf.mxu0
      %5093 = vdwg.mxu0
      %v5094 = vadd.f32 %v4943, %v5056
      %v5095 = vadd.f32 %v4944, %v5061
      %v5096 = vadd.f32 %v4945, %v5066
      %v5097 = vadd.f32 %v4946, %v5071
      %v5098 = vadd.f32 %v4947, %v5076
      %v5099 = vadd.f32 %v4948, %v5081
      %v5100 = vadd.f32 %v4949, %v5086
      %v5101 = vadd.f32 %v4950, %v5091
      %v5102 = vld [vmem:[%s15] sm:$0x1]
      %v5104 = vlaneseq
      %v5105 = vshrl.u32 %v5104, 7
      %v5106 = vsub.s32 0, %v5105
      %v5107 = vrot.slane %v5102, %v5106
      %v5109 = vmul.f32 %v5094, %v5107
      %v5110 = vmul.f32 %v5095, %v5107
      %v5111 = vmul.f32 %v5096, %v5107
      %v5112 = vmul.f32 %v5097, %v5107
      %v5113 = vmul.f32 %v5098, %v5107
      %v5114 = vmul.f32 %v5099, %v5107
      %v5115 = vmul.f32 %v5100, %v5107
      %v5116 = vmul.f32 %v5101, %v5107
      %v5117 = vld [vmem:[%s16] sm:$0x1]
      %v5119 = vlaneseq
      %v5120 = vshrl.u32 %v5119, 7
      %v5121 = vsub.s32 0, %v5120
      %v5122 = vrot.slane %v5117, %v5121
      %v5124 = vadd.f32 %v5109, %v5122
      %v5125 = vadd.f32 %v5110, %v5122
      %v5126 = vadd.f32 %v5111, %v5122
      %v5127 = vadd.f32 %v5112, %v5122
      %v5128 = vadd.f32 %v5113, %v5122
      %v5129 = vadd.f32 %v5114, %v5122
      %v5130 = vadd.f32 %v5115, %v5122
      %v5131 = vadd.f32 %v5116, %v5122
      %v5132 = vmax.f32 %v5124, 0.0
      %v5133 = vmax.f32 %v5125, 0.0
      %v5134 = vmax.f32 %v5126, 0.0
      %v5135 = vmax.f32 %v5127, 0.0
      %v5136 = vmax.f32 %v5128, 0.0
      %v5137 = vmax.f32 %v5129, 0.0
      %v5138 = vmax.f32 %v5130, 0.0
      %v5139 = vmax.f32 %v5131, 0.0
      %v5140 = vadd.f32 %v4358, %v5132
      %v5141 = vadd.f32 %v4359, %v5133
      %v5142 = vadd.f32 %v4360, %v5134
      %v5143 = vadd.f32 %v4361, %v5135
      %v5144 = vadd.f32 %v4362, %v5136
      %v5145 = vadd.f32 %v4363, %v5137
      %v5146 = vadd.f32 %v4364, %v5138
      %v5147 = vadd.f32 %v4365, %v5139
      %v5148 = vld [vmem:[%s17] sm:$0xf]
      %v5150 = vsel %vm709, %v5140, 0
      %v5153 = vsel %vm709, %v5141, 0
      %v5156 = vsel %vm709, %v5142, 0
      %v5159 = vsel %vm709, %v5143, 0
      %v5162 = vsel %vm709, %v5144, 0
      %v5165 = vsel %vm709, %v5145, 0
      %v5168 = vsel %vm709, %v5146, 0
      %v5171 = vsel %vm709, %v5147, 0
      %v5174 = vsel %vm891, %v5148, 0
      %5176 = vmatprep.subr.mxu0 0.0
      %5177 = vmatpush1.msra.mxu0 0.0
      %5178 = vmatprep.subr.mxu0 0.0
      %5179 = vmatpush1.msra.mxu0 0.0
      %5180 = vmatprep.subr.mxu0 0.0
      %5181 = vmatpush1.msra.mxu0 0.0
      %5182 = vmatprep.subr.mxu0 0.0
      %5183 = vmatpush1.msra.mxu0 0.0
      %5184 = vmatprep.subr.mxu0 0.0
      %5185 = vmatpush1.msra.mxu0 0.0
      %5186 = vmatprep.subr.mxu0 0.0
      %5187 = vmatpush1.msra.mxu0 0.0
      %5188 = vmatprep.subr.mxu0 0.0
      %5189 = vmatpush1.msra.mxu0 0.0
      %5190 = vmatprep.subr.mxu0 0.0
      %5191 = vmatpush1.msra.mxu0 0.0
      %5192 = vmatprep.subr.mxu0 0.0
      %5193 = vmatpush1.msra.mxu0 0.0
      %5194 = vmatprep.subr.mxu0 0.0
      %5195 = vmatpush1.msra.mxu0 0.0
      %5196 = vmatprep.subr.mxu0 0.0
      %5197 = vmatpush1.msra.mxu0 0.0
      %5198 = vmatprep.subr.mxu0 0.0
      %5199 = vmatpush1.msra.mxu0 0.0
      %5200 = vmatprep.subr.mxu0 0.0
      %5201 = vmatpush1.msra.mxu0 0.0
      %5202 = vmatprep.subr.mxu0 0.0
      %5203 = vmatpush1.msra.mxu0 0.0
      %5204 = vmatprep.subr.mxu0 0.0
      %5205 = vmatpush1.msra.mxu0 0.0
      %5206 = vmatprep.subr.mxu0 0.0
      %5207 = vmatpush1.msra.mxu0 %v5174
      %5208 = vmatprep.subr.mxu0 0.0
      %5209 = vmatpush2.msra.mxu0 0.0
      %5210 = vmatprep.subr.mxu0 0.0
      %5211 = vmatpush2.msra.mxu0 0.0
      %5212 = vmatprep.subr.mxu0 0.0
      %5213 = vmatpush2.msra.mxu0 0.0
      %5214 = vmatprep.subr.mxu0 0.0
      %5215 = vmatpush2.msra.mxu0 0.0
      %5216 = vmatprep.subr.mxu0 0.0
      %5217 = vmatpush2.msra.mxu0 0.0
      %5218 = vmatprep.subr.mxu0 0.0
      %5219 = vmatpush2.msra.mxu0 0.0
      %5220 = vmatprep.subr.mxu0 0.0
      %5221 = vmatpush2.msra.mxu0 0.0
      %5222 = vmatprep.subr.mxu0 0.0
      %5223 = vmatpush2.msra.mxu0 0.0
      %5224 = vmatprep.subr.mxu0 0.0
      %5225 = vmatpush2.msra.mxu0 0.0
      %5226 = vmatprep.subr.mxu0 0.0
      %5227 = vmatpush2.msra.mxu0 0.0
      %5228 = vmatprep.subr.mxu0 0.0
      %5229 = vmatpush2.msra.mxu0 0.0
      %5230 = vmatprep.subr.mxu0 0.0
      %5231 = vmatpush2.msra.mxu0 0.0
      %5232 = vmatprep.subr.mxu0 0.0
      %5233 = vmatpush2.msra.mxu0 0.0
      %5234 = vmatprep.subr.mxu0 0.0
      %5235 = vmatpush2.msra.mxu0 0.0
      %5236 = vmatprep.subr.mxu0 0.0
      %5237 = vmatpush2.msra.mxu0 0.0
      %5238 = vmatprep.subr.mxu0 0.0
      %5239 = vmatpush2.msra.mxu0 0.0
      %5240 = vmatprep.mubr.f32.mxu0 0.0
      %5241 = vmatmul.mubr.f32.gmra.mxu0 %v5150
      %v5242 = vpop.f32.mrf.mxu0
      %v5243 = vadd.f32 0.0, %v5242
      %v5244 = vpop.f32.mrf.mxu0
      %5245 = vmatprep.mubr.f32.mxu0 0.0
      %5246 = vmatmul.mubr.f32.gmra.mxu0 %v5153
      %v5247 = vpop.f32.mrf.mxu0
      %v5248 = vadd.f32 0.0, %v5247
      %v5249 = vpop.f32.mrf.mxu0
      %5250 = vmatprep.mubr.f32.mxu0 0.0
      %5251 = vmatmul.mubr.f32.gmra.mxu0 %v5156
      %v5252 = vpop.f32.mrf.mxu0
      %v5253 = vadd.f32 0.0, %v5252
      %v5254 = vpop.f32.mrf.mxu0
      %5255 = vmatprep.mubr.f32.mxu0 0.0
      %5256 = vmatmul.mubr.f32.gmra.mxu0 %v5159
      %v5257 = vpop.f32.mrf.mxu0
      %v5258 = vadd.f32 0.0, %v5257
      %v5259 = vpop.f32.mrf.mxu0
      %5260 = vmatprep.mubr.f32.mxu0 0.0
      %5261 = vmatmul.mubr.f32.gmra.mxu0 %v5162
      %v5262 = vpop.f32.mrf.mxu0
      %v5263 = vadd.f32 0.0, %v5262
      %v5264 = vpop.f32.mrf.mxu0
      %5265 = vmatprep.mubr.f32.mxu0 0.0
      %5266 = vmatmul.mubr.f32.gmra.mxu0 %v5165
      %v5267 = vpop.f32.mrf.mxu0
      %v5268 = vadd.f32 0.0, %v5267
      %v5269 = vpop.f32.mrf.mxu0
      %5270 = vmatprep.mubr.f32.mxu0 0.0
      %5271 = vmatmul.mubr.f32.gmra.mxu0 %v5168
      %v5272 = vpop.f32.mrf.mxu0
      %v5273 = vadd.f32 0.0, %v5272
      %v5274 = vpop.f32.mrf.mxu0
      %5275 = vmatprep.mubr.f32.mxu0 0.0
      %5276 = vmatmul.mubr.f32.gmra.mxu0 %v5171
      %v5277 = vpop.f32.mrf.mxu0
      %v5278 = vadd.f32 0.0, %v5277
      %v5279 = vpop.f32.mrf.mxu0
      %5280 = vdwg.mxu0
      %v5281 = vld [vmem:[%s18] sm:$0x1]
      %v5283 = vlaneseq
      %v5284 = vshrl.u32 %v5283, 7
      %v5285 = vsub.s32 0, %v5284
      %v5286 = vrot.slane %v5281, %v5285
      %v5288 = vmul.f32 %v5243, %v5286
      %v5289 = vmul.f32 %v5248, %v5286
      %v5290 = vmul.f32 %v5253, %v5286
      %v5291 = vmul.f32 %v5258, %v5286
      %v5292 = vmul.f32 %v5263, %v5286
      %v5293 = vmul.f32 %v5268, %v5286
      %v5294 = vmul.f32 %v5273, %v5286
      %v5295 = vmul.f32 %v5278, %v5286
      %v5296 = vld [vmem:[%s19] sm:$0x1]
      %v5298 = vlaneseq
      %v5299 = vshrl.u32 %v5298, 7
      %v5300 = vsub.s32 0, %v5299
      %v5301 = vrot.slane %v5296, %v5300
      %v5303 = vadd.f32 %v5288, %v5301
      %v5304 = vadd.f32 %v5289, %v5301
      %v5305 = vadd.f32 %v5290, %v5301
      %v5306 = vadd.f32 %v5291, %v5301
      %v5307 = vadd.f32 %v5292, %v5301
      %v5308 = vadd.f32 %v5293, %v5301
      %v5309 = vadd.f32 %v5294, %v5301
      %v5310 = vadd.f32 %v5295, %v5301
      %v5311 = vmax.f32 %v5303, 0.0
      %v5312 = vmax.f32 %v5304, 0.0
      %v5313 = vmax.f32 %v5305, 0.0
      %v5314 = vmax.f32 %v5306, 0.0
      %v5315 = vmax.f32 %v5307, 0.0
      %v5316 = vmax.f32 %v5308, 0.0
      %v5317 = vmax.f32 %v5309, 0.0
      %v5318 = vmax.f32 %v5310, 0.0
      %v5319 = vadd.f32 %v3567, %v5311
      %v5320 = vadd.f32 %v3568, %v5312
      %v5321 = vadd.f32 %v3569, %v5313
      %v5322 = vadd.f32 %v3570, %v5314
      %v5323 = vadd.f32 %v3571, %v5315
      %v5324 = vadd.f32 %v3572, %v5316
      %v5325 = vadd.f32 %v3573, %v5317
      %v5326 = vadd.f32 %v3574, %v5318
      %v5327 = vld [vmem:[%s20] sm:$0xff]
      %v5329 = vsel %vm735, %v5327, 0
      %v5332 = vsel %vm735, %v5319, 0
      %v5335 = vsel %vm735, %v5320, 0
      %v5338 = vsel %vm735, %v5321, 0
      %v5341 = vsel %vm735, %v5322, 0
      %v5344 = vsel %vm735, %v5323, 0
      %v5347 = vsel %vm735, %v5324, 0
      %v5350 = vsel %vm735, %v5325, 0
      %v5353 = vsel %vm735, %v5326, 0
      %5355 = vmatprep.subr.mxu0 0.0
      %5356 = vmatpush1.xpose.msra.mxu0 0.0
      %5357 = vmatprep.subr.mxu0 0.0
      %5358 = vmatpush1.xpose.msra.mxu0 0.0
      %5359 = vmatprep.subr.mxu0 0.0
      %5360 = vmatpush1.xpose.msra.mxu0 0.0
      %5361 = vmatprep.subr.mxu0 0.0
      %5362 = vmatpush1.xpose.msra.mxu0 0.0
      %5363 = vmatprep.subr.mxu0 0.0
      %5364 = vmatpush1.xpose.msra.mxu0 0.0
      %5365 = vmatprep.subr.mxu0 0.0
      %5366 = vmatpush1.xpose.msra.mxu0 0.0
      %5367 = vmatprep.subr.mxu0 0.0
      %5368 = vmatpush1.xpose.msra.mxu0 0.0
      %5369 = vmatprep.subr.mxu0 0.0
      %5370 = vmatpush1.xpose.msra.mxu0 0.0
      %5371 = vmatprep.subr.mxu0 0.0
      %5372 = vmatpush1.xpose.msra.mxu0 %v5353
      %5373 = vmatprep.subr.mxu0 0.0
      %5374 = vmatpush1.xpose.msra.mxu0 %v5350
      %5375 = vmatprep.subr.mxu0 0.0
      %5376 = vmatpush1.xpose.msra.mxu0 %v5347
      %5377 = vmatprep.subr.mxu0 0.0
      %5378 = vmatpush1.xpose.msra.mxu0 %v5344
      %5379 = vmatprep.subr.mxu0 0.0
      %5380 = vmatpush1.xpose.msra.mxu0 %v5341
      %5381 = vmatprep.subr.mxu0 0.0
      %5382 = vmatpush1.xpose.msra.mxu0 %v5338
      %5383 = vmatprep.subr.mxu0 0.0
      %5384 = vmatpush1.xpose.msra.mxu0 %v5335
      %5385 = vmatprep.subr.mxu0 0.0
      %5386 = vmatpush1.xpose.msra.mxu0 %v5332
      %5387 = vmatprep.subr.mxu0 0.0
      %5388 = vmatpush2.xpose.msra.mxu0 0.0
      %5389 = vmatprep.subr.mxu0 0.0
      %5390 = vmatpush2.xpose.msra.mxu0 0.0
      %5391 = vmatprep.subr.mxu0 0.0
      %5392 = vmatpush2.xpose.msra.mxu0 0.0
      %5393 = vmatprep.subr.mxu0 0.0
      %5394 = vmatpush2.xpose.msra.mxu0 0.0
      %5395 = vmatprep.subr.mxu0 0.0
      %5396 = vmatpush2.xpose.msra.mxu0 0.0
      %5397 = vmatprep.subr.mxu0 0.0
      %5398 = vmatpush2.xpose.msra.mxu0 0.0
      %5399 = vmatprep.subr.mxu0 0.0
      %5400 = vmatpush2.xpose.msra.mxu0 0.0
      %5401 = vmatprep.subr.mxu0 0.0
      %5402 = vmatpush2.xpose.msra.mxu0 0.0
      %5403 = vmatprep.subr.mxu0 0.0
      %5404 = vmatpush2.xpose.msra.mxu0 0.0
      %5405 = vmatprep.subr.mxu0 0.0
      %5406 = vmatpush2.xpose.msra.mxu0 0.0
      %5407 = vmatprep.subr.mxu0 0.0
      %5408 = vmatpush2.xpose.msra.mxu0 0.0
      %5409 = vmatprep.subr.mxu0 0.0
      %5410 = vmatpush2.xpose.msra.mxu0 0.0
      %5411 = vmatprep.subr.mxu0 0.0
      %5412 = vmatpush2.xpose.msra.mxu0 0.0
      %5413 = vmatprep.subr.mxu0 0.0
      %5414 = vmatpush2.xpose.msra.mxu0 0.0
      %5415 = vmatprep.subr.mxu0 0.0
      %5416 = vmatpush2.xpose.msra.mxu0 0.0
      %5417 = vmatprep.subr.mxu0 0.0
      %5418 = vmatpush2.xpose.msra.mxu0 0.0
      %5419 = vmatprep.mubr.f32.mxu0 0.0
      %5420 = vmatmul.mubr.f32.gmra.mxu0 %v5329
      %v5421 = vpop.f32.mrf.mxu0
      %v5422 = vadd.f32 0.0, %v5421
      %v5423 = vpop.f32.mrf.mxu0
      %5424 = vdwg.mxu0
      %v5425 = vld [vmem:[%s21] sm:$0xff]
      %5427 = vset.pattern.permute.xlu0 0
      %5428 = vperm.xlu0 %5427, %v5425
      %v5429 = vpop.permute.xlu0 %5428
      %v5431 = vmul.f32 %v5422, %v5429
      %v5432 = vld [vmem:[%s22] sm:$0xff]
      %5434 = vset.pattern.permute.xlu0 0
      %5435 = vperm.xlu0 %5434, %v5432
      %v5436 = vpop.permute.xlu0 %5435
      %v5438 = vadd.f32 %v5431, %v5436
      %v5439 = vmax.f32 %v5438, 0.0
      %vm5440 = vcmask 523264
      %5441 = vst.msk [vmem:[%s708] sm:$0xff] %vm5440, %v5439
      %p5442 = scmp.lt.s32.totalorder %s34, 1
      %s5443 = scalar_select %p5442, %s34, 1
      %s5444 = smul.addr %s5443, 8
      %s5445 = scalar_lea.vmem %s23, %s5444
      // Predicated region
      $region113: #{down_forward.1} parent=111 // pred_check
        %p5446 = pneg %p540
      $region114: #{down_forward.1} parent=111 // pred_check_branch
        %5448 = sbr.rel (%p5446) target = $region116
      $region115: #{down_forward.1} parent=111 // pred_region
        _
      $region116: #{down_forward.1} parent=111 // pred_fallthru
        _
    $region112: #{down_forward.1} parent=5 // pred_fallthru
      _
    %p5449 = scmp.le.s32.totalorder 2, %s29
    // Predicated region
    $region117: #{down_forward.1} parent=5 // pred_check
      %p5450 = pneg %p5449
    $region118: #{down_forward.1} parent=5 // pred_check_branch
      %5452 = sbr.rel (%p5450) target = $region120
    $region119: #{down_forward.1} parent=5 // pred_region
      %s5453 = ssub.s32 %s29, 2
      // Predicated region
      $region121: #{down_forward.1} parent=119 // pred_check
        %p5454 = pneg %p546
      $region122: #{down_forward.1} parent=119 // pred_check_branch
        %5456 = sbr.rel (%p5454) target = $region124
      $region123: #{down_forward.1} parent=119 // pred_region
        %p5457 = scmp.lt.s32.totalorder %s35, 1
        %s5458 = scalar_select %p5457, %s35, 1
        %s5459 = smul.addr %s5458, 8
        %s5460 = scalar_lea.vmem %s23, %s5459
      $region124: #{down_forward.1} parent=119 // pred_fallthru
        _
    $region120: #{down_forward.1} parent=5 // pred_fallthru
      _
  $region6: #{down_forward.1} parent=0 // loop_footer
    %s33 = sadd.s32 1, %s29
  $region7: #{down_forward.1} parent=0 // loop_footer_branch
    %28 = sbr.rel target = $region3
  $region8: #{down_forward.1} parent=0 // loop_exit
    _

</llo_original>
